<compile_context>
chip_gen: v6e
topology: v6e:2x2x1
jax: 0.10.0
libtpu: 0.0.40
codegen_flags: <defaults>
</compile_context>

<pallas_src>
import functools

import jax
import jax.numpy as jnp
from jax.experimental import pallas as pl
from jax.experimental.pallas import tpu as pltpu


# ------------------------------ Pallas kernel ------------------------------ #

def _upsample_in_kernel(in1_ref, in2_ref, wup_ref, bup_ref, wsk_ref, bsk_ref,
                        w1_ref, g1_ref, b1_ref, w2_ref, g2_ref, b2_ref,
                        o_ref, *, up, skip, ksize, eps, slope):
    f32 = jnp.float32
    N, _, l1 = in1_ref.shape            # input1: (N, Cin,  L1)
    _, c_out, l2 = in2_ref.shape        # input2: (N, Cout, L2)
    T = l1 * up                         # upsampled length
    pad = ksize // 2

    # ---- helpers: constant one-hot matrices built from iota (no HBM traffic) ----
    def block_diag(block):
        # Block-diagonal over the batch => shifts/scatters never leak across samples.
        if N == 1:
            return block
        br, bc = block.shape
        zero = jnp.zeros((br, bc), block.dtype)
        rows = []
        for i in range(N):
            row = [zero] * N
            row[i] = block
            rows.append(jnp.concatenate(row, axis=1))
        return jnp.concatenate(rows, axis=0)

    def scatter_mat(lin, ratio, k):
        # (N*lin, N*T): (z @ S)[:, l*ratio + k] = z[:, l]   (columns >= T cropped)
        r = jax.lax.broadcasted_iota(jnp.int32, (lin, T), 0)
        c = jax.lax.broadcasted_iota(jnp.int32, (lin, T), 1)
        return block_diag((c == r * ratio + k).astype(f32))

    def shift_mat(delta):
        # (N*T, N*T): (x @ D)[:, t] = x[:, t + delta], zero outside each sample.
        r = jax.lax.broadcasted_iota(jnp.int32, (T, T), 0)
        c = jax.lax.broadcasted_iota(jnp.int32, (T, T), 1)
        return block_diag((r == c + delta).astype(f32))

    def wide(x_ref):
        # (N, C, L) -> (C, N*L): concatenate samples along the lane (length) axis.
        n = x_ref.shape[0]
        if n == 1:
            return x_ref[0]
        return jnp.concatenate([x_ref[i] for i in range(n)], axis=1)

    # ---- ConvTranspose1d with kernel_size == stride == ratio ----
    def conv_transpose(xw, w_ref, b_ref, lin, ratio):
        cout = w_ref.shape[1]
        acc = jnp.zeros((cout, N * T), f32)
        for k in range(ratio):
            z = jnp.dot(w_ref[k], xw, preferred_element_type=f32)        # (cout, N*lin)
            acc = acc + jnp.dot(z, scatter_mat(lin, ratio, k),
                                preferred_element_type=f32)              # (cout, N*T)
        return acc + b_ref[...]                                          # bias (cout, 1)

    # ---- Conv1d(k=ksize, pad=ksize//2, bias=False) -> BatchNorm1d -> LeakyReLU ----
    def conv_norm_act(xw, w_ref, g_ref, b_ref):
        cout = w_ref.shape[1]
        acc = jnp.zeros((cout, N * T), f32)
        for dk in range(ksize):
            xs = jnp.dot(xw, shift_mat(dk - pad), preferred_element_type=f32)
            acc = acc + jnp.dot(w_ref[dk], xs, preferred_element_type=f32)
        # BatchNorm1d, training-mode batch statistics: per-channel over (N, L).
        mean = jnp.mean(acc, axis=1, keepdims=True)
        var = jnp.mean(jnp.square(acc - mean), axis=1, keepdims=True)
        y = (acc - mean) * jax.lax.rsqrt(var + eps)
        y = y * g_ref[...] + b_ref[...]
        return jnp.where(y >= 0, y, slope * y)                           # LeakyReLU

    # ----------------------------- forward pass ----------------------------- #
    x1w = wide(in1_ref)                                     # (Cin,  N*L1)
    x2w = wide(in2_ref)                                     # (Cout, N*L2)

    x1u = conv_transpose(x1w, wup_ref, bup_ref, l1, up)     # up_sample        (Cout, N*T)
    x2u = conv_transpose(x2w, wsk_ref, bsk_ref, l2, skip)   # skip pool + crop (Cout, N*T)

    xcat = jnp.concatenate([x2u, x1u], axis=0)              # cat([x2_crop, x1], dim=1)
    # TODO(synk): dropout_p > 0 not implemented (nn.Dropout(p=0) is the identity);
    # a non-zero p would use pltpu.prng_seed / pltpu.prng_random_bits here.

    y = conv_norm_act(xcat, w1_ref, g1_ref, b1_ref)         # DoubleConv1D, conv 1
    y = conv_norm_act(y, w2_ref, g2_ref, b2_ref)            # DoubleConv1D, conv 2

    for n in range(N):                                      # back to (N, Cout, T) NCL
        o_ref[n] = y[:, n * T:(n + 1) * T].astype(o_ref.dtype)


# --------------------------------- wrapper --------------------------------- #

def upsample_in_forward(params, input1, input2, *, up_ratio, skip_ratio,
                        kernel_size=9, leaky_slope=0.2, eps=1e-5):
    """Fused UpSampleIn forward: (N,Cin,L1), (N,Cout,L2) -> (N,Cout,L1*up_ratio)."""
    N, _, L1 = input1.shape
    _, c_out, L2 = input2.shape
    T = L1 * up_ratio
    assert L2 * skip_ratio >= T, "skip path too short to crop to the upsampled length"

    kern = functools.partial(_upsample_in_kernel, up=up_ratio, skip=skip_ratio,
                             ksize=kernel_size, eps=eps, slope=leaky_slope)
    args = (input1, input2,
            params["wup"], params["bup"], params["wsk"], params["bsk"],
            params["w1"], params["g1"], params["b1"],
            params["w2"], params["g2"], params["b2"])

    def whole(a):
        nd = a.ndim
        return pl.BlockSpec(a.shape, lambda i, _n=nd: (0,) * _n)

    return pl.pallas_call(
        kern,
        out_shape=jax.ShapeDtypeStruct((N, c_out, T), jnp.float32),
        grid=(1,),
        in_specs=[whole(a) for a in args],
        out_specs=pl.BlockSpec((N, c_out, T), lambda i: (0, 0, 0)),
        compiler_params=pltpu.CompilerParams(dimension_semantics=("arbitrary",)),
    )(*args)


# ----------------------------- parameter creation --------------------------- #

def init_upsample_in_params(key, input_chan_num, output_chan_num, up_ratio,
                            skip_ratio, kernel_size=9):
    """Parameters stored directly in kernel layout: conv weights as (K, Cout, Cin)."""
    c_in, c_out = input_chan_num, output_chan_num
    ks = jax.random.split(key, 6)

    def u(k, shape, fan_in):
        bound = 1.0 / float(fan_in) ** 0.5
        return jax.random.uniform(k, shape, jnp.float32, -bound, bound)

    return {
        # ConvTranspose1d(c_in, c_out, up_ratio, stride=up_ratio), bias=True
        "wup": u(ks[0], (up_ratio, c_out, c_in), c_out * up_ratio),
        "bup": u(ks[1], (c_out, 1), c_out * up_ratio),
        # ConvTranspose1d(c_out, c_out, skip_ratio, stride=skip_ratio), bias=True
        "wsk": u(ks[2], (skip_ratio, c_out, c_out), c_out * skip_ratio),
        "bsk": u(ks[3], (c_out, 1), c_out * skip_ratio),
        # DoubleConv1D with BatchNorm1d  =>  Conv1d layers have bias=False
        "w1": u(ks[4], (kernel_size, c_out, 2 * c_out), 2 * c_out * kernel_size),
        "g1": jnp.ones((c_out, 1), jnp.float32),
        "b1": jnp.zeros((c_out, 1), jnp.float32),
        "w2": u(ks[5], (kernel_size, c_out, c_out), c_out * kernel_size),
        "g2": jnp.ones((c_out, 1), jnp.float32),
        "b2": jnp.zeros((c_out, 1), jnp.float32),
    }


# ------------------------------------ main ---------------------------------- #

if __name__ == "__main__":
    batch = 2
    input_chan = 8        # channels of input1 (previous decoder layer)
    output_chan = 4       # channels of this block's output
    up_ratio = 2
    skip_ratio = 2
    L1 = 16               # input1 length -> upsampled length T = 32
    L2 = 16               # input2 (skip) length -> L2 * skip_ratio = 32 >= T

    root = jax.random.PRNGKey(0)
    k_params, k_x1, k_x2 = jax.random.split(root, 3)
    params = init_upsample_in_params(k_params, input_chan, output_chan,
                                     up_ratio, skip_ratio, kernel_size=9)
    input1 = jax.random.normal(k_x1, (batch, input_chan, L1), jnp.float32)
    input2 = jax.random.normal(k_x2, (batch, output_chan, L2), jnp.float32)

    out = upsample_in_forward(params, input1, input2,
                              up_ratio=up_ratio, skip_ratio=skip_ratio)
    out = jax.block_until_ready(out)
    assert out.shape == (batch, output_chan, L1 * up_ratio)
    assert bool(jnp.all(jnp.isfinite(out)))
    print("KERNEL_OK")
</pallas_src>

<mosaic_0001>
module attributes {stable_mosaic.version = 11 : i64} {
  func.func @_upsample_in_kernel(%arg0: i32, %arg1: memref<2x8x16xf32, #tpu.memory_space<vmem>>, %arg2: memref<2x4x16xf32, #tpu.memory_space<vmem>>, %arg3: memref<2x4x8xf32, #tpu.memory_space<vmem>>, %arg4: memref<4x1xf32, #tpu.memory_space<vmem>>, %arg5: memref<2x4x4xf32, #tpu.memory_space<vmem>>, %arg6: memref<4x1xf32, #tpu.memory_space<vmem>>, %arg7: memref<9x4x8xf32, #tpu.memory_space<vmem>>, %arg8: memref<4x1xf32, #tpu.memory_space<vmem>>, %arg9: memref<4x1xf32, #tpu.memory_space<vmem>>, %arg10: memref<9x4x4xf32, #tpu.memory_space<vmem>>, %arg11: memref<4x1xf32, #tpu.memory_space<vmem>>, %arg12: memref<4x1xf32, #tpu.memory_space<vmem>>, %arg13: memref<2x4x32xf32, #tpu.memory_space<vmem>>) attributes {dimension_semantics = [#tpu.dimension_semantics<arbitrary>], iteration_bounds = array<i64: 1>, scalar_prefetch = 0 : i64, scratch_operands = 0 : i64, tpu.core_type = #tpu.core_type<tc>, window_params = [{pipeline_mode = #tpu.pipeline_mode<synchronous>, transform_indices = @transform_0, window_bounds = array<i64: 2, 8, 16>}, {pipeline_mode = #tpu.pipeline_mode<synchronous>, transform_indices = @transform_1, window_bounds = array<i64: 2, 4, 16>}, {pipeline_mode = #tpu.pipeline_mode<synchronous>, transform_indices = @transform_2, window_bounds = array<i64: 2, 4, 8>}, {pipeline_mode = #tpu.pipeline_mode<synchronous>, transform_indices = @transform_3, window_bounds = array<i64: 4, 1>}, {pipeline_mode = #tpu.pipeline_mode<synchronous>, transform_indices = @transform_4, window_bounds = array<i64: 2, 4, 4>}, {pipeline_mode = #tpu.pipeline_mode<synchronous>, transform_indices = @transform_5, window_bounds = array<i64: 4, 1>}, {pipeline_mode = #tpu.pipeline_mode<synchronous>, transform_indices = @transform_6, window_bounds = array<i64: 9, 4, 8>}, {pipeline_mode = #tpu.pipeline_mode<synchronous>, transform_indices = @transform_7, window_bounds = array<i64: 4, 1>}, {pipeline_mode = #tpu.pipeline_mode<synchronous>, transform_indices = @transform_8, window_bounds = array<i64: 4, 1>}, {pipeline_mode = #tpu.pipeline_mode<synchronous>, transform_indices = @transform_9, window_bounds = array<i64: 9, 4, 4>}, {pipeline_mode = #tpu.pipeline_mode<synchronous>, transform_indices = @transform_10, window_bounds = array<i64: 4, 1>}, {pipeline_mode = #tpu.pipeline_mode<synchronous>, transform_indices = @transform_11, window_bounds = array<i64: 4, 1>}, {pipeline_mode = #tpu.pipeline_mode<synchronous>, transform_indices = @transform_12, window_bounds = array<i64: 2, 4, 32>}]} {
    %c0 = arith.constant 0 : index
    %c0_0 = arith.constant 0 : index
    %c0_1 = arith.constant 0 : index
    %0 = vector.load %arg1[%c0, %c0_0, %c0_1] : memref<2x8x16xf32, #tpu.memory_space<vmem>>, vector<1x8x16xf32>
    %1 = vector.shape_cast %0 : vector<1x8x16xf32> to vector<8x16xf32>
    %c1 = arith.constant 1 : index
    %c0_2 = arith.constant 0 : index
    %c0_3 = arith.constant 0 : index
    %2 = vector.load %arg1[%c1, %c0_2, %c0_3] : memref<2x8x16xf32, #tpu.memory_space<vmem>>, vector<1x8x16xf32>
    %3 = vector.shape_cast %2 : vector<1x8x16xf32> to vector<8x16xf32>
    %4 = tpu.concatenate %1, %3 in 1 : vector<8x16xf32>, vector<8x16xf32> -> vector<8x32xf32>
    %c0_4 = arith.constant 0 : index
    %c0_5 = arith.constant 0 : index
    %c0_6 = arith.constant 0 : index
    %5 = vector.load %arg2[%c0_4, %c0_5, %c0_6] : memref<2x4x16xf32, #tpu.memory_space<vmem>>, vector<1x4x16xf32>
    %6 = vector.shape_cast %5 : vector<1x4x16xf32> to vector<4x16xf32>
    %c1_7 = arith.constant 1 : index
    %c0_8 = arith.constant 0 : index
    %c0_9 = arith.constant 0 : index
    %7 = vector.load %arg2[%c1_7, %c0_8, %c0_9] : memref<2x4x16xf32, #tpu.memory_space<vmem>>, vector<1x4x16xf32>
    %8 = vector.shape_cast %7 : vector<1x4x16xf32> to vector<4x16xf32>
    %9 = tpu.concatenate %6, %8 in 1 : vector<4x16xf32>, vector<4x16xf32> -> vector<4x32xf32>
    %cst = arith.constant 0.000000e+00 : f32
    %10 = vector.broadcast %cst : f32 to vector<4x64xf32>
    %c0_10 = arith.constant 0 : index
    %c0_11 = arith.constant 0 : index
    %c0_12 = arith.constant 0 : index
    %11 = vector.load %arg3[%c0_10, %c0_11, %c0_12] : memref<2x4x8xf32, #tpu.memory_space<vmem>>, vector<1x4x8xf32>
    %12 = vector.shape_cast %11 : vector<1x4x8xf32> to vector<4x8xf32>
    %cst_13 = arith.constant dense<0.000000e+00> : vector<4x32xf32>
    %13 = tpu.matmul %12, %4, %cst_13 {dimension_numbers = #tpu.dot_dimension_numbers<[1], [0], [0], [1], [0, 0, 1, 1], [], []>} : vector<4x8xf32>, vector<8x32xf32>, vector<4x32xf32> -> vector<4x32xf32>
    %14 = tpu.iota {dimensions = array<i32: 0>} : vector<16x32xi32>
    %15 = tpu.iota {dimensions = array<i32: 1>} : vector<16x32xi32>
    %c2_i32 = arith.constant 2 : i32
    %16 = vector.broadcast %c2_i32 : i32 to vector<16x32xi32>
    %17 = arith.muli %14, %16 : vector<16x32xi32>
    %c0_i32 = arith.constant 0 : i32
    %18 = vector.broadcast %c0_i32 : i32 to vector<16x32xi32>
    %19 = arith.addi %17, %18 : vector<16x32xi32>
    %20 = arith.cmpi eq, %15, %19 : vector<16x32xi32>
    %21 = arith.extui %20 : vector<16x32xi1> to vector<16x32xi32>
    %22 = arith.sitofp %21 : vector<16x32xi32> to vector<16x32xf32>
    %cst_14 = arith.constant 0.000000e+00 : f32
    %23 = vector.broadcast %cst_14 : f32 to vector<16x32xf32>
    %24 = tpu.concatenate %22, %23 in 1 : vector<16x32xf32>, vector<16x32xf32> -> vector<16x64xf32>
    %25 = tpu.concatenate %23, %22 in 1 : vector<16x32xf32>, vector<16x32xf32> -> vector<16x64xf32>
    %26 = tpu.concatenate %24, %25 in 0 : vector<16x64xf32>, vector<16x64xf32> -> vector<32x64xf32>
    %cst_15 = arith.constant dense<0.000000e+00> : vector<4x64xf32>
    %27 = tpu.matmul %13, %26, %cst_15 {dimension_numbers = #tpu.dot_dimension_numbers<[1], [0], [0], [1], [0, 0, 1, 1], [], []>} : vector<4x32xf32>, vector<32x64xf32>, vector<4x64xf32> -> vector<4x64xf32>
    %28 = arith.addf %10, %27 : vector<4x64xf32>
    %c1_16 = arith.constant 1 : index
    %c0_17 = arith.constant 0 : index
    %c0_18 = arith.constant 0 : index
    %29 = vector.load %arg3[%c1_16, %c0_17, %c0_18] : memref<2x4x8xf32, #tpu.memory_space<vmem>>, vector<1x4x8xf32>
    %30 = vector.shape_cast %29 : vector<1x4x8xf32> to vector<4x8xf32>
    %cst_19 = arith.constant dense<0.000000e+00> : vector<4x32xf32>
    %31 = tpu.matmul %30, %4, %cst_19 {dimension_numbers = #tpu.dot_dimension_numbers<[1], [0], [0], [1], [0, 0, 1, 1], [], []>} : vector<4x8xf32>, vector<8x32xf32>, vector<4x32xf32> -> vector<4x32xf32>
    %32 = tpu.iota {dimensions = array<i32: 0>} : vector<16x32xi32>
    %33 = tpu.iota {dimensions = array<i32: 1>} : vector<16x32xi32>
    %c2_i32_20 = arith.constant 2 : i32
    %34 = vector.broadcast %c2_i32_20 : i32 to vector<16x32xi32>
    %35 = arith.muli %32, %34 : vector<16x32xi32>
    %c1_i32 = arith.constant 1 : i32
    %36 = vector.broadcast %c1_i32 : i32 to vector<16x32xi32>
    %37 = arith.addi %35, %36 : vector<16x32xi32>
    %38 = arith.cmpi eq, %33, %37 : vector<16x32xi32>
    %39 = arith.extui %38 : vector<16x32xi1> to vector<16x32xi32>
    %40 = arith.sitofp %39 : vector<16x32xi32> to vector<16x32xf32>
    %cst_21 = arith.constant 0.000000e+00 : f32
    %41 = vector.broadcast %cst_21 : f32 to vector<16x32xf32>
    %42 = tpu.concatenate %40, %41 in 1 : vector<16x32xf32>, vector<16x32xf32> -> vector<16x64xf32>
    %43 = tpu.concatenate %41, %40 in 1 : vector<16x32xf32>, vector<16x32xf32> -> vector<16x64xf32>
    %44 = tpu.concatenate %42, %43 in 0 : vector<16x64xf32>, vector<16x64xf32> -> vector<32x64xf32>
    %cst_22 = arith.constant dense<0.000000e+00> : vector<4x64xf32>
    %45 = tpu.matmul %31, %44, %cst_22 {dimension_numbers = #tpu.dot_dimension_numbers<[1], [0], [0], [1], [0, 0, 1, 1], [], []>} : vector<4x32xf32>, vector<32x64xf32>, vector<4x64xf32> -> vector<4x64xf32>
    %46 = arith.addf %28, %45 : vector<4x64xf32>
    %c0_23 = arith.constant 0 : index
    %c0_24 = arith.constant 0 : index
    %47 = vector.load %arg4[%c0_23, %c0_24] : memref<4x1xf32, #tpu.memory_space<vmem>>, vector<4x1xf32>
    %48 = vector.broadcast %47 : vector<4x1xf32> to vector<4x64xf32>
    %49 = arith.addf %46, %48 : vector<4x64xf32>
    %cst_25 = arith.constant 0.000000e+00 : f32
    %50 = vector.broadcast %cst_25 : f32 to vector<4x64xf32>
    %c0_26 = arith.constant 0 : index
    %c0_27 = arith.constant 0 : index
    %c0_28 = arith.constant 0 : index
    %51 = vector.load %arg5[%c0_26, %c0_27, %c0_28] : memref<2x4x4xf32, #tpu.memory_space<vmem>>, vector<1x4x4xf32>
    %52 = vector.shape_cast %51 : vector<1x4x4xf32> to vector<4x4xf32>
    %cst_29 = arith.constant dense<0.000000e+00> : vector<4x32xf32>
    %53 = tpu.matmul %52, %9, %cst_29 {dimension_numbers = #tpu.dot_dimension_numbers<[1], [0], [0], [1], [0, 0, 1, 1], [], []>} : vector<4x4xf32>, vector<4x32xf32>, vector<4x32xf32> -> vector<4x32xf32>
    %54 = tpu.iota {dimensions = array<i32: 0>} : vector<16x32xi32>
    %55 = tpu.iota {dimensions = array<i32: 1>} : vector<16x32xi32>
    %c2_i32_30 = arith.constant 2 : i32
    %56 = vector.broadcast %c2_i32_30 : i32 to vector<16x32xi32>
    %57 = arith.muli %54, %56 : vector<16x32xi32>
    %c0_i32_31 = arith.constant 0 : i32
    %58 = vector.broadcast %c0_i32_31 : i32 to vector<16x32xi32>
    %59 = arith.addi %57, %58 : vector<16x32xi32>
    %60 = arith.cmpi eq, %55, %59 : vector<16x32xi32>
    %61 = arith.extui %60 : vector<16x32xi1> to vector<16x32xi32>
    %62 = arith.sitofp %61 : vector<16x32xi32> to vector<16x32xf32>
    %cst_32 = arith.constant 0.000000e+00 : f32
    %63 = vector.broadcast %cst_32 : f32 to vector<16x32xf32>
    %64 = tpu.concatenate %62, %63 in 1 : vector<16x32xf32>, vector<16x32xf32> -> vector<16x64xf32>
    %65 = tpu.concatenate %63, %62 in 1 : vector<16x32xf32>, vector<16x32xf32> -> vector<16x64xf32>
    %66 = tpu.concatenate %64, %65 in 0 : vector<16x64xf32>, vector<16x64xf32> -> vector<32x64xf32>
    %cst_33 = arith.constant dense<0.000000e+00> : vector<4x64xf32>
    %67 = tpu.matmul %53, %66, %cst_33 {dimension_numbers = #tpu.dot_dimension_numbers<[1], [0], [0], [1], [0, 0, 1, 1], [], []>} : vector<4x32xf32>, vector<32x64xf32>, vector<4x64xf32> -> vector<4x64xf32>
    %68 = arith.addf %50, %67 : vector<4x64xf32>
    %c1_34 = arith.constant 1 : index
    %c0_35 = arith.constant 0 : index
    %c0_36 = arith.constant 0 : index
    %69 = vector.load %arg5[%c1_34, %c0_35, %c0_36] : memref<2x4x4xf32, #tpu.memory_space<vmem>>, vector<1x4x4xf32>
    %70 = vector.shape_cast %69 : vector<1x4x4xf32> to vector<4x4xf32>
    %cst_37 = arith.constant dense<0.000000e+00> : vector<4x32xf32>
    %71 = tpu.matmul %70, %9, %cst_37 {dimension_numbers = #tpu.dot_dimension_numbers<[1], [0], [0], [1], [0, 0, 1, 1], [], []>} : vector<4x4xf32>, vector<4x32xf32>, vector<4x32xf32> -> vector<4x32xf32>
    %72 = tpu.iota {dimensions = array<i32: 0>} : vector<16x32xi32>
    %73 = tpu.iota {dimensions = array<i32: 1>} : vector<16x32xi32>
    %c2_i32_38 = arith.constant 2 : i32
    %74 = vector.broadcast %c2_i32_38 : i32 to vector<16x32xi32>
    %75 = arith.muli %72, %74 : vector<16x32xi32>
    %c1_i32_39 = arith.constant 1 : i32
    %76 = vector.broadcast %c1_i32_39 : i32 to vector<16x32xi32>
    %77 = arith.addi %75, %76 : vector<16x32xi32>
    %78 = arith.cmpi eq, %73, %77 : vector<16x32xi32>
    %79 = arith.extui %78 : vector<16x32xi1> to vector<16x32xi32>
    %80 = arith.sitofp %79 : vector<16x32xi32> to vector<16x32xf32>
    %cst_40 = arith.constant 0.000000e+00 : f32
    %81 = vector.broadcast %cst_40 : f32 to vector<16x32xf32>
    %82 = tpu.concatenate %80, %81 in 1 : vector<16x32xf32>, vector<16x32xf32> -> vector<16x64xf32>
    %83 = tpu.concatenate %81, %80 in 1 : vector<16x32xf32>, vector<16x32xf32> -> vector<16x64xf32>
    %84 = tpu.concatenate %82, %83 in 0 : vector<16x64xf32>, vector<16x64xf32> -> vector<32x64xf32>
    %cst_41 = arith.constant dense<0.000000e+00> : vector<4x64xf32>
    %85 = tpu.matmul %71, %84, %cst_41 {dimension_numbers = #tpu.dot_dimension_numbers<[1], [0], [0], [1], [0, 0, 1, 1], [], []>} : vector<4x32xf32>, vector<32x64xf32>, vector<4x64xf32> -> vector<4x64xf32>
    %86 = arith.addf %68, %85 : vector<4x64xf32>
    %c0_42 = arith.constant 0 : index
    %c0_43 = arith.constant 0 : index
    %87 = vector.load %arg6[%c0_42, %c0_43] : memref<4x1xf32, #tpu.memory_space<vmem>>, vector<4x1xf32>
    %88 = vector.broadcast %87 : vector<4x1xf32> to vector<4x64xf32>
    %89 = arith.addf %86, %88 : vector<4x64xf32>
    %90 = tpu.concatenate %89, %49 in 0 : vector<4x64xf32>, vector<4x64xf32> -> vector<8x64xf32>
    %cst_44 = arith.constant 0.000000e+00 : f32
    %91 = vector.broadcast %cst_44 : f32 to vector<4x64xf32>
    %92 = tpu.iota {dimensions = array<i32: 0>} : vector<32x32xi32>
    %93 = tpu.iota {dimensions = array<i32: 1>} : vector<32x32xi32>
    %c-4_i32 = arith.constant -4 : i32
    %94 = vector.broadcast %c-4_i32 : i32 to vector<32x32xi32>
    %95 = arith.addi %93, %94 : vector<32x32xi32>
    %96 = arith.cmpi eq, %92, %95 : vector<32x32xi32>
    %97 = arith.extui %96 : vector<32x32xi1> to vector<32x32xi32>
    %98 = arith.sitofp %97 : vector<32x32xi32> to vector<32x32xf32>
    %cst_45 = arith.constant 0.000000e+00 : f32
    %99 = vector.broadcast %cst_45 : f32 to vector<32x32xf32>
    %100 = tpu.concatenate %98, %99 in 1 : vector<32x32xf32>, vector<32x32xf32> -> vector<32x64xf32>
    %101 = tpu.concatenate %99, %98 in 1 : vector<32x32xf32>, vector<32x32xf32> -> vector<32x64xf32>
    %102 = tpu.concatenate %100, %101 in 0 : vector<32x64xf32>, vector<32x64xf32> -> vector<64x64xf32>
    %cst_46 = arith.constant dense<0.000000e+00> : vector<8x64xf32>
    %103 = tpu.matmul %90, %102, %cst_46 {dimension_numbers = #tpu.dot_dimension_numbers<[1], [0], [0], [1], [0, 0, 1, 1], [], []>} : vector<8x64xf32>, vector<64x64xf32>, vector<8x64xf32> -> vector<8x64xf32>
    %c0_47 = arith.constant 0 : index
    %c0_48 = arith.constant 0 : index
    %c0_49 = arith.constant 0 : index
    %104 = vector.load %arg7[%c0_47, %c0_48, %c0_49] : memref<9x4x8xf32, #tpu.memory_space<vmem>>, vector<1x4x8xf32>
    %105 = vector.shape_cast %104 : vector<1x4x8xf32> to vector<4x8xf32>
    %cst_50 = arith.constant dense<0.000000e+00> : vector<4x64xf32>
    %106 = tpu.matmul %105, %103, %cst_50 {dimension_numbers = #tpu.dot_dimension_numbers<[1], [0], [0], [1], [0, 0, 1, 1], [], []>} : vector<4x8xf32>, vector<8x64xf32>, vector<4x64xf32> -> vector<4x64xf32>
    %107 = arith.addf %91, %106 : vector<4x64xf32>
    %108 = tpu.iota {dimensions = array<i32: 0>} : vector<32x32xi32>
    %109 = tpu.iota {dimensions = array<i32: 1>} : vector<32x32xi32>
    %c-3_i32 = arith.constant -3 : i32
    %110 = vector.broadcast %c-3_i32 : i32 to vector<32x32xi32>
    %111 = arith.addi %109, %110 : vector<32x32xi32>
    %112 = arith.cmpi eq, %108, %111 : vector<32x32xi32>
    %113 = arith.extui %112 : vector<32x32xi1> to vector<32x32xi32>
    %114 = arith.sitofp %113 : vector<32x32xi32> to vector<32x32xf32>
    %cst_51 = arith.constant 0.000000e+00 : f32
    %115 = vector.broadcast %cst_51 : f32 to vector<32x32xf32>
    %116 = tpu.concatenate %114, %115 in 1 : vector<32x32xf32>, vector<32x32xf32> -> vector<32x64xf32>
    %117 = tpu.concatenate %115, %114 in 1 : vector<32x32xf32>, vector<32x32xf32> -> vector<32x64xf32>
    %118 = tpu.concatenate %116, %117 in 0 : vector<32x64xf32>, vector<32x64xf32> -> vector<64x64xf32>
    %cst_52 = arith.constant dense<0.000000e+00> : vector<8x64xf32>
    %119 = tpu.matmul %90, %118, %cst_52 {dimension_numbers = #tpu.dot_dimension_numbers<[1], [0], [0], [1], [0, 0, 1, 1], [], []>} : vector<8x64xf32>, vector<64x64xf32>, vector<8x64xf32> -> vector<8x64xf32>
    %c1_53 = arith.constant 1 : index
    %c0_54 = arith.constant 0 : index
    %c0_55 = arith.constant 0 : index
    %120 = vector.load %arg7[%c1_53, %c0_54, %c0_55] : memref<9x4x8xf32, #tpu.memory_space<vmem>>, vector<1x4x8xf32>
    %121 = vector.shape_cast %120 : vector<1x4x8xf32> to vector<4x8xf32>
    %cst_56 = arith.constant dense<0.000000e+00> : vector<4x64xf32>
    %122 = tpu.matmul %121, %119, %cst_56 {dimension_numbers = #tpu.dot_dimension_numbers<[1], [0], [0], [1], [0, 0, 1, 1], [], []>} : vector<4x8xf32>, vector<8x64xf32>, vector<4x64xf32> -> vector<4x64xf32>
    %123 = arith.addf %107, %122 : vector<4x64xf32>
    %124 = tpu.iota {dimensions = array<i32: 0>} : vector<32x32xi32>
    %125 = tpu.iota {dimensions = array<i32: 1>} : vector<32x32xi32>
    %c-2_i32 = arith.constant -2 : i32
    %126 = vector.broadcast %c-2_i32 : i32 to vector<32x32xi32>
    %127 = arith.addi %125, %126 : vector<32x32xi32>
    %128 = arith.cmpi eq, %124, %127 : vector<32x32xi32>
    %129 = arith.extui %128 : vector<32x32xi1> to vector<32x32xi32>
    %130 = arith.sitofp %129 : vector<32x32xi32> to vector<32x32xf32>
    %cst_57 = arith.constant 0.000000e+00 : f32
    %131 = vector.broadcast %cst_57 : f32 to vector<32x32xf32>
    %132 = tpu.concatenate %130, %131 in 1 : vector<32x32xf32>, vector<32x32xf32> -> vector<32x64xf32>
    %133 = tpu.concatenate %131, %130 in 1 : vector<32x32xf32>, vector<32x32xf32> -> vector<32x64xf32>
    %134 = tpu.concatenate %132, %133 in 0 : vector<32x64xf32>, vector<32x64xf32> -> vector<64x64xf32>
    %cst_58 = arith.constant dense<0.000000e+00> : vector<8x64xf32>
    %135 = tpu.matmul %90, %134, %cst_58 {dimension_numbers = #tpu.dot_dimension_numbers<[1], [0], [0], [1], [0, 0, 1, 1], [], []>} : vector<8x64xf32>, vector<64x64xf32>, vector<8x64xf32> -> vector<8x64xf32>
    %c2 = arith.constant 2 : index
    %c0_59 = arith.constant 0 : index
    %c0_60 = arith.constant 0 : index
    %136 = vector.load %arg7[%c2, %c0_59, %c0_60] : memref<9x4x8xf32, #tpu.memory_space<vmem>>, vector<1x4x8xf32>
    %137 = vector.shape_cast %136 : vector<1x4x8xf32> to vector<4x8xf32>
    %cst_61 = arith.constant dense<0.000000e+00> : vector<4x64xf32>
    %138 = tpu.matmul %137, %135, %cst_61 {dimension_numbers = #tpu.dot_dimension_numbers<[1], [0], [0], [1], [0, 0, 1, 1], [], []>} : vector<4x8xf32>, vector<8x64xf32>, vector<4x64xf32> -> vector<4x64xf32>
    %139 = arith.addf %123, %138 : vector<4x64xf32>
    %140 = tpu.iota {dimensions = array<i32: 0>} : vector<32x32xi32>
    %141 = tpu.iota {dimensions = array<i32: 1>} : vector<32x32xi32>
    %c-1_i32 = arith.constant -1 : i32
    %142 = vector.broadcast %c-1_i32 : i32 to vector<32x32xi32>
    %143 = arith.addi %141, %142 : vector<32x32xi32>
    %144 = arith.cmpi eq, %140, %143 : vector<32x32xi32>
    %145 = arith.extui %144 : vector<32x32xi1> to vector<32x32xi32>
    %146 = arith.sitofp %145 : vector<32x32xi32> to vector<32x32xf32>
    %cst_62 = arith.constant 0.000000e+00 : f32
    %147 = vector.broadcast %cst_62 : f32 to vector<32x32xf32>
    %148 = tpu.concatenate %146, %147 in 1 : vector<32x32xf32>, vector<32x32xf32> -> vector<32x64xf32>
    %149 = tpu.concatenate %147, %146 in 1 : vector<32x32xf32>, vector<32x32xf32> -> vector<32x64xf32>
    %150 = tpu.concatenate %148, %149 in 0 : vector<32x64xf32>, vector<32x64xf32> -> vector<64x64xf32>
    %cst_63 = arith.constant dense<0.000000e+00> : vector<8x64xf32>
    %151 = tpu.matmul %90, %150, %cst_63 {dimension_numbers = #tpu.dot_dimension_numbers<[1], [0], [0], [1], [0, 0, 1, 1], [], []>} : vector<8x64xf32>, vector<64x64xf32>, vector<8x64xf32> -> vector<8x64xf32>
    %c3 = arith.constant 3 : index
    %c0_64 = arith.constant 0 : index
    %c0_65 = arith.constant 0 : index
    %152 = vector.load %arg7[%c3, %c0_64, %c0_65] : memref<9x4x8xf32, #tpu.memory_space<vmem>>, vector<1x4x8xf32>
    %153 = vector.shape_cast %152 : vector<1x4x8xf32> to vector<4x8xf32>
    %cst_66 = arith.constant dense<0.000000e+00> : vector<4x64xf32>
    %154 = tpu.matmul %153, %151, %cst_66 {dimension_numbers = #tpu.dot_dimension_numbers<[1], [0], [0], [1], [0, 0, 1, 1], [], []>} : vector<4x8xf32>, vector<8x64xf32>, vector<4x64xf32> -> vector<4x64xf32>
    %155 = arith.addf %139, %154 : vector<4x64xf32>
    %156 = tpu.iota {dimensions = array<i32: 0>} : vector<32x32xi32>
    %157 = tpu.iota {dimensions = array<i32: 1>} : vector<32x32xi32>
    %c0_i32_67 = arith.constant 0 : i32
    %158 = vector.broadcast %c0_i32_67 : i32 to vector<32x32xi32>
    %159 = arith.addi %157, %158 : vector<32x32xi32>
    %160 = arith.cmpi eq, %156, %159 : vector<32x32xi32>
    %161 = arith.extui %160 : vector<32x32xi1> to vector<32x32xi32>
    %162 = arith.sitofp %161 : vector<32x32xi32> to vector<32x32xf32>
    %cst_68 = arith.constant 0.000000e+00 : f32
    %163 = vector.broadcast %cst_68 : f32 to vector<32x32xf32>
    %164 = tpu.concatenate %162, %163 in 1 : vector<32x32xf32>, vector<32x32xf32> -> vector<32x64xf32>
    %165 = tpu.concatenate %163, %162 in 1 : vector<32x32xf32>, vector<32x32xf32> -> vector<32x64xf32>
    %166 = tpu.concatenate %164, %165 in 0 : vector<32x64xf32>, vector<32x64xf32> -> vector<64x64xf32>
    %cst_69 = arith.constant dense<0.000000e+00> : vector<8x64xf32>
    %167 = tpu.matmul %90, %166, %cst_69 {dimension_numbers = #tpu.dot_dimension_numbers<[1], [0], [0], [1], [0, 0, 1, 1], [], []>} : vector<8x64xf32>, vector<64x64xf32>, vector<8x64xf32> -> vector<8x64xf32>
    %c4 = arith.constant 4 : index
    %c0_70 = arith.constant 0 : index
    %c0_71 = arith.constant 0 : index
    %168 = vector.load %arg7[%c4, %c0_70, %c0_71] : memref<9x4x8xf32, #tpu.memory_space<vmem>>, vector<1x4x8xf32>
    %169 = vector.shape_cast %168 : vector<1x4x8xf32> to vector<4x8xf32>
    %cst_72 = arith.constant dense<0.000000e+00> : vector<4x64xf32>
    %170 = tpu.matmul %169, %167, %cst_72 {dimension_numbers = #tpu.dot_dimension_numbers<[1], [0], [0], [1], [0, 0, 1, 1], [], []>} : vector<4x8xf32>, vector<8x64xf32>, vector<4x64xf32> -> vector<4x64xf32>
    %171 = arith.addf %155, %170 : vector<4x64xf32>
    %172 = tpu.iota {dimensions = array<i32: 0>} : vector<32x32xi32>
    %173 = tpu.iota {dimensions = array<i32: 1>} : vector<32x32xi32>
    %c1_i32_73 = arith.constant 1 : i32
    %174 = vector.broadcast %c1_i32_73 : i32 to vector<32x32xi32>
    %175 = arith.addi %173, %174 : vector<32x32xi32>
    %176 = arith.cmpi eq, %172, %175 : vector<32x32xi32>
    %177 = arith.extui %176 : vector<32x32xi1> to vector<32x32xi32>
    %178 = arith.sitofp %177 : vector<32x32xi32> to vector<32x32xf32>
    %cst_74 = arith.constant 0.000000e+00 : f32
    %179 = vector.broadcast %cst_74 : f32 to vector<32x32xf32>
    %180 = tpu.concatenate %178, %179 in 1 : vector<32x32xf32>, vector<32x32xf32> -> vector<32x64xf32>
    %181 = tpu.concatenate %179, %178 in 1 : vector<32x32xf32>, vector<32x32xf32> -> vector<32x64xf32>
    %182 = tpu.concatenate %180, %181 in 0 : vector<32x64xf32>, vector<32x64xf32> -> vector<64x64xf32>
    %cst_75 = arith.constant dense<0.000000e+00> : vector<8x64xf32>
    %183 = tpu.matmul %90, %182, %cst_75 {dimension_numbers = #tpu.dot_dimension_numbers<[1], [0], [0], [1], [0, 0, 1, 1], [], []>} : vector<8x64xf32>, vector<64x64xf32>, vector<8x64xf32> -> vector<8x64xf32>
    %c5 = arith.constant 5 : index
    %c0_76 = arith.constant 0 : index
    %c0_77 = arith.constant 0 : index
    %184 = vector.load %arg7[%c5, %c0_76, %c0_77] : memref<9x4x8xf32, #tpu.memory_space<vmem>>, vector<1x4x8xf32>
    %185 = vector.shape_cast %184 : vector<1x4x8xf32> to vector<4x8xf32>
    %cst_78 = arith.constant dense<0.000000e+00> : vector<4x64xf32>
    %186 = tpu.matmul %185, %183, %cst_78 {dimension_numbers = #tpu.dot_dimension_numbers<[1], [0], [0], [1], [0, 0, 1, 1], [], []>} : vector<4x8xf32>, vector<8x64xf32>, vector<4x64xf32> -> vector<4x64xf32>
    %187 = arith.addf %171, %186 : vector<4x64xf32>
    %188 = tpu.iota {dimensions = array<i32: 0>} : vector<32x32xi32>
    %189 = tpu.iota {dimensions = array<i32: 1>} : vector<32x32xi32>
    %c2_i32_79 = arith.constant 2 : i32
    %190 = vector.broadcast %c2_i32_79 : i32 to vector<32x32xi32>
    %191 = arith.addi %189, %190 : vector<32x32xi32>
    %192 = arith.cmpi eq, %188, %191 : vector<32x32xi32>
    %193 = arith.extui %192 : vector<32x32xi1> to vector<32x32xi32>
    %194 = arith.sitofp %193 : vector<32x32xi32> to vector<32x32xf32>
    %cst_80 = arith.constant 0.000000e+00 : f32
    %195 = vector.broadcast %cst_80 : f32 to vector<32x32xf32>
    %196 = tpu.concatenate %194, %195 in 1 : vector<32x32xf32>, vector<32x32xf32> -> vector<32x64xf32>
    %197 = tpu.concatenate %195, %194 in 1 : vector<32x32xf32>, vector<32x32xf32> -> vector<32x64xf32>
    %198 = tpu.concatenate %196, %197 in 0 : vector<32x64xf32>, vector<32x64xf32> -> vector<64x64xf32>
    %cst_81 = arith.constant dense<0.000000e+00> : vector<8x64xf32>
    %199 = tpu.matmul %90, %198, %cst_81 {dimension_numbers = #tpu.dot_dimension_numbers<[1], [0], [0], [1], [0, 0, 1, 1], [], []>} : vector<8x64xf32>, vector<64x64xf32>, vector<8x64xf32> -> vector<8x64xf32>
    %c6 = arith.constant 6 : index
    %c0_82 = arith.constant 0 : index
    %c0_83 = arith.constant 0 : index
    %200 = vector.load %arg7[%c6, %c0_82, %c0_83] : memref<9x4x8xf32, #tpu.memory_space<vmem>>, vector<1x4x8xf32>
    %201 = vector.shape_cast %200 : vector<1x4x8xf32> to vector<4x8xf32>
    %cst_84 = arith.constant dense<0.000000e+00> : vector<4x64xf32>
    %202 = tpu.matmul %201, %199, %cst_84 {dimension_numbers = #tpu.dot_dimension_numbers<[1], [0], [0], [1], [0, 0, 1, 1], [], []>} : vector<4x8xf32>, vector<8x64xf32>, vector<4x64xf32> -> vector<4x64xf32>
    %203 = arith.addf %187, %202 : vector<4x64xf32>
    %204 = tpu.iota {dimensions = array<i32: 0>} : vector<32x32xi32>
    %205 = tpu.iota {dimensions = array<i32: 1>} : vector<32x32xi32>
    %c3_i32 = arith.constant 3 : i32
    %206 = vector.broadcast %c3_i32 : i32 to vector<32x32xi32>
    %207 = arith.addi %205, %206 : vector<32x32xi32>
    %208 = arith.cmpi eq, %204, %207 : vector<32x32xi32>
    %209 = arith.extui %208 : vector<32x32xi1> to vector<32x32xi32>
    %210 = arith.sitofp %209 : vector<32x32xi32> to vector<32x32xf32>
    %cst_85 = arith.constant 0.000000e+00 : f32
    %211 = vector.broadcast %cst_85 : f32 to vector<32x32xf32>
    %212 = tpu.concatenate %210, %211 in 1 : vector<32x32xf32>, vector<32x32xf32> -> vector<32x64xf32>
    %213 = tpu.concatenate %211, %210 in 1 : vector<32x32xf32>, vector<32x32xf32> -> vector<32x64xf32>
    %214 = tpu.concatenate %212, %213 in 0 : vector<32x64xf32>, vector<32x64xf32> -> vector<64x64xf32>
    %cst_86 = arith.constant dense<0.000000e+00> : vector<8x64xf32>
    %215 = tpu.matmul %90, %214, %cst_86 {dimension_numbers = #tpu.dot_dimension_numbers<[1], [0], [0], [1], [0, 0, 1, 1], [], []>} : vector<8x64xf32>, vector<64x64xf32>, vector<8x64xf32> -> vector<8x64xf32>
    %c7 = arith.constant 7 : index
    %c0_87 = arith.constant 0 : index
    %c0_88 = arith.constant 0 : index
    %216 = vector.load %arg7[%c7, %c0_87, %c0_88] : memref<9x4x8xf32, #tpu.memory_space<vmem>>, vector<1x4x8xf32>
    %217 = vector.shape_cast %216 : vector<1x4x8xf32> to vector<4x8xf32>
    %cst_89 = arith.constant dense<0.000000e+00> : vector<4x64xf32>
    %218 = tpu.matmul %217, %215, %cst_89 {dimension_numbers = #tpu.dot_dimension_numbers<[1], [0], [0], [1], [0, 0, 1, 1], [], []>} : vector<4x8xf32>, vector<8x64xf32>, vector<4x64xf32> -> vector<4x64xf32>
    %219 = arith.addf %203, %218 : vector<4x64xf32>
    %220 = tpu.iota {dimensions = array<i32: 0>} : vector<32x32xi32>
    %221 = tpu.iota {dimensions = array<i32: 1>} : vector<32x32xi32>
    %c4_i32 = arith.constant 4 : i32
    %222 = vector.broadcast %c4_i32 : i32 to vector<32x32xi32>
    %223 = arith.addi %221, %222 : vector<32x32xi32>
    %224 = arith.cmpi eq, %220, %223 : vector<32x32xi32>
    %225 = arith.extui %224 : vector<32x32xi1> to vector<32x32xi32>
    %226 = arith.sitofp %225 : vector<32x32xi32> to vector<32x32xf32>
    %cst_90 = arith.constant 0.000000e+00 : f32
    %227 = vector.broadcast %cst_90 : f32 to vector<32x32xf32>
    %228 = tpu.concatenate %226, %227 in 1 : vector<32x32xf32>, vector<32x32xf32> -> vector<32x64xf32>
    %229 = tpu.concatenate %227, %226 in 1 : vector<32x32xf32>, vector<32x32xf32> -> vector<32x64xf32>
    %230 = tpu.concatenate %228, %229 in 0 : vector<32x64xf32>, vector<32x64xf32> -> vector<64x64xf32>
    %cst_91 = arith.constant dense<0.000000e+00> : vector<8x64xf32>
    %231 = tpu.matmul %90, %230, %cst_91 {dimension_numbers = #tpu.dot_dimension_numbers<[1], [0], [0], [1], [0, 0, 1, 1], [], []>} : vector<8x64xf32>, vector<64x64xf32>, vector<8x64xf32> -> vector<8x64xf32>
    %c8 = arith.constant 8 : index
    %c0_92 = arith.constant 0 : index
    %c0_93 = arith.constant 0 : index
    %232 = vector.load %arg7[%c8, %c0_92, %c0_93] : memref<9x4x8xf32, #tpu.memory_space<vmem>>, vector<1x4x8xf32>
    %233 = vector.shape_cast %232 : vector<1x4x8xf32> to vector<4x8xf32>
    %cst_94 = arith.constant dense<0.000000e+00> : vector<4x64xf32>
    %234 = tpu.matmul %233, %231, %cst_94 {dimension_numbers = #tpu.dot_dimension_numbers<[1], [0], [0], [1], [0, 0, 1, 1], [], []>} : vector<4x8xf32>, vector<8x64xf32>, vector<4x64xf32> -> vector<4x64xf32>
    %235 = arith.addf %219, %234 : vector<4x64xf32>
    %cst_95 = arith.constant dense<0.000000e+00> : vector<4xf32>
    %236 = vector.multi_reduction <add>, %235, %cst_95 [1] : vector<4x64xf32> to vector<4xf32>
    %237 = vector.shape_cast %236 : vector<4xf32> to vector<4x1xf32>
    %cst_96 = arith.constant 6.400000e+01 : f32
    %238 = vector.broadcast %cst_96 : f32 to vector<4x1xf32>
    %239 = arith.divf %237, %238 : vector<4x1xf32>
    %240 = vector.broadcast %239 : vector<4x1xf32> to vector<4x64xf32>
    %241 = arith.subf %235, %240 : vector<4x64xf32>
    %242 = arith.mulf %241, %241 : vector<4x64xf32>
    %cst_97 = arith.constant dense<0.000000e+00> : vector<4xf32>
    %243 = vector.multi_reduction <add>, %242, %cst_97 [1] : vector<4x64xf32> to vector<4xf32>
    %244 = vector.shape_cast %243 : vector<4xf32> to vector<4x1xf32>
    %cst_98 = arith.constant 6.400000e+01 : f32
    %245 = vector.broadcast %cst_98 : f32 to vector<4x1xf32>
    %246 = arith.divf %244, %245 : vector<4x1xf32>
    %247 = vector.broadcast %239 : vector<4x1xf32> to vector<4x64xf32>
    %248 = arith.subf %235, %247 : vector<4x64xf32>
    %cst_99 = arith.constant 9.99999974E-6 : f32
    %249 = vector.broadcast %cst_99 : f32 to vector<4x1xf32>
    %250 = arith.addf %246, %249 : vector<4x1xf32>
    %251 = math.rsqrt %250 : vector<4x1xf32>
    %252 = vector.broadcast %251 : vector<4x1xf32> to vector<4x64xf32>
    %253 = arith.mulf %248, %252 : vector<4x64xf32>
    %c0_100 = arith.constant 0 : index
    %c0_101 = arith.constant 0 : index
    %254 = vector.load %arg8[%c0_100, %c0_101] : memref<4x1xf32, #tpu.memory_space<vmem>>, vector<4x1xf32>
    %255 = vector.broadcast %254 : vector<4x1xf32> to vector<4x64xf32>
    %256 = arith.mulf %253, %255 : vector<4x64xf32>
    %c0_102 = arith.constant 0 : index
    %c0_103 = arith.constant 0 : index
    %257 = vector.load %arg9[%c0_102, %c0_103] : memref<4x1xf32, #tpu.memory_space<vmem>>, vector<4x1xf32>
    %258 = vector.broadcast %257 : vector<4x1xf32> to vector<4x64xf32>
    %259 = arith.addf %256, %258 : vector<4x64xf32>
    %cst_104 = arith.constant 0.000000e+00 : f32
    %260 = vector.broadcast %cst_104 : f32 to vector<4x64xf32>
    %261 = arith.cmpf oge, %259, %260 : vector<4x64xf32>
    %cst_105 = arith.constant 2.000000e-01 : f32
    %262 = vector.broadcast %cst_105 : f32 to vector<4x64xf32>
    %263 = arith.mulf %262, %259 : vector<4x64xf32>
    %264 = arith.select %261, %259, %263 : vector<4x64xi1>, vector<4x64xf32>
    %cst_106 = arith.constant 0.000000e+00 : f32
    %265 = vector.broadcast %cst_106 : f32 to vector<4x64xf32>
    %266 = tpu.iota {dimensions = array<i32: 0>} : vector<32x32xi32>
    %267 = tpu.iota {dimensions = array<i32: 1>} : vector<32x32xi32>
    %c-4_i32_107 = arith.constant -4 : i32
    %268 = vector.broadcast %c-4_i32_107 : i32 to vector<32x32xi32>
    %269 = arith.addi %267, %268 : vector<32x32xi32>
    %270 = arith.cmpi eq, %266, %269 : vector<32x32xi32>
    %271 = arith.extui %270 : vector<32x32xi1> to vector<32x32xi32>
    %272 = arith.sitofp %271 : vector<32x32xi32> to vector<32x32xf32>
    %cst_108 = arith.constant 0.000000e+00 : f32
    %273 = vector.broadcast %cst_108 : f32 to vector<32x32xf32>
    %274 = tpu.concatenate %272, %273 in 1 : vector<32x32xf32>, vector<32x32xf32> -> vector<32x64xf32>
    %275 = tpu.concatenate %273, %272 in 1 : vector<32x32xf32>, vector<32x32xf32> -> vector<32x64xf32>
    %276 = tpu.concatenate %274, %275 in 0 : vector<32x64xf32>, vector<32x64xf32> -> vector<64x64xf32>
    %cst_109 = arith.constant dense<0.000000e+00> : vector<4x64xf32>
    %277 = tpu.matmul %264, %276, %cst_109 {dimension_numbers = #tpu.dot_dimension_numbers<[1], [0], [0], [1], [0, 0, 1, 1], [], []>} : vector<4x64xf32>, vector<64x64xf32>, vector<4x64xf32> -> vector<4x64xf32>
    %c0_110 = arith.constant 0 : index
    %c0_111 = arith.constant 0 : index
    %c0_112 = arith.constant 0 : index
    %278 = vector.load %arg10[%c0_110, %c0_111, %c0_112] : memref<9x4x4xf32, #tpu.memory_space<vmem>>, vector<1x4x4xf32>
    %279 = vector.shape_cast %278 : vector<1x4x4xf32> to vector<4x4xf32>
    %cst_113 = arith.constant dense<0.000000e+00> : vector<4x64xf32>
    %280 = tpu.matmul %279, %277, %cst_113 {dimension_numbers = #tpu.dot_dimension_numbers<[1], [0], [0], [1], [0, 0, 1, 1], [], []>} : vector<4x4xf32>, vector<4x64xf32>, vector<4x64xf32> -> vector<4x64xf32>
    %281 = arith.addf %265, %280 : vector<4x64xf32>
    %282 = tpu.iota {dimensions = array<i32: 0>} : vector<32x32xi32>
    %283 = tpu.iota {dimensions = array<i32: 1>} : vector<32x32xi32>
    %c-3_i32_114 = arith.constant -3 : i32
    %284 = vector.broadcast %c-3_i32_114 : i32 to vector<32x32xi32>
    %285 = arith.addi %283, %284 : vector<32x32xi32>
    %286 = arith.cmpi eq, %282, %285 : vector<32x32xi32>
    %287 = arith.extui %286 : vector<32x32xi1> to vector<32x32xi32>
    %288 = arith.sitofp %287 : vector<32x32xi32> to vector<32x32xf32>
    %cst_115 = arith.constant 0.000000e+00 : f32
    %289 = vector.broadcast %cst_115 : f32 to vector<32x32xf32>
    %290 = tpu.concatenate %288, %289 in 1 : vector<32x32xf32>, vector<32x32xf32> -> vector<32x64xf32>
    %291 = tpu.concatenate %289, %288 in 1 : vector<32x32xf32>, vector<32x32xf32> -> vector<32x64xf32>
    %292 = tpu.concatenate %290, %291 in 0 : vector<32x64xf32>, vector<32x64xf32> -> vector<64x64xf32>
    %cst_116 = arith.constant dense<0.000000e+00> : vector<4x64xf32>
    %293 = tpu.matmul %264, %292, %cst_116 {dimension_numbers = #tpu.dot_dimension_numbers<[1], [0], [0], [1], [0, 0, 1, 1], [], []>} : vector<4x64xf32>, vector<64x64xf32>, vector<4x64xf32> -> vector<4x64xf32>
    %c1_117 = arith.constant 1 : index
    %c0_118 = arith.constant 0 : index
    %c0_119 = arith.constant 0 : index
    %294 = vector.load %arg10[%c1_117, %c0_118, %c0_119] : memref<9x4x4xf32, #tpu.memory_space<vmem>>, vector<1x4x4xf32>
    %295 = vector.shape_cast %294 : vector<1x4x4xf32> to vector<4x4xf32>
    %cst_120 = arith.constant dense<0.000000e+00> : vector<4x64xf32>
    %296 = tpu.matmul %295, %293, %cst_120 {dimension_numbers = #tpu.dot_dimension_numbers<[1], [0], [0], [1], [0, 0, 1, 1], [], []>} : vector<4x4xf32>, vector<4x64xf32>, vector<4x64xf32> -> vector<4x64xf32>
    %297 = arith.addf %281, %296 : vector<4x64xf32>
    %298 = tpu.iota {dimensions = array<i32: 0>} : vector<32x32xi32>
    %299 = tpu.iota {dimensions = array<i32: 1>} : vector<32x32xi32>
    %c-2_i32_121 = arith.constant -2 : i32
    %300 = vector.broadcast %c-2_i32_121 : i32 to vector<32x32xi32>
    %301 = arith.addi %299, %300 : vector<32x32xi32>
    %302 = arith.cmpi eq, %298, %301 : vector<32x32xi32>
    %303 = arith.extui %302 : vector<32x32xi1> to vector<32x32xi32>
    %304 = arith.sitofp %303 : vector<32x32xi32> to vector<32x32xf32>
    %cst_122 = arith.constant 0.000000e+00 : f32
    %305 = vector.broadcast %cst_122 : f32 to vector<32x32xf32>
    %306 = tpu.concatenate %304, %305 in 1 : vector<32x32xf32>, vector<32x32xf32> -> vector<32x64xf32>
    %307 = tpu.concatenate %305, %304 in 1 : vector<32x32xf32>, vector<32x32xf32> -> vector<32x64xf32>
    %308 = tpu.concatenate %306, %307 in 0 : vector<32x64xf32>, vector<32x64xf32> -> vector<64x64xf32>
    %cst_123 = arith.constant dense<0.000000e+00> : vector<4x64xf32>
    %309 = tpu.matmul %264, %308, %cst_123 {dimension_numbers = #tpu.dot_dimension_numbers<[1], [0], [0], [1], [0, 0, 1, 1], [], []>} : vector<4x64xf32>, vector<64x64xf32>, vector<4x64xf32> -> vector<4x64xf32>
    %c2_124 = arith.constant 2 : index
    %c0_125 = arith.constant 0 : index
    %c0_126 = arith.constant 0 : index
    %310 = vector.load %arg10[%c2_124, %c0_125, %c0_126] : memref<9x4x4xf32, #tpu.memory_space<vmem>>, vector<1x4x4xf32>
    %311 = vector.shape_cast %310 : vector<1x4x4xf32> to vector<4x4xf32>
    %cst_127 = arith.constant dense<0.000000e+00> : vector<4x64xf32>
    %312 = tpu.matmul %311, %309, %cst_127 {dimension_numbers = #tpu.dot_dimension_numbers<[1], [0], [0], [1], [0, 0, 1, 1], [], []>} : vector<4x4xf32>, vector<4x64xf32>, vector<4x64xf32> -> vector<4x64xf32>
    %313 = arith.addf %297, %312 : vector<4x64xf32>
    %314 = tpu.iota {dimensions = array<i32: 0>} : vector<32x32xi32>
    %315 = tpu.iota {dimensions = array<i32: 1>} : vector<32x32xi32>
    %c-1_i32_128 = arith.constant -1 : i32
    %316 = vector.broadcast %c-1_i32_128 : i32 to vector<32x32xi32>
    %317 = arith.addi %315, %316 : vector<32x32xi32>
    %318 = arith.cmpi eq, %314, %317 : vector<32x32xi32>
    %319 = arith.extui %318 : vector<32x32xi1> to vector<32x32xi32>
    %320 = arith.sitofp %319 : vector<32x32xi32> to vector<32x32xf32>
    %cst_129 = arith.constant 0.000000e+00 : f32
    %321 = vector.broadcast %cst_129 : f32 to vector<32x32xf32>
    %322 = tpu.concatenate %320, %321 in 1 : vector<32x32xf32>, vector<32x32xf32> -> vector<32x64xf32>
    %323 = tpu.concatenate %321, %320 in 1 : vector<32x32xf32>, vector<32x32xf32> -> vector<32x64xf32>
    %324 = tpu.concatenate %322, %323 in 0 : vector<32x64xf32>, vector<32x64xf32> -> vector<64x64xf32>
    %cst_130 = arith.constant dense<0.000000e+00> : vector<4x64xf32>
    %325 = tpu.matmul %264, %324, %cst_130 {dimension_numbers = #tpu.dot_dimension_numbers<[1], [0], [0], [1], [0, 0, 1, 1], [], []>} : vector<4x64xf32>, vector<64x64xf32>, vector<4x64xf32> -> vector<4x64xf32>
    %c3_131 = arith.constant 3 : index
    %c0_132 = arith.constant 0 : index
    %c0_133 = arith.constant 0 : index
    %326 = vector.load %arg10[%c3_131, %c0_132, %c0_133] : memref<9x4x4xf32, #tpu.memory_space<vmem>>, vector<1x4x4xf32>
    %327 = vector.shape_cast %326 : vector<1x4x4xf32> to vector<4x4xf32>
    %cst_134 = arith.constant dense<0.000000e+00> : vector<4x64xf32>
    %328 = tpu.matmul %327, %325, %cst_134 {dimension_numbers = #tpu.dot_dimension_numbers<[1], [0], [0], [1], [0, 0, 1, 1], [], []>} : vector<4x4xf32>, vector<4x64xf32>, vector<4x64xf32> -> vector<4x64xf32>
    %329 = arith.addf %313, %328 : vector<4x64xf32>
    %330 = tpu.iota {dimensions = array<i32: 0>} : vector<32x32xi32>
    %331 = tpu.iota {dimensions = array<i32: 1>} : vector<32x32xi32>
    %c0_i32_135 = arith.constant 0 : i32
    %332 = vector.broadcast %c0_i32_135 : i32 to vector<32x32xi32>
    %333 = arith.addi %331, %332 : vector<32x32xi32>
    %334 = arith.cmpi eq, %330, %333 : vector<32x32xi32>
    %335 = arith.extui %334 : vector<32x32xi1> to vector<32x32xi32>
    %336 = arith.sitofp %335 : vector<32x32xi32> to vector<32x32xf32>
    %cst_136 = arith.constant 0.000000e+00 : f32
    %337 = vector.broadcast %cst_136 : f32 to vector<32x32xf32>
    %338 = tpu.concatenate %336, %337 in 1 : vector<32x32xf32>, vector<32x32xf32> -> vector<32x64xf32>
    %339 = tpu.concatenate %337, %336 in 1 : vector<32x32xf32>, vector<32x32xf32> -> vector<32x64xf32>
    %340 = tpu.concatenate %338, %339 in 0 : vector<32x64xf32>, vector<32x64xf32> -> vector<64x64xf32>
    %cst_137 = arith.constant dense<0.000000e+00> : vector<4x64xf32>
    %341 = tpu.matmul %264, %340, %cst_137 {dimension_numbers = #tpu.dot_dimension_numbers<[1], [0], [0], [1], [0, 0, 1, 1], [], []>} : vector<4x64xf32>, vector<64x64xf32>, vector<4x64xf32> -> vector<4x64xf32>
    %c4_138 = arith.constant 4 : index
    %c0_139 = arith.constant 0 : index
    %c0_140 = arith.constant 0 : index
    %342 = vector.load %arg10[%c4_138, %c0_139, %c0_140] : memref<9x4x4xf32, #tpu.memory_space<vmem>>, vector<1x4x4xf32>
    %343 = vector.shape_cast %342 : vector<1x4x4xf32> to vector<4x4xf32>
    %cst_141 = arith.constant dense<0.000000e+00> : vector<4x64xf32>
    %344 = tpu.matmul %343, %341, %cst_141 {dimension_numbers = #tpu.dot_dimension_numbers<[1], [0], [0], [1], [0, 0, 1, 1], [], []>} : vector<4x4xf32>, vector<4x64xf32>, vector<4x64xf32> -> vector<4x64xf32>
    %345 = arith.addf %329, %344 : vector<4x64xf32>
    %346 = tpu.iota {dimensions = array<i32: 0>} : vector<32x32xi32>
    %347 = tpu.iota {dimensions = array<i32: 1>} : vector<32x32xi32>
    %c1_i32_142 = arith.constant 1 : i32
    %348 = vector.broadcast %c1_i32_142 : i32 to vector<32x32xi32>
    %349 = arith.addi %347, %348 : vector<32x32xi32>
    %350 = arith.cmpi eq, %346, %349 : vector<32x32xi32>
    %351 = arith.extui %350 : vector<32x32xi1> to vector<32x32xi32>
    %352 = arith.sitofp %351 : vector<32x32xi32> to vector<32x32xf32>
    %cst_143 = arith.constant 0.000000e+00 : f32
    %353 = vector.broadcast %cst_143 : f32 to vector<32x32xf32>
    %354 = tpu.concatenate %352, %353 in 1 : vector<32x32xf32>, vector<32x32xf32> -> vector<32x64xf32>
    %355 = tpu.concatenate %353, %352 in 1 : vector<32x32xf32>, vector<32x32xf32> -> vector<32x64xf32>
    %356 = tpu.concatenate %354, %355 in 0 : vector<32x64xf32>, vector<32x64xf32> -> vector<64x64xf32>
    %cst_144 = arith.constant dense<0.000000e+00> : vector<4x64xf32>
    %357 = tpu.matmul %264, %356, %cst_144 {dimension_numbers = #tpu.dot_dimension_numbers<[1], [0], [0], [1], [0, 0, 1, 1], [], []>} : vector<4x64xf32>, vector<64x64xf32>, vector<4x64xf32> -> vector<4x64xf32>
    %c5_145 = arith.constant 5 : index
    %c0_146 = arith.constant 0 : index
    %c0_147 = arith.constant 0 : index
    %358 = vector.load %arg10[%c5_145, %c0_146, %c0_147] : memref<9x4x4xf32, #tpu.memory_space<vmem>>, vector<1x4x4xf32>
    %359 = vector.shape_cast %358 : vector<1x4x4xf32> to vector<4x4xf32>
    %cst_148 = arith.constant dense<0.000000e+00> : vector<4x64xf32>
    %360 = tpu.matmul %359, %357, %cst_148 {dimension_numbers = #tpu.dot_dimension_numbers<[1], [0], [0], [1], [0, 0, 1, 1], [], []>} : vector<4x4xf32>, vector<4x64xf32>, vector<4x64xf32> -> vector<4x64xf32>
    %361 = arith.addf %345, %360 : vector<4x64xf32>
    %362 = tpu.iota {dimensions = array<i32: 0>} : vector<32x32xi32>
    %363 = tpu.iota {dimensions = array<i32: 1>} : vector<32x32xi32>
    %c2_i32_149 = arith.constant 2 : i32
    %364 = vector.broadcast %c2_i32_149 : i32 to vector<32x32xi32>
    %365 = arith.addi %363, %364 : vector<32x32xi32>
    %366 = arith.cmpi eq, %362, %365 : vector<32x32xi32>
    %367 = arith.extui %366 : vector<32x32xi1> to vector<32x32xi32>
    %368 = arith.sitofp %367 : vector<32x32xi32> to vector<32x32xf32>
    %cst_150 = arith.constant 0.000000e+00 : f32
    %369 = vector.broadcast %cst_150 : f32 to vector<32x32xf32>
    %370 = tpu.concatenate %368, %369 in 1 : vector<32x32xf32>, vector<32x32xf32> -> vector<32x64xf32>
    %371 = tpu.concatenate %369, %368 in 1 : vector<32x32xf32>, vector<32x32xf32> -> vector<32x64xf32>
    %372 = tpu.concatenate %370, %371 in 0 : vector<32x64xf32>, vector<32x64xf32> -> vector<64x64xf32>
    %cst_151 = arith.constant dense<0.000000e+00> : vector<4x64xf32>
    %373 = tpu.matmul %264, %372, %cst_151 {dimension_numbers = #tpu.dot_dimension_numbers<[1], [0], [0], [1], [0, 0, 1, 1], [], []>} : vector<4x64xf32>, vector<64x64xf32>, vector<4x64xf32> -> vector<4x64xf32>
    %c6_152 = arith.constant 6 : index
    %c0_153 = arith.constant 0 : index
    %c0_154 = arith.constant 0 : index
    %374 = vector.load %arg10[%c6_152, %c0_153, %c0_154] : memref<9x4x4xf32, #tpu.memory_space<vmem>>, vector<1x4x4xf32>
    %375 = vector.shape_cast %374 : vector<1x4x4xf32> to vector<4x4xf32>
    %cst_155 = arith.constant dense<0.000000e+00> : vector<4x64xf32>
    %376 = tpu.matmul %375, %373, %cst_155 {dimension_numbers = #tpu.dot_dimension_numbers<[1], [0], [0], [1], [0, 0, 1, 1], [], []>} : vector<4x4xf32>, vector<4x64xf32>, vector<4x64xf32> -> vector<4x64xf32>
    %377 = arith.addf %361, %376 : vector<4x64xf32>
    %378 = tpu.iota {dimensions = array<i32: 0>} : vector<32x32xi32>
    %379 = tpu.iota {dimensions = array<i32: 1>} : vector<32x32xi32>
    %c3_i32_156 = arith.constant 3 : i32
    %380 = vector.broadcast %c3_i32_156 : i32 to vector<32x32xi32>
    %381 = arith.addi %379, %380 : vector<32x32xi32>
    %382 = arith.cmpi eq, %378, %381 : vector<32x32xi32>
    %383 = arith.extui %382 : vector<32x32xi1> to vector<32x32xi32>
    %384 = arith.sitofp %383 : vector<32x32xi32> to vector<32x32xf32>
    %cst_157 = arith.constant 0.000000e+00 : f32
    %385 = vector.broadcast %cst_157 : f32 to vector<32x32xf32>
    %386 = tpu.concatenate %384, %385 in 1 : vector<32x32xf32>, vector<32x32xf32> -> vector<32x64xf32>
    %387 = tpu.concatenate %385, %384 in 1 : vector<32x32xf32>, vector<32x32xf32> -> vector<32x64xf32>
    %388 = tpu.concatenate %386, %387 in 0 : vector<32x64xf32>, vector<32x64xf32> -> vector<64x64xf32>
    %cst_158 = arith.constant dense<0.000000e+00> : vector<4x64xf32>
    %389 = tpu.matmul %264, %388, %cst_158 {dimension_numbers = #tpu.dot_dimension_numbers<[1], [0], [0], [1], [0, 0, 1, 1], [], []>} : vector<4x64xf32>, vector<64x64xf32>, vector<4x64xf32> -> vector<4x64xf32>
    %c7_159 = arith.constant 7 : index
    %c0_160 = arith.constant 0 : index
    %c0_161 = arith.constant 0 : index
    %390 = vector.load %arg10[%c7_159, %c0_160, %c0_161] : memref<9x4x4xf32, #tpu.memory_space<vmem>>, vector<1x4x4xf32>
    %391 = vector.shape_cast %390 : vector<1x4x4xf32> to vector<4x4xf32>
    %cst_162 = arith.constant dense<0.000000e+00> : vector<4x64xf32>
    %392 = tpu.matmul %391, %389, %cst_162 {dimension_numbers = #tpu.dot_dimension_numbers<[1], [0], [0], [1], [0, 0, 1, 1], [], []>} : vector<4x4xf32>, vector<4x64xf32>, vector<4x64xf32> -> vector<4x64xf32>
    %393 = arith.addf %377, %392 : vector<4x64xf32>
    %394 = tpu.iota {dimensions = array<i32: 0>} : vector<32x32xi32>
    %395 = tpu.iota {dimensions = array<i32: 1>} : vector<32x32xi32>
    %c4_i32_163 = arith.constant 4 : i32
    %396 = vector.broadcast %c4_i32_163 : i32 to vector<32x32xi32>
    %397 = arith.addi %395, %396 : vector<32x32xi32>
    %398 = arith.cmpi eq, %394, %397 : vector<32x32xi32>
    %399 = arith.extui %398 : vector<32x32xi1> to vector<32x32xi32>
    %400 = arith.sitofp %399 : vector<32x32xi32> to vector<32x32xf32>
    %cst_164 = arith.constant 0.000000e+00 : f32
    %401 = vector.broadcast %cst_164 : f32 to vector<32x32xf32>
    %402 = tpu.concatenate %400, %401 in 1 : vector<32x32xf32>, vector<32x32xf32> -> vector<32x64xf32>
    %403 = tpu.concatenate %401, %400 in 1 : vector<32x32xf32>, vector<32x32xf32> -> vector<32x64xf32>
    %404 = tpu.concatenate %402, %403 in 0 : vector<32x64xf32>, vector<32x64xf32> -> vector<64x64xf32>
    %cst_165 = arith.constant dense<0.000000e+00> : vector<4x64xf32>
    %405 = tpu.matmul %264, %404, %cst_165 {dimension_numbers = #tpu.dot_dimension_numbers<[1], [0], [0], [1], [0, 0, 1, 1], [], []>} : vector<4x64xf32>, vector<64x64xf32>, vector<4x64xf32> -> vector<4x64xf32>
    %c8_166 = arith.constant 8 : index
    %c0_167 = arith.constant 0 : index
    %c0_168 = arith.constant 0 : index
    %406 = vector.load %arg10[%c8_166, %c0_167, %c0_168] : memref<9x4x4xf32, #tpu.memory_space<vmem>>, vector<1x4x4xf32>
    %407 = vector.shape_cast %406 : vector<1x4x4xf32> to vector<4x4xf32>
    %cst_169 = arith.constant dense<0.000000e+00> : vector<4x64xf32>
    %408 = tpu.matmul %407, %405, %cst_169 {dimension_numbers = #tpu.dot_dimension_numbers<[1], [0], [0], [1], [0, 0, 1, 1], [], []>} : vector<4x4xf32>, vector<4x64xf32>, vector<4x64xf32> -> vector<4x64xf32>
    %409 = arith.addf %393, %408 : vector<4x64xf32>
    %cst_170 = arith.constant dense<0.000000e+00> : vector<4xf32>
    %410 = vector.multi_reduction <add>, %409, %cst_170 [1] : vector<4x64xf32> to vector<4xf32>
    %411 = vector.shape_cast %410 : vector<4xf32> to vector<4x1xf32>
    %cst_171 = arith.constant 6.400000e+01 : f32
    %412 = vector.broadcast %cst_171 : f32 to vector<4x1xf32>
    %413 = arith.divf %411, %412 : vector<4x1xf32>
    %414 = vector.broadcast %413 : vector<4x1xf32> to vector<4x64xf32>
    %415 = arith.subf %409, %414 : vector<4x64xf32>
    %416 = arith.mulf %415, %415 : vector<4x64xf32>
    %cst_172 = arith.constant dense<0.000000e+00> : vector<4xf32>
    %417 = vector.multi_reduction <add>, %416, %cst_172 [1] : vector<4x64xf32> to vector<4xf32>
    %418 = vector.shape_cast %417 : vector<4xf32> to vector<4x1xf32>
    %cst_173 = arith.constant 6.400000e+01 : f32
    %419 = vector.broadcast %cst_173 : f32 to vector<4x1xf32>
    %420 = arith.divf %418, %419 : vector<4x1xf32>
    %421 = vector.broadcast %413 : vector<4x1xf32> to vector<4x64xf32>
    %422 = arith.subf %409, %421 : vector<4x64xf32>
    %cst_174 = arith.constant 9.99999974E-6 : f32
    %423 = vector.broadcast %cst_174 : f32 to vector<4x1xf32>
    %424 = arith.addf %420, %423 : vector<4x1xf32>
    %425 = math.rsqrt %424 : vector<4x1xf32>
    %426 = vector.broadcast %425 : vector<4x1xf32> to vector<4x64xf32>
    %427 = arith.mulf %422, %426 : vector<4x64xf32>
    %c0_175 = arith.constant 0 : index
    %c0_176 = arith.constant 0 : index
    %428 = vector.load %arg11[%c0_175, %c0_176] : memref<4x1xf32, #tpu.memory_space<vmem>>, vector<4x1xf32>
    %429 = vector.broadcast %428 : vector<4x1xf32> to vector<4x64xf32>
    %430 = arith.mulf %427, %429 : vector<4x64xf32>
    %c0_177 = arith.constant 0 : index
    %c0_178 = arith.constant 0 : index
    %431 = vector.load %arg12[%c0_177, %c0_178] : memref<4x1xf32, #tpu.memory_space<vmem>>, vector<4x1xf32>
    %432 = vector.broadcast %431 : vector<4x1xf32> to vector<4x64xf32>
    %433 = arith.addf %430, %432 : vector<4x64xf32>
    %cst_179 = arith.constant 0.000000e+00 : f32
    %434 = vector.broadcast %cst_179 : f32 to vector<4x64xf32>
    %435 = arith.cmpf oge, %433, %434 : vector<4x64xf32>
    %cst_180 = arith.constant 2.000000e-01 : f32
    %436 = vector.broadcast %cst_180 : f32 to vector<4x64xf32>
    %437 = arith.mulf %436, %433 : vector<4x64xf32>
    %438 = arith.select %435, %433, %437 : vector<4x64xi1>, vector<4x64xf32>
    %439 = vector.extract_strided_slice %438 {offsets = [0, 0], sizes = [4, 32], strides = [1, 1]} : vector<4x64xf32> to vector<4x32xf32>
    %c0_181 = arith.constant 0 : index
    %c0_182 = arith.constant 0 : index
    %c0_183 = arith.constant 0 : index
    %440 = vector.load %arg13[%c0_181, %c0_182, %c0_183] : memref<2x4x32xf32, #tpu.memory_space<vmem>>, vector<1x4x32xf32>
    %441 = vector.shape_cast %440 : vector<1x4x32xf32> to vector<4x32xf32>
    %442 = vector.shape_cast %439 : vector<4x32xf32> to vector<1x4x32xf32>
    tpu.vector_store %arg13[%c0_181, %c0_182, %c0_183], %442 {strides = array<i32>} : memref<2x4x32xf32, #tpu.memory_space<vmem>>, vector<1x4x32xf32>,
    %443 = vector.extract_strided_slice %438 {offsets = [0, 32], sizes = [4, 32], strides = [1, 1]} : vector<4x64xf32> to vector<4x32xf32>
    %c1_184 = arith.constant 1 : index
    %c0_185 = arith.constant 0 : index
    %c0_186 = arith.constant 0 : index
    %444 = vector.load %arg13[%c1_184, %c0_185, %c0_186] : memref<2x4x32xf32, #tpu.memory_space<vmem>>, vector<1x4x32xf32>
    %445 = vector.shape_cast %444 : vector<1x4x32xf32> to vector<4x32xf32>
    %446 = vector.shape_cast %443 : vector<4x32xf32> to vector<1x4x32xf32>
    tpu.vector_store %arg13[%c1_184, %c0_185, %c0_186], %446 {strides = array<i32>} : memref<2x4x32xf32, #tpu.memory_space<vmem>>, vector<1x4x32xf32>,
    return
  }
  func.func @transform_0(%arg0: i32) -> (i32, i32, i32) {
    %c0_i32 = arith.constant 0 : i32
    %c0_i32_0 = arith.constant 0 : i32
    %c0_i32_1 = arith.constant 0 : i32
    %c0_i32_2 = arith.constant 0 : i32
    return %c0_i32, %c0_i32_0, %c0_i32_1 : i32, i32, i32
  }
  func.func @transform_1(%arg0: i32) -> (i32, i32, i32) {
    %c0_i32 = arith.constant 0 : i32
    %c0_i32_0 = arith.constant 0 : i32
    %c0_i32_1 = arith.constant 0 : i32
    %c0_i32_2 = arith.constant 0 : i32
    return %c0_i32, %c0_i32_0, %c0_i32_1 : i32, i32, i32
  }
  func.func @transform_2(%arg0: i32) -> (i32, i32, i32) {
    %c0_i32 = arith.constant 0 : i32
    %c0_i32_0 = arith.constant 0 : i32
    %c0_i32_1 = arith.constant 0 : i32
    %c0_i32_2 = arith.constant 0 : i32
    return %c0_i32, %c0_i32_0, %c0_i32_1 : i32, i32, i32
  }
  func.func @transform_3(%arg0: i32) -> (i32, i32) {
    %c0_i32 = arith.constant 0 : i32
    %c0_i32_0 = arith.constant 0 : i32
    %c0_i32_1 = arith.constant 0 : i32
    return %c0_i32, %c0_i32_0 : i32, i32
  }
  func.func @transform_4(%arg0: i32) -> (i32, i32, i32) {
    %c0_i32 = arith.constant 0 : i32
    %c0_i32_0 = arith.constant 0 : i32
    %c0_i32_1 = arith.constant 0 : i32
    %c0_i32_2 = arith.constant 0 : i32
    return %c0_i32, %c0_i32_0, %c0_i32_1 : i32, i32, i32
  }
  func.func @transform_5(%arg0: i32) -> (i32, i32) {
    %c0_i32 = arith.constant 0 : i32
    %c0_i32_0 = arith.constant 0 : i32
    %c0_i32_1 = arith.constant 0 : i32
    return %c0_i32, %c0_i32_0 : i32, i32
  }
  func.func @transform_6(%arg0: i32) -> (i32, i32, i32) {
    %c0_i32 = arith.constant 0 : i32
    %c0_i32_0 = arith.constant 0 : i32
    %c0_i32_1 = arith.constant 0 : i32
    %c0_i32_2 = arith.constant 0 : i32
    return %c0_i32, %c0_i32_0, %c0_i32_1 : i32, i32, i32
  }
  func.func @transform_7(%arg0: i32) -> (i32, i32) {
    %c0_i32 = arith.constant 0 : i32
    %c0_i32_0 = arith.constant 0 : i32
    %c0_i32_1 = arith.constant 0 : i32
    return %c0_i32, %c0_i32_0 : i32, i32
  }
  func.func @transform_8(%arg0: i32) -> (i32, i32) {
    %c0_i32 = arith.constant 0 : i32
    %c0_i32_0 = arith.constant 0 : i32
    %c0_i32_1 = arith.constant 0 : i32
    return %c0_i32, %c0_i32_0 : i32, i32
  }
  func.func @transform_9(%arg0: i32) -> (i32, i32, i32) {
    %c0_i32 = arith.constant 0 : i32
    %c0_i32_0 = arith.constant 0 : i32
    %c0_i32_1 = arith.constant 0 : i32
    %c0_i32_2 = arith.constant 0 : i32
    return %c0_i32, %c0_i32_0, %c0_i32_1 : i32, i32, i32
  }
  func.func @transform_10(%arg0: i32) -> (i32, i32) {
    %c0_i32 = arith.constant 0 : i32
    %c0_i32_0 = arith.constant 0 : i32
    %c0_i32_1 = arith.constant 0 : i32
    return %c0_i32, %c0_i32_0 : i32, i32
  }
  func.func @transform_11(%arg0: i32) -> (i32, i32) {
    %c0_i32 = arith.constant 0 : i32
    %c0_i32_0 = arith.constant 0 : i32
    %c0_i32_1 = arith.constant 0 : i32
    return %c0_i32, %c0_i32_0 : i32, i32
  }
  func.func @transform_12(%arg0: i32) -> (i32, i32, i32) {
    %c0_i32 = arith.constant 0 : i32
    %c0_i32_0 = arith.constant 0 : i32
    %c0_i32_1 = arith.constant 0 : i32
    %c0_i32_2 = arith.constant 0 : i32
    return %c0_i32, %c0_i32_0, %c0_i32_1 : i32, i32, i32
  }
}

</mosaic_0001>

<llo_original>
// kernel: tpu_custom_call.1
$region0: #{tpu_custom_call.1}
  #allocation0 [shape = 'u32[]', space=smem, size = 0x4, offset = 0x4, fixed_abs, tag = 'smem constant byte address 0x4 - core index']
  #allocation1 [shape = 'u32[144,128]{1,0:T(1,128)}', space=vmem, size = 0x12000, scoped, tag = 'internal scratch']
  %s0 = inlined_call_operand.vmem [shape: f32[2,8,16], index: 0, kind: input, shape index: {}]
  %s1 = inlined_call_operand.vmem [shape: f32[2,4,16], index: 1, kind: input, shape index: {}]
  %s2 = inlined_call_operand.vmem [shape: f32[2,4,8], index: 2, kind: input, shape index: {}]
  %s3 = inlined_call_operand.vmem [shape: f32[4,1], index: 3, kind: input, shape index: {}]
  %s4 = inlined_call_operand.vmem [shape: f32[2,4,4], index: 4, kind: input, shape index: {}]
  %s5 = inlined_call_operand.vmem [shape: f32[4,1], index: 5, kind: input, shape index: {}]
  %s6 = inlined_call_operand.vmem [shape: f32[9,4,8], index: 6, kind: input, shape index: {}]
  %s7 = inlined_call_operand.vmem [shape: f32[4,1], index: 7, kind: input, shape index: {}]
  %s8 = inlined_call_operand.vmem [shape: f32[4,1], index: 8, kind: input, shape index: {}]
  %s9 = inlined_call_operand.vmem [shape: f32[9,4,4], index: 9, kind: input, shape index: {}]
  %s10 = inlined_call_operand.vmem [shape: f32[4,1], index: 10, kind: input, shape index: {}]
  %s11 = inlined_call_operand.vmem [shape: f32[4,1], index: 11, kind: input, shape index: {}]
  %s12 = inlined_call_operand.hbm [shape: f32[2,4,32], index: 12, kind: output, shape index: {}]
  %s13 = sld [smem:[#allocation0]]
  $region58: #{tpu_custom_call.1} parent=0
    _
  %s15 = ssub.s32 1, %s13
  %s16 = scalar_select 0, %s15, %s13
  $region1: #{tpu_custom_call.1} parent=0
    #allocation2 [shape = 'u8[4096]{0}', space=vmem, size = 0x1000, scoped, tag = 'output window, operand 0, single buffered']
    #allocation3 [shape = 's32[1]{0}', space=sflag, size = 0x4, scoped, tag = 'scoped memory for tpu_custom_call.1']
    %17 = vsyncpa [#allocation3], 0
    // Predicated region
    $region2: #{tpu_custom_call.1} parent=1 // pred_check
      _
    $region3: #{tpu_custom_call.1} parent=1 // pred_check_branch
      %19 = sbr.rel (0) target = $region5
    $region4: #{tpu_custom_call.1} parent=1 // pred_region
      _
    $region5: #{tpu_custom_call.1} parent=1 // pred_fallthru
      _
    // Predicated region
    $region6: #{tpu_custom_call.1} parent=1 // pred_check
      _
    $region7: #{tpu_custom_call.1} parent=1 // pred_check_branch
      %21 = sbr.rel (0) target = $region9
    $region8: #{tpu_custom_call.1} parent=1 // pred_region
      _
    $region9: #{tpu_custom_call.1} parent=1 // pred_fallthru
      _
    // Predicated region
    $region10: #{tpu_custom_call.1} parent=1 // pred_check
      _
    $region11: #{tpu_custom_call.1} parent=1 // pred_check_branch
      %23 = sbr.rel (0) target = $region13
    $region12: #{tpu_custom_call.1} parent=1 // pred_region
      _
    $region13: #{tpu_custom_call.1} parent=1 // pred_fallthru
      _
    // Predicated region
    $region14: #{tpu_custom_call.1} parent=1 // pred_check
      _
    $region15: #{tpu_custom_call.1} parent=1 // pred_check_branch
      %25 = sbr.rel (0) target = $region17
    $region16: #{tpu_custom_call.1} parent=1 // pred_region
      _
    $region17: #{tpu_custom_call.1} parent=1 // pred_fallthru
      _
    // Predicated region
    $region18: #{tpu_custom_call.1} parent=1 // pred_check
      _
    $region19: #{tpu_custom_call.1} parent=1 // pred_check_branch
      %27 = sbr.rel (0) target = $region21
    $region20: #{tpu_custom_call.1} parent=1 // pred_region
      _
    $region21: #{tpu_custom_call.1} parent=1 // pred_fallthru
      _
    // Predicated region
    $region22: #{tpu_custom_call.1} parent=1 // pred_check
      _
    $region23: #{tpu_custom_call.1} parent=1 // pred_check_branch
      %29 = sbr.rel (0) target = $region25
    $region24: #{tpu_custom_call.1} parent=1 // pred_region
      _
    $region25: #{tpu_custom_call.1} parent=1 // pred_fallthru
      _
    // Predicated region
    $region26: #{tpu_custom_call.1} parent=1 // pred_check
      _
    $region27: #{tpu_custom_call.1} parent=1 // pred_check_branch
      %31 = sbr.rel (0) target = $region29
    $region28: #{tpu_custom_call.1} parent=1 // pred_region
      _
    $region29: #{tpu_custom_call.1} parent=1 // pred_fallthru
      _
    // Predicated region
    $region30: #{tpu_custom_call.1} parent=1 // pred_check
      _
    $region31: #{tpu_custom_call.1} parent=1 // pred_check_branch
      %33 = sbr.rel (0) target = $region33
    $region32: #{tpu_custom_call.1} parent=1 // pred_region
      _
    $region33: #{tpu_custom_call.1} parent=1 // pred_fallthru
      _
    // Predicated region
    $region34: #{tpu_custom_call.1} parent=1 // pred_check
      _
    $region35: #{tpu_custom_call.1} parent=1 // pred_check_branch
      %35 = sbr.rel (0) target = $region37
    $region36: #{tpu_custom_call.1} parent=1 // pred_region
      _
    $region37: #{tpu_custom_call.1} parent=1 // pred_fallthru
      _
    // Predicated region
    $region38: #{tpu_custom_call.1} parent=1 // pred_check
      _
    $region39: #{tpu_custom_call.1} parent=1 // pred_check_branch
      %37 = sbr.rel (0) target = $region41
    $region40: #{tpu_custom_call.1} parent=1 // pred_region
      _
    $region41: #{tpu_custom_call.1} parent=1 // pred_fallthru
      _
    // Predicated region
    $region42: #{tpu_custom_call.1} parent=1 // pred_check
      _
    $region43: #{tpu_custom_call.1} parent=1 // pred_check_branch
      %39 = sbr.rel (0) target = $region45
    $region44: #{tpu_custom_call.1} parent=1 // pred_region
      _
    $region45: #{tpu_custom_call.1} parent=1 // pred_fallthru
      _
    // Predicated region
    $region46: #{tpu_custom_call.1} parent=1 // pred_check
      _
    $region47: #{tpu_custom_call.1} parent=1 // pred_check_branch
      %41 = sbr.rel (0) target = $region49
    $region48: #{tpu_custom_call.1} parent=1 // pred_region
      _
    $region49: #{tpu_custom_call.1} parent=1 // pred_fallthru
      _
    %v42 = vld [vmem:[%s0] sm:$0xff]
    %s43 = scalar_lea.vmem %s0, 8
    %v44 = vld [vmem:[%s43] sm:$0xff]
    %46 = vrot.lane.b32.xlu0 %v44, 16
    %v47 = vpop.permute.xlu0 %46
    %vm49 = vcmask 130048
    %v50 = vsel %vm49, %v42, %v47
    %v51 = vld [vmem:[%s1] sm:$0xf]
    %s52 = scalar_lea.vmem %s1, 4
    %v53 = vld [vmem:[%s52] sm:$0xf]
    %55 = vrot.lane.b32.xlu0 %v53, 16
    %v56 = vpop.permute.xlu0 %55
    %v58 = vsel %vm49, %v51, %v56
    %v59 = vld [vmem:[%s2] sm:$0xf]
    %vm60 = vcmask 64512
    %v62 = vsel %vm60, %v59, 0
    %64 = vmatprep.subr.mxu0 0.0
    %65 = vmatpush1.msra.mxu0 0.0
    %66 = vmatprep.subr.mxu0 0.0
    %67 = vmatpush1.msra.mxu0 0.0
    %68 = vmatprep.subr.mxu0 0.0
    %69 = vmatpush1.msra.mxu0 0.0
    %70 = vmatprep.subr.mxu0 0.0
    %71 = vmatpush1.msra.mxu0 0.0
    %72 = vmatprep.subr.mxu0 0.0
    %73 = vmatpush1.msra.mxu0 0.0
    %74 = vmatprep.subr.mxu0 0.0
    %75 = vmatpush1.msra.mxu0 0.0
    %76 = vmatprep.subr.mxu0 0.0
    %77 = vmatpush1.msra.mxu0 0.0
    %78 = vmatprep.subr.mxu0 0.0
    %79 = vmatpush1.msra.mxu0 0.0
    %80 = vmatprep.subr.mxu0 0.0
    %81 = vmatpush1.msra.mxu0 0.0
    %82 = vmatprep.subr.mxu0 0.0
    %83 = vmatpush1.msra.mxu0 0.0
    %84 = vmatprep.subr.mxu0 0.0
    %85 = vmatpush1.msra.mxu0 0.0
    %86 = vmatprep.subr.mxu0 0.0
    %87 = vmatpush1.msra.mxu0 0.0
    %88 = vmatprep.subr.mxu0 0.0
    %89 = vmatpush1.msra.mxu0 0.0
    %90 = vmatprep.subr.mxu0 0.0
    %91 = vmatpush1.msra.mxu0 0.0
    %92 = vmatprep.subr.mxu0 0.0
    %93 = vmatpush1.msra.mxu0 0.0
    %94 = vmatprep.subr.mxu0 0.0
    %95 = vmatpush1.msra.mxu0 %v50
    %96 = vmatprep.subr.mxu0 0.0
    %97 = vmatpush2.msra.mxu0 0.0
    %98 = vmatprep.subr.mxu0 0.0
    %99 = vmatpush2.msra.mxu0 0.0
    %100 = vmatprep.subr.mxu0 0.0
    %101 = vmatpush2.msra.mxu0 0.0
    %102 = vmatprep.subr.mxu0 0.0
    %103 = vmatpush2.msra.mxu0 0.0
    %104 = vmatprep.subr.mxu0 0.0
    %105 = vmatpush2.msra.mxu0 0.0
    %106 = vmatprep.subr.mxu0 0.0
    %107 = vmatpush2.msra.mxu0 0.0
    %108 = vmatprep.subr.mxu0 0.0
    %109 = vmatpush2.msra.mxu0 0.0
    %110 = vmatprep.subr.mxu0 0.0
    %111 = vmatpush2.msra.mxu0 0.0
    %112 = vmatprep.subr.mxu0 0.0
    %113 = vmatpush2.msra.mxu0 0.0
    %114 = vmatprep.subr.mxu0 0.0
    %115 = vmatpush2.msra.mxu0 0.0
    %116 = vmatprep.subr.mxu0 0.0
    %117 = vmatpush2.msra.mxu0 0.0
    %118 = vmatprep.subr.mxu0 0.0
    %119 = vmatpush2.msra.mxu0 0.0
    %120 = vmatprep.subr.mxu0 0.0
    %121 = vmatpush2.msra.mxu0 0.0
    %122 = vmatprep.subr.mxu0 0.0
    %123 = vmatpush2.msra.mxu0 0.0
    %124 = vmatprep.subr.mxu0 0.0
    %125 = vmatpush2.msra.mxu0 0.0
    %126 = vmatprep.subr.mxu0 0.0
    %127 = vmatpush2.msra.mxu0 0.0
    %128 = vmatprep.mubr.f32.mxu0 0.0
    %129 = vmatmul.mubr.f32.gmra.mxu0 %v62
    %v130 = vpop.f32.mrf.mxu0
    %v131 = vadd.f32 0.0, %v130
    %v132 = vpop.f32.mrf.mxu0
    %133 = vdwg.mxu0
    %v134 = vlaneseq
    %v135 = vshrl.u32 %v134, 7
    %v136 = vadd.s32 %v135, 8
    %v137 = vlaneseq
    %v138 = vand.u32 %v137, 127
    %v139 = vmul.u32 %v135, 2
    %v140 = vmul.u32 %v136, 2
    %vm141 = vcmp.eq.s32.totalorder %v138, %v139
    %vm142 = vcmp.eq.s32.totalorder %v138, %v140
    %v143 = vsel %vm141, 1, 0
    %v144 = vsel %vm142, 1, 0
    %v145 = vcvt.s32.f32 %v143
    %v146 = vcvt.s32.f32 %v144
    %vm147 = vcmask 261120
    %v148 = vsel %vm147, %v145, 0.0
    %v149 = vsel %vm147, %v146, 0.0
    %152 = vrot.lane.b32.xlu0 %v145, 32
    %v153 = vpop.permute.xlu0 %152
    %154 = vrot.lane.b32.xlu0 %v146, 32
    %v155 = vpop.permute.xlu0 %154
    %v158 = vsel %vm147, 0.0, %v153
    %v159 = vsel %vm147, 0.0, %v155
    %s160 = scalar_lea.vmem %s2, 4
    %v161 = vld [vmem:[%s160] sm:$0xf]
    %v163 = vsel %vm60, %v161, 0
    %165 = vmatprep.subr.mxu0 0.0
    %166 = vmatpush1.msra.mxu0 0.0
    %167 = vmatprep.subr.mxu0 0.0
    %168 = vmatpush1.msra.mxu0 0.0
    %169 = vmatprep.subr.mxu0 0.0
    %170 = vmatpush1.msra.mxu0 0.0
    %171 = vmatprep.subr.mxu0 0.0
    %172 = vmatpush1.msra.mxu0 0.0
    %173 = vmatprep.subr.mxu0 0.0
    %174 = vmatpush1.msra.mxu0 0.0
    %175 = vmatprep.subr.mxu0 0.0
    %176 = vmatpush1.msra.mxu0 0.0
    %177 = vmatprep.subr.mxu0 0.0
    %178 = vmatpush1.msra.mxu0 0.0
    %179 = vmatprep.subr.mxu0 0.0
    %180 = vmatpush1.msra.mxu0 0.0
    %181 = vmatprep.subr.mxu0 0.0
    %182 = vmatpush1.msra.mxu0 0.0
    %183 = vmatprep.subr.mxu0 0.0
    %184 = vmatpush1.msra.mxu0 0.0
    %185 = vmatprep.subr.mxu0 0.0
    %186 = vmatpush1.msra.mxu0 0.0
    %187 = vmatprep.subr.mxu0 0.0
    %188 = vmatpush1.msra.mxu0 0.0
    %189 = vmatprep.subr.mxu0 0.0
    %190 = vmatpush1.msra.mxu0 0.0
    %191 = vmatprep.subr.mxu0 0.0
    %192 = vmatpush1.msra.mxu0 0.0
    %193 = vmatprep.subr.mxu0 0.0
    %194 = vmatpush1.msra.mxu0 0.0
    %195 = vmatprep.subr.mxu0 0.0
    %196 = vmatpush1.msra.mxu0 %v50
    %197 = vmatprep.subr.mxu0 0.0
    %198 = vmatpush2.msra.mxu0 0.0
    %199 = vmatprep.subr.mxu0 0.0
    %200 = vmatpush2.msra.mxu0 0.0
    %201 = vmatprep.subr.mxu0 0.0
    %202 = vmatpush2.msra.mxu0 0.0
    %203 = vmatprep.subr.mxu0 0.0
    %204 = vmatpush2.msra.mxu0 0.0
    %205 = vmatprep.subr.mxu0 0.0
    %206 = vmatpush2.msra.mxu0 0.0
    %207 = vmatprep.subr.mxu0 0.0
    %208 = vmatpush2.msra.mxu0 0.0
    %209 = vmatprep.subr.mxu0 0.0
    %210 = vmatpush2.msra.mxu0 0.0
    %211 = vmatprep.subr.mxu0 0.0
    %212 = vmatpush2.msra.mxu0 0.0
    %213 = vmatprep.subr.mxu0 0.0
    %214 = vmatpush2.msra.mxu0 0.0
    %215 = vmatprep.subr.mxu0 0.0
    %216 = vmatpush2.msra.mxu0 0.0
    %217 = vmatprep.subr.mxu0 0.0
    %218 = vmatpush2.msra.mxu0 0.0
    %219 = vmatprep.subr.mxu0 0.0
    %220 = vmatpush2.msra.mxu0 0.0
    %221 = vmatprep.subr.mxu0 0.0
    %222 = vmatpush2.msra.mxu0 0.0
    %223 = vmatprep.subr.mxu0 0.0
    %224 = vmatpush2.msra.mxu0 0.0
    %225 = vmatprep.subr.mxu0 0.0
    %226 = vmatpush2.msra.mxu0 0.0
    %227 = vmatprep.subr.mxu0 0.0
    %228 = vmatpush2.msra.mxu0 0.0
    %229 = vmatprep.mubr.f32.mxu0 0.0
    %230 = vmatmul.mubr.f32.gmra.mxu0 %v163
    %v231 = vpop.f32.mrf.mxu0
    %v232 = vadd.f32 0.0, %v231
    %v233 = vpop.f32.mrf.mxu0
    %234 = vdwg.mxu0
    %v235 = vadd.s32 %v139, 1
    %v236 = vadd.s32 %v140, 1
    %vm237 = vcmp.eq.s32.totalorder %v138, %v235
    %vm238 = vcmp.eq.s32.totalorder %v138, %v236
    %v239 = vsel %vm237, 1, 0
    %v240 = vsel %vm238, 1, 0
    %v241 = vcvt.s32.f32 %v239
    %v242 = vcvt.s32.f32 %v240
    %v243 = vsel %vm147, %v241, 0.0
    %v244 = vsel %vm147, %v242, 0.0
    %247 = vrot.lane.b32.xlu0 %v241, 32
    %v248 = vpop.permute.xlu0 %247
    %249 = vrot.lane.b32.xlu0 %v242, 32
    %v250 = vpop.permute.xlu0 %249
    %v253 = vsel %vm147, 0.0, %v248
    %v254 = vsel %vm147, 0.0, %v250
    %v256 = vsel %vm147, %v232, 0
    %258 = vmatprep.subr.mxu0 0.0
    %259 = vmatpush1.msra.mxu0 0.0
    %260 = vmatprep.subr.mxu0 0.0
    %261 = vmatpush1.msra.mxu0 0.0
    %262 = vmatprep.subr.mxu0 0.0
    %263 = vmatpush1.msra.mxu0 0.0
    %264 = vmatprep.subr.mxu0 0.0
    %265 = vmatpush1.msra.mxu0 0.0
    %266 = vmatprep.subr.mxu0 0.0
    %267 = vmatpush1.msra.mxu0 0.0
    %268 = vmatprep.subr.mxu0 0.0
    %269 = vmatpush1.msra.mxu0 0.0
    %270 = vmatprep.subr.mxu0 0.0
    %271 = vmatpush1.msra.mxu0 0.0
    %272 = vmatprep.subr.mxu0 0.0
    %273 = vmatpush1.msra.mxu0 0.0
    %274 = vmatprep.subr.mxu0 0.0
    %275 = vmatpush1.msra.mxu0 0.0
    %276 = vmatprep.subr.mxu0 0.0
    %277 = vmatpush1.msra.mxu0 0.0
    %278 = vmatprep.subr.mxu0 0.0
    %279 = vmatpush1.msra.mxu0 0.0
    %280 = vmatprep.subr.mxu0 0.0
    %281 = vmatpush1.msra.mxu0 0.0
    %282 = vmatprep.subr.mxu0 0.0
    %283 = vmatpush1.msra.mxu0 %v254
    %284 = vmatprep.subr.mxu0 0.0
    %285 = vmatpush1.msra.mxu0 %v253
    %286 = vmatprep.subr.mxu0 0.0
    %287 = vmatpush1.msra.mxu0 %v244
    %288 = vmatprep.subr.mxu0 0.0
    %289 = vmatpush1.msra.mxu0 %v243
    %290 = vmatprep.subr.mxu0 0.0
    %291 = vmatpush2.msra.mxu0 0.0
    %292 = vmatprep.subr.mxu0 0.0
    %293 = vmatpush2.msra.mxu0 0.0
    %294 = vmatprep.subr.mxu0 0.0
    %295 = vmatpush2.msra.mxu0 0.0
    %296 = vmatprep.subr.mxu0 0.0
    %297 = vmatpush2.msra.mxu0 0.0
    %298 = vmatprep.subr.mxu0 0.0
    %299 = vmatpush2.msra.mxu0 0.0
    %300 = vmatprep.subr.mxu0 0.0
    %301 = vmatpush2.msra.mxu0 0.0
    %302 = vmatprep.subr.mxu0 0.0
    %303 = vmatpush2.msra.mxu0 0.0
    %304 = vmatprep.subr.mxu0 0.0
    %305 = vmatpush2.msra.mxu0 0.0
    %306 = vmatprep.subr.mxu0 0.0
    %307 = vmatpush2.msra.mxu0 0.0
    %308 = vmatprep.subr.mxu0 0.0
    %309 = vmatpush2.msra.mxu0 0.0
    %310 = vmatprep.subr.mxu0 0.0
    %311 = vmatpush2.msra.mxu0 0.0
    %312 = vmatprep.subr.mxu0 0.0
    %313 = vmatpush2.msra.mxu0 0.0
    %314 = vmatprep.subr.mxu0 0.0
    %315 = vmatpush2.msra.mxu0 0.0
    %316 = vmatprep.subr.mxu0 0.0
    %317 = vmatpush2.msra.mxu0 0.0
    %318 = vmatprep.subr.mxu0 0.0
    %319 = vmatpush2.msra.mxu0 0.0
    %320 = vmatprep.subr.mxu0 0.0
    %321 = vmatpush2.msra.mxu0 0.0
    %322 = vmatprep.mubr.f32.mxu0 0.0
    %323 = vmatmul.mubr.f32.gmra.mxu0 %v256
    %v324 = vpop.f32.mrf.mxu0
    %v325 = vadd.f32 0.0, %v324
    %v326 = vpop.f32.mrf.mxu0
    %327 = vdwg.mxu0
    %v329 = vsel %vm147, %v131, 0
    %331 = vmatprep.subr.mxu0 0.0
    %332 = vmatpush1.msra.mxu0 0.0
    %333 = vmatprep.subr.mxu0 0.0
    %334 = vmatpush1.msra.mxu0 0.0
    %335 = vmatprep.subr.mxu0 0.0
    %336 = vmatpush1.msra.mxu0 0.0
    %337 = vmatprep.subr.mxu0 0.0
    %338 = vmatpush1.msra.mxu0 0.0
    %339 = vmatprep.subr.mxu0 0.0
    %340 = vmatpush1.msra.mxu0 0.0
    %341 = vmatprep.subr.mxu0 0.0
    %342 = vmatpush1.msra.mxu0 0.0
    %343 = vmatprep.subr.mxu0 0.0
    %344 = vmatpush1.msra.mxu0 0.0
    %345 = vmatprep.subr.mxu0 0.0
    %346 = vmatpush1.msra.mxu0 0.0
    %347 = vmatprep.subr.mxu0 0.0
    %348 = vmatpush1.msra.mxu0 0.0
    %349 = vmatprep.subr.mxu0 0.0
    %350 = vmatpush1.msra.mxu0 0.0
    %351 = vmatprep.subr.mxu0 0.0
    %352 = vmatpush1.msra.mxu0 0.0
    %353 = vmatprep.subr.mxu0 0.0
    %354 = vmatpush1.msra.mxu0 0.0
    %355 = vmatprep.subr.mxu0 0.0
    %356 = vmatpush1.msra.mxu0 %v159
    %357 = vmatprep.subr.mxu0 0.0
    %358 = vmatpush1.msra.mxu0 %v158
    %359 = vmatprep.subr.mxu0 0.0
    %360 = vmatpush1.msra.mxu0 %v149
    %361 = vmatprep.subr.mxu0 0.0
    %362 = vmatpush1.msra.mxu0 %v148
    %363 = vmatprep.subr.mxu0 0.0
    %364 = vmatpush2.msra.mxu0 0.0
    %365 = vmatprep.subr.mxu0 0.0
    %366 = vmatpush2.msra.mxu0 0.0
    %367 = vmatprep.subr.mxu0 0.0
    %368 = vmatpush2.msra.mxu0 0.0
    %369 = vmatprep.subr.mxu0 0.0
    %370 = vmatpush2.msra.mxu0 0.0
    %371 = vmatprep.subr.mxu0 0.0
    %372 = vmatpush2.msra.mxu0 0.0
    %373 = vmatprep.subr.mxu0 0.0
    %374 = vmatpush2.msra.mxu0 0.0
    %375 = vmatprep.subr.mxu0 0.0
    %376 = vmatpush2.msra.mxu0 0.0
    %377 = vmatprep.subr.mxu0 0.0
    %378 = vmatpush2.msra.mxu0 0.0
    %379 = vmatprep.subr.mxu0 0.0
    %380 = vmatpush2.msra.mxu0 0.0
    %381 = vmatprep.subr.mxu0 0.0
    %382 = vmatpush2.msra.mxu0 0.0
    %383 = vmatprep.subr.mxu0 0.0
    %384 = vmatpush2.msra.mxu0 0.0
    %385 = vmatprep.subr.mxu0 0.0
    %386 = vmatpush2.msra.mxu0 0.0
    %387 = vmatprep.subr.mxu0 0.0
    %388 = vmatpush2.msra.mxu0 0.0
    %389 = vmatprep.subr.mxu0 0.0
    %390 = vmatpush2.msra.mxu0 0.0
    %391 = vmatprep.subr.mxu0 0.0
    %392 = vmatpush2.msra.mxu0 0.0
    %393 = vmatprep.subr.mxu0 0.0
    %394 = vmatpush2.msra.mxu0 0.0
    %395 = vmatprep.mubr.f32.mxu0 0.0
    %396 = vmatmul.mubr.f32.gmra.mxu0 %v329
    %v397 = vpop.f32.mrf.mxu0
    %v398 = vadd.f32 %v325, %v397
    %v399 = vpop.f32.mrf.mxu0
    %400 = vdwg.mxu0
    %v401 = vld [vmem:[%s3] sm:$0xf]
    %403 = vset.pattern.permute.xlu0 0
    %404 = vperm.xlu0 %403, %v401
    %v405 = vpop.permute.xlu0 %404
    %v407 = vadd.f32 %v398, %v405
    %v408 = vld [vmem:[%s4] sm:$0xf]
    %vm409 = vcmask 31744
    %v411 = vsel %vm409, %v408, 0
    %vm413 = vcmask 1043456
    %v415 = vsel %vm413, %v58, 0
    %417 = vmatprep.subr.mxu0 0.0
    %418 = vmatpush1.msra.mxu0 0.0
    %419 = vmatprep.subr.mxu0 0.0
    %420 = vmatpush1.msra.mxu0 0.0
    %421 = vmatprep.subr.mxu0 0.0
    %422 = vmatpush1.msra.mxu0 0.0
    %423 = vmatprep.subr.mxu0 0.0
    %424 = vmatpush1.msra.mxu0 0.0
    %425 = vmatprep.subr.mxu0 0.0
    %426 = vmatpush1.msra.mxu0 0.0
    %427 = vmatprep.subr.mxu0 0.0
    %428 = vmatpush1.msra.mxu0 0.0
    %429 = vmatprep.subr.mxu0 0.0
    %430 = vmatpush1.msra.mxu0 0.0
    %431 = vmatprep.subr.mxu0 0.0
    %432 = vmatpush1.msra.mxu0 0.0
    %433 = vmatprep.subr.mxu0 0.0
    %434 = vmatpush1.msra.mxu0 0.0
    %435 = vmatprep.subr.mxu0 0.0
    %436 = vmatpush1.msra.mxu0 0.0
    %437 = vmatprep.subr.mxu0 0.0
    %438 = vmatpush1.msra.mxu0 0.0
    %439 = vmatprep.subr.mxu0 0.0
    %440 = vmatpush1.msra.mxu0 0.0
    %441 = vmatprep.subr.mxu0 0.0
    %442 = vmatpush1.msra.mxu0 0.0
    %443 = vmatprep.subr.mxu0 0.0
    %444 = vmatpush1.msra.mxu0 0.0
    %445 = vmatprep.subr.mxu0 0.0
    %446 = vmatpush1.msra.mxu0 0.0
    %447 = vmatprep.subr.mxu0 0.0
    %448 = vmatpush1.msra.mxu0 %v415
    %449 = vmatprep.subr.mxu0 0.0
    %450 = vmatpush2.msra.mxu0 0.0
    %451 = vmatprep.subr.mxu0 0.0
    %452 = vmatpush2.msra.mxu0 0.0
    %453 = vmatprep.subr.mxu0 0.0
    %454 = vmatpush2.msra.mxu0 0.0
    %455 = vmatprep.subr.mxu0 0.0
    %456 = vmatpush2.msra.mxu0 0.0
    %457 = vmatprep.subr.mxu0 0.0
    %458 = vmatpush2.msra.mxu0 0.0
    %459 = vmatprep.subr.mxu0 0.0
    %460 = vmatpush2.msra.mxu0 0.0
    %461 = vmatprep.subr.mxu0 0.0
    %462 = vmatpush2.msra.mxu0 0.0
    %463 = vmatprep.subr.mxu0 0.0
    %464 = vmatpush2.msra.mxu0 0.0
    %465 = vmatprep.subr.mxu0 0.0
    %466 = vmatpush2.msra.mxu0 0.0
    %467 = vmatprep.subr.mxu0 0.0
    %468 = vmatpush2.msra.mxu0 0.0
    %469 = vmatprep.subr.mxu0 0.0
    %470 = vmatpush2.msra.mxu0 0.0
    %471 = vmatprep.subr.mxu0 0.0
    %472 = vmatpush2.msra.mxu0 0.0
    %473 = vmatprep.subr.mxu0 0.0
    %474 = vmatpush2.msra.mxu0 0.0
    %475 = vmatprep.subr.mxu0 0.0
    %476 = vmatpush2.msra.mxu0 0.0
    %477 = vmatprep.subr.mxu0 0.0
    %478 = vmatpush2.msra.mxu0 0.0
    %479 = vmatprep.subr.mxu0 0.0
    %480 = vmatpush2.msra.mxu0 0.0
    %481 = vmatprep.mubr.f32.mxu0 0.0
    %482 = vmatmul.mubr.f32.gmra.mxu0 %v411
    %v483 = vpop.f32.mrf.mxu0
    %v484 = vadd.f32 0.0, %v483
    %v485 = vpop.f32.mrf.mxu0
    %486 = vdwg.mxu0
    %s487 = scalar_lea.vmem %s4, 4
    %v488 = vld [vmem:[%s487] sm:$0xf]
    %v490 = vsel %vm409, %v488, 0
    %492 = vmatprep.subr.mxu0 0.0
    %493 = vmatpush1.msra.mxu0 0.0
    %494 = vmatprep.subr.mxu0 0.0
    %495 = vmatpush1.msra.mxu0 0.0
    %496 = vmatprep.subr.mxu0 0.0
    %497 = vmatpush1.msra.mxu0 0.0
    %498 = vmatprep.subr.mxu0 0.0
    %499 = vmatpush1.msra.mxu0 0.0
    %500 = vmatprep.subr.mxu0 0.0
    %501 = vmatpush1.msra.mxu0 0.0
    %502 = vmatprep.subr.mxu0 0.0
    %503 = vmatpush1.msra.mxu0 0.0
    %504 = vmatprep.subr.mxu0 0.0
    %505 = vmatpush1.msra.mxu0 0.0
    %506 = vmatprep.subr.mxu0 0.0
    %507 = vmatpush1.msra.mxu0 0.0
    %508 = vmatprep.subr.mxu0 0.0
    %509 = vmatpush1.msra.mxu0 0.0
    %510 = vmatprep.subr.mxu0 0.0
    %511 = vmatpush1.msra.mxu0 0.0
    %512 = vmatprep.subr.mxu0 0.0
    %513 = vmatpush1.msra.mxu0 0.0
    %514 = vmatprep.subr.mxu0 0.0
    %515 = vmatpush1.msra.mxu0 0.0
    %516 = vmatprep.subr.mxu0 0.0
    %517 = vmatpush1.msra.mxu0 0.0
    %518 = vmatprep.subr.mxu0 0.0
    %519 = vmatpush1.msra.mxu0 0.0
    %520 = vmatprep.subr.mxu0 0.0
    %521 = vmatpush1.msra.mxu0 0.0
    %522 = vmatprep.subr.mxu0 0.0
    %523 = vmatpush1.msra.mxu0 %v415
    %524 = vmatprep.subr.mxu0 0.0
    %525 = vmatpush2.msra.mxu0 0.0
    %526 = vmatprep.subr.mxu0 0.0
    %527 = vmatpush2.msra.mxu0 0.0
    %528 = vmatprep.subr.mxu0 0.0
    %529 = vmatpush2.msra.mxu0 0.0
    %530 = vmatprep.subr.mxu0 0.0
    %531 = vmatpush2.msra.mxu0 0.0
    %532 = vmatprep.subr.mxu0 0.0
    %533 = vmatpush2.msra.mxu0 0.0
    %534 = vmatprep.subr.mxu0 0.0
    %535 = vmatpush2.msra.mxu0 0.0
    %536 = vmatprep.subr.mxu0 0.0
    %537 = vmatpush2.msra.mxu0 0.0
    %538 = vmatprep.subr.mxu0 0.0
    %539 = vmatpush2.msra.mxu0 0.0
    %540 = vmatprep.subr.mxu0 0.0
    %541 = vmatpush2.msra.mxu0 0.0
    %542 = vmatprep.subr.mxu0 0.0
    %543 = vmatpush2.msra.mxu0 0.0
    %544 = vmatprep.subr.mxu0 0.0
    %545 = vmatpush2.msra.mxu0 0.0
    %546 = vmatprep.subr.mxu0 0.0
    %547 = vmatpush2.msra.mxu0 0.0
    %548 = vmatprep.subr.mxu0 0.0
    %549 = vmatpush2.msra.mxu0 0.0
    %550 = vmatprep.subr.mxu0 0.0
    %551 = vmatpush2.msra.mxu0 0.0
    %552 = vmatprep.subr.mxu0 0.0
    %553 = vmatpush2.msra.mxu0 0.0
    %554 = vmatprep.subr.mxu0 0.0
    %555 = vmatpush2.msra.mxu0 0.0
    %556 = vmatprep.mubr.f32.mxu0 0.0
    %557 = vmatmul.mubr.f32.gmra.mxu0 %v490
    %v558 = vpop.f32.mrf.mxu0
    %v559 = vadd.f32 0.0, %v558
    %v560 = vpop.f32.mrf.mxu0
    %561 = vdwg.mxu0
    %v563 = vsel %vm147, %v559, 0
    %565 = vmatprep.subr.mxu0 0.0
    %566 = vmatpush1.msra.mxu0 0.0
    %567 = vmatprep.subr.mxu0 0.0
    %568 = vmatpush1.msra.mxu0 0.0
    %569 = vmatprep.subr.mxu0 0.0
    %570 = vmatpush1.msra.mxu0 0.0
    %571 = vmatprep.subr.mxu0 0.0
    %572 = vmatpush1.msra.mxu0 0.0
    %573 = vmatprep.subr.mxu0 0.0
    %574 = vmatpush1.msra.mxu0 0.0
    %575 = vmatprep.subr.mxu0 0.0
    %576 = vmatpush1.msra.mxu0 0.0
    %577 = vmatprep.subr.mxu0 0.0
    %578 = vmatpush1.msra.mxu0 0.0
    %579 = vmatprep.subr.mxu0 0.0
    %580 = vmatpush1.msra.mxu0 0.0
    %581 = vmatprep.subr.mxu0 0.0
    %582 = vmatpush1.msra.mxu0 0.0
    %583 = vmatprep.subr.mxu0 0.0
    %584 = vmatpush1.msra.mxu0 0.0
    %585 = vmatprep.subr.mxu0 0.0
    %586 = vmatpush1.msra.mxu0 0.0
    %587 = vmatprep.subr.mxu0 0.0
    %588 = vmatpush1.msra.mxu0 0.0
    %589 = vmatprep.subr.mxu0 0.0
    %590 = vmatpush1.msra.mxu0 %v254
    %591 = vmatprep.subr.mxu0 0.0
    %592 = vmatpush1.msra.mxu0 %v253
    %593 = vmatprep.subr.mxu0 0.0
    %594 = vmatpush1.msra.mxu0 %v244
    %595 = vmatprep.subr.mxu0 0.0
    %596 = vmatpush1.msra.mxu0 %v243
    %597 = vmatprep.subr.mxu0 0.0
    %598 = vmatpush2.msra.mxu0 0.0
    %599 = vmatprep.subr.mxu0 0.0
    %600 = vmatpush2.msra.mxu0 0.0
    %601 = vmatprep.subr.mxu0 0.0
    %602 = vmatpush2.msra.mxu0 0.0
    %603 = vmatprep.subr.mxu0 0.0
    %604 = vmatpush2.msra.mxu0 0.0
    %605 = vmatprep.subr.mxu0 0.0
    %606 = vmatpush2.msra.mxu0 0.0
    %607 = vmatprep.subr.mxu0 0.0
    %608 = vmatpush2.msra.mxu0 0.0
    %609 = vmatprep.subr.mxu0 0.0
    %610 = vmatpush2.msra.mxu0 0.0
    %611 = vmatprep.subr.mxu0 0.0
    %612 = vmatpush2.msra.mxu0 0.0
    %613 = vmatprep.subr.mxu0 0.0
    %614 = vmatpush2.msra.mxu0 0.0
    %615 = vmatprep.subr.mxu0 0.0
    %616 = vmatpush2.msra.mxu0 0.0
    %617 = vmatprep.subr.mxu0 0.0
    %618 = vmatpush2.msra.mxu0 0.0
    %619 = vmatprep.subr.mxu0 0.0
    %620 = vmatpush2.msra.mxu0 0.0
    %621 = vmatprep.subr.mxu0 0.0
    %622 = vmatpush2.msra.mxu0 0.0
    %623 = vmatprep.subr.mxu0 0.0
    %624 = vmatpush2.msra.mxu0 0.0
    %625 = vmatprep.subr.mxu0 0.0
    %626 = vmatpush2.msra.mxu0 0.0
    %627 = vmatprep.subr.mxu0 0.0
    %628 = vmatpush2.msra.mxu0 0.0
    %629 = vmatprep.mubr.f32.mxu0 0.0
    %630 = vmatmul.mubr.f32.gmra.mxu0 %v563
    %v631 = vpop.f32.mrf.mxu0
    %v632 = vadd.f32 0.0, %v631
    %v633 = vpop.f32.mrf.mxu0
    %634 = vdwg.mxu0
    %v636 = vsel %vm147, %v484, 0
    %638 = vmatprep.subr.mxu0 0.0
    %639 = vmatpush1.msra.mxu0 0.0
    %640 = vmatprep.subr.mxu0 0.0
    %641 = vmatpush1.msra.mxu0 0.0
    %642 = vmatprep.subr.mxu0 0.0
    %643 = vmatpush1.msra.mxu0 0.0
    %644 = vmatprep.subr.mxu0 0.0
    %645 = vmatpush1.msra.mxu0 0.0
    %646 = vmatprep.subr.mxu0 0.0
    %647 = vmatpush1.msra.mxu0 0.0
    %648 = vmatprep.subr.mxu0 0.0
    %649 = vmatpush1.msra.mxu0 0.0
    %650 = vmatprep.subr.mxu0 0.0
    %651 = vmatpush1.msra.mxu0 0.0
    %652 = vmatprep.subr.mxu0 0.0
    %653 = vmatpush1.msra.mxu0 0.0
    %654 = vmatprep.subr.mxu0 0.0
    %655 = vmatpush1.msra.mxu0 0.0
    %656 = vmatprep.subr.mxu0 0.0
    %657 = vmatpush1.msra.mxu0 0.0
    %658 = vmatprep.subr.mxu0 0.0
    %659 = vmatpush1.msra.mxu0 0.0
    %660 = vmatprep.subr.mxu0 0.0
    %661 = vmatpush1.msra.mxu0 0.0
    %662 = vmatprep.subr.mxu0 0.0
    %663 = vmatpush1.msra.mxu0 %v159
    %664 = vmatprep.subr.mxu0 0.0
    %665 = vmatpush1.msra.mxu0 %v158
    %666 = vmatprep.subr.mxu0 0.0
    %667 = vmatpush1.msra.mxu0 %v149
    %668 = vmatprep.subr.mxu0 0.0
    %669 = vmatpush1.msra.mxu0 %v148
    %670 = vmatprep.subr.mxu0 0.0
    %671 = vmatpush2.msra.mxu0 0.0
    %672 = vmatprep.subr.mxu0 0.0
    %673 = vmatpush2.msra.mxu0 0.0
    %674 = vmatprep.subr.mxu0 0.0
    %675 = vmatpush2.msra.mxu0 0.0
    %676 = vmatprep.subr.mxu0 0.0
    %677 = vmatpush2.msra.mxu0 0.0
    %678 = vmatprep.subr.mxu0 0.0
    %679 = vmatpush2.msra.mxu0 0.0
    %680 = vmatprep.subr.mxu0 0.0
    %681 = vmatpush2.msra.mxu0 0.0
    %682 = vmatprep.subr.mxu0 0.0
    %683 = vmatpush2.msra.mxu0 0.0
    %684 = vmatprep.subr.mxu0 0.0
    %685 = vmatpush2.msra.mxu0 0.0
    %686 = vmatprep.subr.mxu0 0.0
    %687 = vmatpush2.msra.mxu0 0.0
    %688 = vmatprep.subr.mxu0 0.0
    %689 = vmatpush2.msra.mxu0 0.0
    %690 = vmatprep.subr.mxu0 0.0
    %691 = vmatpush2.msra.mxu0 0.0
    %692 = vmatprep.subr.mxu0 0.0
    %693 = vmatpush2.msra.mxu0 0.0
    %694 = vmatprep.subr.mxu0 0.0
    %695 = vmatpush2.msra.mxu0 0.0
    %696 = vmatprep.subr.mxu0 0.0
    %697 = vmatpush2.msra.mxu0 0.0
    %698 = vmatprep.subr.mxu0 0.0
    %699 = vmatpush2.msra.mxu0 0.0
    %700 = vmatprep.subr.mxu0 0.0
    %701 = vmatpush2.msra.mxu0 0.0
    %702 = vmatprep.mubr.f32.mxu0 0.0
    %703 = vmatmul.mubr.f32.gmra.mxu0 %v636
    %v704 = vpop.f32.mrf.mxu0
    %v705 = vadd.f32 %v632, %v704
    %v706 = vpop.f32.mrf.mxu0
    %707 = vdwg.mxu0
    %v708 = vld [vmem:[%s5] sm:$0xf]
    %710 = vset.pattern.permute.xlu0 0
    %711 = vperm.xlu0 %710, %v708
    %v712 = vpop.permute.xlu0 %711
    %v714 = vadd.f32 %v705, %v712
    %v716 = vrot.slane %v407, 4
    %v718 = vsel %vm413, %v714, %v716
    %v719 = vadd.s32 %v135, 16
    %v720 = vadd.s32 %v135, 24
    %v721 = vadd.s32 %v138, 4294967292
    %vm722 = vcmp.eq.s32.totalorder %v135, %v721
    %vm723 = vcmp.eq.s32.totalorder %v136, %v721
    %vm724 = vcmp.eq.s32.totalorder %v719, %v721
    %vm725 = vcmp.eq.s32.totalorder %v720, %v721
    %v726 = vsel %vm722, 1, 0
    %v727 = vsel %vm723, 1, 0
    %v728 = vsel %vm724, 1, 0
    %v729 = vsel %vm725, 1, 0
    %v730 = vcvt.s32.f32 %v726
    %v731 = vcvt.s32.f32 %v727
    %v732 = vcvt.s32.f32 %v728
    %v733 = vcvt.s32.f32 %v729
    %v734 = vsel %vm147, %v730, 0.0
    %v735 = vsel %vm147, %v731, 0.0
    %v736 = vsel %vm147, %v732, 0.0
    %v737 = vsel %vm147, %v733, 0.0
    %742 = vrot.lane.b32.xlu0 %v730, 32
    %v743 = vpop.permute.xlu0 %742
    %744 = vrot.lane.b32.xlu0 %v731, 32
    %v745 = vpop.permute.xlu0 %744
    %746 = vrot.lane.b32.xlu0 %v732, 32
    %v747 = vpop.permute.xlu0 %746
    %748 = vrot.lane.b32.xlu0 %v733, 32
    %v749 = vpop.permute.xlu0 %748
    %v754 = vsel %vm147, 0.0, %v743
    %v755 = vsel %vm147, 0.0, %v745
    %v756 = vsel %vm147, 0.0, %v747
    %v757 = vsel %vm147, 0.0, %v749
    %vm758 = vcmask 523264
    %v760 = vsel %vm758, %v718, 0
    %762 = vmatprep.subr.mxu0 0.0
    %763 = vmatpush1.msra.mxu0 0.0
    %764 = vmatprep.subr.mxu0 0.0
    %765 = vmatpush1.msra.mxu0 0.0
    %766 = vmatprep.subr.mxu0 0.0
    %767 = vmatpush1.msra.mxu0 0.0
    %768 = vmatprep.subr.mxu0 0.0
    %769 = vmatpush1.msra.mxu0 0.0
    %770 = vmatprep.subr.mxu0 0.0
    %771 = vmatpush1.msra.mxu0 0.0
    %772 = vmatprep.subr.mxu0 0.0
    %773 = vmatpush1.msra.mxu0 0.0
    %774 = vmatprep.subr.mxu0 0.0
    %775 = vmatpush1.msra.mxu0 0.0
    %776 = vmatprep.subr.mxu0 0.0
    %777 = vmatpush1.msra.mxu0 0.0
    %778 = vmatprep.subr.mxu0 0.0
    %779 = vmatpush1.msra.mxu0 %v757
    %780 = vmatprep.subr.mxu0 0.0
    %781 = vmatpush1.msra.mxu0 %v756
    %782 = vmatprep.subr.mxu0 0.0
    %783 = vmatpush1.msra.mxu0 %v755
    %784 = vmatprep.subr.mxu0 0.0
    %785 = vmatpush1.msra.mxu0 %v754
    %786 = vmatprep.subr.mxu0 0.0
    %787 = vmatpush1.msra.mxu0 %v737
    %788 = vmatprep.subr.mxu0 0.0
    %789 = vmatpush1.msra.mxu0 %v736
    %790 = vmatprep.subr.mxu0 0.0
    %791 = vmatpush1.msra.mxu0 %v735
    %792 = vmatprep.subr.mxu0 0.0
    %793 = vmatpush1.msra.mxu0 %v734
    %794 = vmatprep.subr.mxu0 0.0
    %795 = vmatpush2.msra.mxu0 0.0
    %796 = vmatprep.subr.mxu0 0.0
    %797 = vmatpush2.msra.mxu0 0.0
    %798 = vmatprep.subr.mxu0 0.0
    %799 = vmatpush2.msra.mxu0 0.0
    %800 = vmatprep.subr.mxu0 0.0
    %801 = vmatpush2.msra.mxu0 0.0
    %802 = vmatprep.subr.mxu0 0.0
    %803 = vmatpush2.msra.mxu0 0.0
    %804 = vmatprep.subr.mxu0 0.0
    %805 = vmatpush2.msra.mxu0 0.0
    %806 = vmatprep.subr.mxu0 0.0
    %807 = vmatpush2.msra.mxu0 0.0
    %808 = vmatprep.subr.mxu0 0.0
    %809 = vmatpush2.msra.mxu0 0.0
    %810 = vmatprep.subr.mxu0 0.0
    %811 = vmatpush2.msra.mxu0 0.0
    %812 = vmatprep.subr.mxu0 0.0
    %813 = vmatpush2.msra.mxu0 0.0
    %814 = vmatprep.subr.mxu0 0.0
    %815 = vmatpush2.msra.mxu0 0.0
    %816 = vmatprep.subr.mxu0 0.0
    %817 = vmatpush2.msra.mxu0 0.0
    %818 = vmatprep.subr.mxu0 0.0
    %819 = vmatpush2.msra.mxu0 0.0
    %820 = vmatprep.subr.mxu0 0.0
    %821 = vmatpush2.msra.mxu0 0.0
    %822 = vmatprep.subr.mxu0 0.0
    %823 = vmatpush2.msra.mxu0 0.0
    %824 = vmatprep.subr.mxu0 0.0
    %825 = vmatpush2.msra.mxu0 0.0
    %826 = vmatprep.mubr.f32.mxu0 0.0
    %827 = vmatmul.mubr.f32.gmra.mxu0 %v760
    %v828 = vpop.f32.mrf.mxu0
    %v829 = vadd.f32 0.0, %v828
    %v830 = vpop.f32.mrf.mxu0
    %831 = vdwg.mxu0
    %v832 = vld [vmem:[%s6] sm:$0xf]
    %v833 = vadd.s32 %v138, 4294967293
    %vm834 = vcmp.eq.s32.totalorder %v135, %v833
    %vm835 = vcmp.eq.s32.totalorder %v136, %v833
    %vm836 = vcmp.eq.s32.totalorder %v719, %v833
    %vm837 = vcmp.eq.s32.totalorder %v720, %v833
    %v838 = vsel %vm834, 1, 0
    %v839 = vsel %vm835, 1, 0
    %v840 = vsel %vm836, 1, 0
    %v841 = vsel %vm837, 1, 0
    %v842 = vcvt.s32.f32 %v838
    %v843 = vcvt.s32.f32 %v839
    %v844 = vcvt.s32.f32 %v840
    %v845 = vcvt.s32.f32 %v841
    %v846 = vsel %vm147, %v842, 0.0
    %v847 = vsel %vm147, %v843, 0.0
    %v848 = vsel %vm147, %v844, 0.0
    %v849 = vsel %vm147, %v845, 0.0
    %854 = vrot.lane.b32.xlu0 %v842, 32
    %v855 = vpop.permute.xlu0 %854
    %856 = vrot.lane.b32.xlu0 %v843, 32
    %v857 = vpop.permute.xlu0 %856
    %858 = vrot.lane.b32.xlu0 %v844, 32
    %v859 = vpop.permute.xlu0 %858
    %860 = vrot.lane.b32.xlu0 %v845, 32
    %v861 = vpop.permute.xlu0 %860
    %v866 = vsel %vm147, 0.0, %v855
    %v867 = vsel %vm147, 0.0, %v857
    %v868 = vsel %vm147, 0.0, %v859
    %v869 = vsel %vm147, 0.0, %v861
    %870 = vmatprep.subr.mxu0 0.0
    %871 = vmatpush1.msra.mxu0 0.0
    %872 = vmatprep.subr.mxu0 0.0
    %873 = vmatpush1.msra.mxu0 0.0
    %874 = vmatprep.subr.mxu0 0.0
    %875 = vmatpush1.msra.mxu0 0.0
    %876 = vmatprep.subr.mxu0 0.0
    %877 = vmatpush1.msra.mxu0 0.0
    %878 = vmatprep.subr.mxu0 0.0
    %879 = vmatpush1.msra.mxu0 0.0
    %880 = vmatprep.subr.mxu0 0.0
    %881 = vmatpush1.msra.mxu0 0.0
    %882 = vmatprep.subr.mxu0 0.0
    %883 = vmatpush1.msra.mxu0 0.0
    %884 = vmatprep.subr.mxu0 0.0
    %885 = vmatpush1.msra.mxu0 0.0
    %886 = vmatprep.subr.mxu0 0.0
    %887 = vmatpush1.msra.mxu0 %v869
    %888 = vmatprep.subr.mxu0 0.0
    %889 = vmatpush1.msra.mxu0 %v868
    %890 = vmatprep.subr.mxu0 0.0
    %891 = vmatpush1.msra.mxu0 %v867
    %892 = vmatprep.subr.mxu0 0.0
    %893 = vmatpush1.msra.mxu0 %v866
    %894 = vmatprep.subr.mxu0 0.0
    %895 = vmatpush1.msra.mxu0 %v849
    %896 = vmatprep.subr.mxu0 0.0
    %897 = vmatpush1.msra.mxu0 %v848
    %898 = vmatprep.subr.mxu0 0.0
    %899 = vmatpush1.msra.mxu0 %v847
    %900 = vmatprep.subr.mxu0 0.0
    %901 = vmatpush1.msra.mxu0 %v846
    %902 = vmatprep.subr.mxu0 0.0
    %903 = vmatpush2.msra.mxu0 0.0
    %904 = vmatprep.subr.mxu0 0.0
    %905 = vmatpush2.msra.mxu0 0.0
    %906 = vmatprep.subr.mxu0 0.0
    %907 = vmatpush2.msra.mxu0 0.0
    %908 = vmatprep.subr.mxu0 0.0
    %909 = vmatpush2.msra.mxu0 0.0
    %910 = vmatprep.subr.mxu0 0.0
    %911 = vmatpush2.msra.mxu0 0.0
    %912 = vmatprep.subr.mxu0 0.0
    %913 = vmatpush2.msra.mxu0 0.0
    %914 = vmatprep.subr.mxu0 0.0
    %915 = vmatpush2.msra.mxu0 0.0
    %916 = vmatprep.subr.mxu0 0.0
    %917 = vmatpush2.msra.mxu0 0.0
    %918 = vmatprep.subr.mxu0 0.0
    %919 = vmatpush2.msra.mxu0 0.0
    %920 = vmatprep.subr.mxu0 0.0
    %921 = vmatpush2.msra.mxu0 0.0
    %922 = vmatprep.subr.mxu0 0.0
    %923 = vmatpush2.msra.mxu0 0.0
    %924 = vmatprep.subr.mxu0 0.0
    %925 = vmatpush2.msra.mxu0 0.0
    %926 = vmatprep.subr.mxu0 0.0
    %927 = vmatpush2.msra.mxu0 0.0
    %928 = vmatprep.subr.mxu0 0.0
    %929 = vmatpush2.msra.mxu0 0.0
    %930 = vmatprep.subr.mxu0 0.0
    %931 = vmatpush2.msra.mxu0 0.0
    %932 = vmatprep.subr.mxu0 0.0
    %933 = vmatpush2.msra.mxu0 0.0
    %934 = vmatprep.mubr.f32.mxu0 0.0
    %935 = vmatmul.mubr.f32.gmra.mxu0 %v760
    %v936 = vpop.f32.mrf.mxu0
    %v937 = vadd.f32 0.0, %v936
    %v938 = vpop.f32.mrf.mxu0
    %939 = vdwg.mxu0
    %s940 = scalar_lea.vmem %s6, 4
    %v941 = vld [vmem:[%s940] sm:$0xf]
    %v943 = vsel %vm60, %v941, 0
    %945 = vmatprep.subr.mxu0 0.0
    %946 = vmatpush1.msra.mxu0 0.0
    %947 = vmatprep.subr.mxu0 0.0
    %948 = vmatpush1.msra.mxu0 0.0
    %949 = vmatprep.subr.mxu0 0.0
    %950 = vmatpush1.msra.mxu0 0.0
    %951 = vmatprep.subr.mxu0 0.0
    %952 = vmatpush1.msra.mxu0 0.0
    %953 = vmatprep.subr.mxu0 0.0
    %954 = vmatpush1.msra.mxu0 0.0
    %955 = vmatprep.subr.mxu0 0.0
    %956 = vmatpush1.msra.mxu0 0.0
    %957 = vmatprep.subr.mxu0 0.0
    %958 = vmatpush1.msra.mxu0 0.0
    %959 = vmatprep.subr.mxu0 0.0
    %960 = vmatpush1.msra.mxu0 0.0
    %961 = vmatprep.subr.mxu0 0.0
    %962 = vmatpush1.msra.mxu0 0.0
    %963 = vmatprep.subr.mxu0 0.0
    %964 = vmatpush1.msra.mxu0 0.0
    %965 = vmatprep.subr.mxu0 0.0
    %966 = vmatpush1.msra.mxu0 0.0
    %967 = vmatprep.subr.mxu0 0.0
    %968 = vmatpush1.msra.mxu0 0.0
    %969 = vmatprep.subr.mxu0 0.0
    %970 = vmatpush1.msra.mxu0 0.0
    %971 = vmatprep.subr.mxu0 0.0
    %972 = vmatpush1.msra.mxu0 0.0
    %973 = vmatprep.subr.mxu0 0.0
    %974 = vmatpush1.msra.mxu0 0.0
    %975 = vmatprep.subr.mxu0 0.0
    %976 = vmatpush1.msra.mxu0 %v937
    %977 = vmatprep.subr.mxu0 0.0
    %978 = vmatpush2.msra.mxu0 0.0
    %979 = vmatprep.subr.mxu0 0.0
    %980 = vmatpush2.msra.mxu0 0.0
    %981 = vmatprep.subr.mxu0 0.0
    %982 = vmatpush2.msra.mxu0 0.0
    %983 = vmatprep.subr.mxu0 0.0
    %984 = vmatpush2.msra.mxu0 0.0
    %985 = vmatprep.subr.mxu0 0.0
    %986 = vmatpush2.msra.mxu0 0.0
    %987 = vmatprep.subr.mxu0 0.0
    %988 = vmatpush2.msra.mxu0 0.0
    %989 = vmatprep.subr.mxu0 0.0
    %990 = vmatpush2.msra.mxu0 0.0
    %991 = vmatprep.subr.mxu0 0.0
    %992 = vmatpush2.msra.mxu0 0.0
    %993 = vmatprep.subr.mxu0 0.0
    %994 = vmatpush2.msra.mxu0 0.0
    %995 = vmatprep.subr.mxu0 0.0
    %996 = vmatpush2.msra.mxu0 0.0
    %997 = vmatprep.subr.mxu0 0.0
    %998 = vmatpush2.msra.mxu0 0.0
    %999 = vmatprep.subr.mxu0 0.0
    %1000 = vmatpush2.msra.mxu0 0.0
    %1001 = vmatprep.subr.mxu0 0.0
    %1002 = vmatpush2.msra.mxu0 0.0
    %1003 = vmatprep.subr.mxu0 0.0
    %1004 = vmatpush2.msra.mxu0 0.0
    %1005 = vmatprep.subr.mxu0 0.0
    %1006 = vmatpush2.msra.mxu0 0.0
    %1007 = vmatprep.subr.mxu0 0.0
    %1008 = vmatpush2.msra.mxu0 0.0
    %1009 = vmatprep.mubr.f32.mxu0 0.0
    %1010 = vmatmul.mubr.f32.gmra.mxu0 %v943
    %v1011 = vpop.f32.mrf.mxu0
    %v1012 = vadd.f32 0.0, %v1011
    %v1013 = vpop.f32.mrf.mxu0
    %1014 = vdwg.mxu0
    %v1016 = vsel %vm60, %v832, 0
    %1018 = vmatprep.subr.mxu0 0.0
    %1019 = vmatpush1.msra.mxu0 0.0
    %1020 = vmatprep.subr.mxu0 0.0
    %1021 = vmatpush1.msra.mxu0 0.0
    %1022 = vmatprep.subr.mxu0 0.0
    %1023 = vmatpush1.msra.mxu0 0.0
    %1024 = vmatprep.subr.mxu0 0.0
    %1025 = vmatpush1.msra.mxu0 0.0
    %1026 = vmatprep.subr.mxu0 0.0
    %1027 = vmatpush1.msra.mxu0 0.0
    %1028 = vmatprep.subr.mxu0 0.0
    %1029 = vmatpush1.msra.mxu0 0.0
    %1030 = vmatprep.subr.mxu0 0.0
    %1031 = vmatpush1.msra.mxu0 0.0
    %1032 = vmatprep.subr.mxu0 0.0
    %1033 = vmatpush1.msra.mxu0 0.0
    %1034 = vmatprep.subr.mxu0 0.0
    %1035 = vmatpush1.msra.mxu0 0.0
    %1036 = vmatprep.subr.mxu0 0.0
    %1037 = vmatpush1.msra.mxu0 0.0
    %1038 = vmatprep.subr.mxu0 0.0
    %1039 = vmatpush1.msra.mxu0 0.0
    %1040 = vmatprep.subr.mxu0 0.0
    %1041 = vmatpush1.msra.mxu0 0.0
    %1042 = vmatprep.subr.mxu0 0.0
    %1043 = vmatpush1.msra.mxu0 0.0
    %1044 = vmatprep.subr.mxu0 0.0
    %1045 = vmatpush1.msra.mxu0 0.0
    %1046 = vmatprep.subr.mxu0 0.0
    %1047 = vmatpush1.msra.mxu0 0.0
    %1048 = vmatprep.subr.mxu0 0.0
    %1049 = vmatpush1.msra.mxu0 %v829
    %1050 = vmatprep.subr.mxu0 0.0
    %1051 = vmatpush2.msra.mxu0 0.0
    %1052 = vmatprep.subr.mxu0 0.0
    %1053 = vmatpush2.msra.mxu0 0.0
    %1054 = vmatprep.subr.mxu0 0.0
    %1055 = vmatpush2.msra.mxu0 0.0
    %1056 = vmatprep.subr.mxu0 0.0
    %1057 = vmatpush2.msra.mxu0 0.0
    %1058 = vmatprep.subr.mxu0 0.0
    %1059 = vmatpush2.msra.mxu0 0.0
    %1060 = vmatprep.subr.mxu0 0.0
    %1061 = vmatpush2.msra.mxu0 0.0
    %1062 = vmatprep.subr.mxu0 0.0
    %1063 = vmatpush2.msra.mxu0 0.0
    %1064 = vmatprep.subr.mxu0 0.0
    %1065 = vmatpush2.msra.mxu0 0.0
    %1066 = vmatprep.subr.mxu0 0.0
    %1067 = vmatpush2.msra.mxu0 0.0
    %1068 = vmatprep.subr.mxu0 0.0
    %1069 = vmatpush2.msra.mxu0 0.0
    %1070 = vmatprep.subr.mxu0 0.0
    %1071 = vmatpush2.msra.mxu0 0.0
    %1072 = vmatprep.subr.mxu0 0.0
    %1073 = vmatpush2.msra.mxu0 0.0
    %1074 = vmatprep.subr.mxu0 0.0
    %1075 = vmatpush2.msra.mxu0 0.0
    %1076 = vmatprep.subr.mxu0 0.0
    %1077 = vmatpush2.msra.mxu0 0.0
    %1078 = vmatprep.subr.mxu0 0.0
    %1079 = vmatpush2.msra.mxu0 0.0
    %1080 = vmatprep.subr.mxu0 0.0
    %1081 = vmatpush2.msra.mxu0 0.0
    %1082 = vmatprep.mubr.f32.mxu0 0.0
    %1083 = vmatmul.mubr.f32.gmra.mxu0 %v1016
    %v1084 = vpop.f32.mrf.mxu0
    %v1085 = vadd.f32 %v1012, %v1084
    %v1086 = vpop.f32.mrf.mxu0
    %1087 = vdwg.mxu0
    %v1088 = vadd.s32 %v138, 4294967294
    %vm1089 = vcmp.eq.s32.totalorder %v135, %v1088
    %vm1090 = vcmp.eq.s32.totalorder %v136, %v1088
    %vm1091 = vcmp.eq.s32.totalorder %v719, %v1088
    %vm1092 = vcmp.eq.s32.totalorder %v720, %v1088
    %v1093 = vsel %vm1089, 1, 0
    %v1094 = vsel %vm1090, 1, 0
    %v1095 = vsel %vm1091, 1, 0
    %v1096 = vsel %vm1092, 1, 0
    %v1097 = vcvt.s32.f32 %v1093
    %v1098 = vcvt.s32.f32 %v1094
    %v1099 = vcvt.s32.f32 %v1095
    %v1100 = vcvt.s32.f32 %v1096
    %v1101 = vsel %vm147, %v1097, 0.0
    %v1102 = vsel %vm147, %v1098, 0.0
    %v1103 = vsel %vm147, %v1099, 0.0
    %v1104 = vsel %vm147, %v1100, 0.0
    %1109 = vrot.lane.b32.xlu0 %v1097, 32
    %v1110 = vpop.permute.xlu0 %1109
    %1111 = vrot.lane.b32.xlu0 %v1098, 32
    %v1112 = vpop.permute.xlu0 %1111
    %1113 = vrot.lane.b32.xlu0 %v1099, 32
    %v1114 = vpop.permute.xlu0 %1113
    %1115 = vrot.lane.b32.xlu0 %v1100, 32
    %v1116 = vpop.permute.xlu0 %1115
    %v1121 = vsel %vm147, 0.0, %v1110
    %v1122 = vsel %vm147, 0.0, %v1112
    %v1123 = vsel %vm147, 0.0, %v1114
    %v1124 = vsel %vm147, 0.0, %v1116
    %1125 = vmatprep.subr.mxu0 0.0
    %1126 = vmatpush1.msra.mxu0 0.0
    %1127 = vmatprep.subr.mxu0 0.0
    %1128 = vmatpush1.msra.mxu0 0.0
    %1129 = vmatprep.subr.mxu0 0.0
    %1130 = vmatpush1.msra.mxu0 0.0
    %1131 = vmatprep.subr.mxu0 0.0
    %1132 = vmatpush1.msra.mxu0 0.0
    %1133 = vmatprep.subr.mxu0 0.0
    %1134 = vmatpush1.msra.mxu0 0.0
    %1135 = vmatprep.subr.mxu0 0.0
    %1136 = vmatpush1.msra.mxu0 0.0
    %1137 = vmatprep.subr.mxu0 0.0
    %1138 = vmatpush1.msra.mxu0 0.0
    %1139 = vmatprep.subr.mxu0 0.0
    %1140 = vmatpush1.msra.mxu0 0.0
    %1141 = vmatprep.subr.mxu0 0.0
    %1142 = vmatpush1.msra.mxu0 %v1124
    %1143 = vmatprep.subr.mxu0 0.0
    %1144 = vmatpush1.msra.mxu0 %v1123
    %1145 = vmatprep.subr.mxu0 0.0
    %1146 = vmatpush1.msra.mxu0 %v1122
    %1147 = vmatprep.subr.mxu0 0.0
    %1148 = vmatpush1.msra.mxu0 %v1121
    %1149 = vmatprep.subr.mxu0 0.0
    %1150 = vmatpush1.msra.mxu0 %v1104
    %1151 = vmatprep.subr.mxu0 0.0
    %1152 = vmatpush1.msra.mxu0 %v1103
    %1153 = vmatprep.subr.mxu0 0.0
    %1154 = vmatpush1.msra.mxu0 %v1102
    %1155 = vmatprep.subr.mxu0 0.0
    %1156 = vmatpush1.msra.mxu0 %v1101
    %1157 = vmatprep.subr.mxu0 0.0
    %1158 = vmatpush2.msra.mxu0 0.0
    %1159 = vmatprep.subr.mxu0 0.0
    %1160 = vmatpush2.msra.mxu0 0.0
    %1161 = vmatprep.subr.mxu0 0.0
    %1162 = vmatpush2.msra.mxu0 0.0
    %1163 = vmatprep.subr.mxu0 0.0
    %1164 = vmatpush2.msra.mxu0 0.0
    %1165 = vmatprep.subr.mxu0 0.0
    %1166 = vmatpush2.msra.mxu0 0.0
    %1167 = vmatprep.subr.mxu0 0.0
    %1168 = vmatpush2.msra.mxu0 0.0
    %1169 = vmatprep.subr.mxu0 0.0
    %1170 = vmatpush2.msra.mxu0 0.0
    %1171 = vmatprep.subr.mxu0 0.0
    %1172 = vmatpush2.msra.mxu0 0.0
    %1173 = vmatprep.subr.mxu0 0.0
    %1174 = vmatpush2.msra.mxu0 0.0
    %1175 = vmatprep.subr.mxu0 0.0
    %1176 = vmatpush2.msra.mxu0 0.0
    %1177 = vmatprep.subr.mxu0 0.0
    %1178 = vmatpush2.msra.mxu0 0.0
    %1179 = vmatprep.subr.mxu0 0.0
    %1180 = vmatpush2.msra.mxu0 0.0
    %1181 = vmatprep.subr.mxu0 0.0
    %1182 = vmatpush2.msra.mxu0 0.0
    %1183 = vmatprep.subr.mxu0 0.0
    %1184 = vmatpush2.msra.mxu0 0.0
    %1185 = vmatprep.subr.mxu0 0.0
    %1186 = vmatpush2.msra.mxu0 0.0
    %1187 = vmatprep.subr.mxu0 0.0
    %1188 = vmatpush2.msra.mxu0 0.0
    %1189 = vmatprep.mubr.f32.mxu0 0.0
    %1190 = vmatmul.mubr.f32.gmra.mxu0 %v760
    %v1191 = vpop.f32.mrf.mxu0
    %v1192 = vadd.f32 0.0, %v1191
    %v1193 = vpop.f32.mrf.mxu0
    %1194 = vdwg.mxu0
    %s1195 = scalar_lea.vmem %s6, 8
    %v1196 = vld [vmem:[%s1195] sm:$0xf]
    %v1198 = vsel %vm60, %v1196, 0
    %1200 = vmatprep.subr.mxu0 0.0
    %1201 = vmatpush1.msra.mxu0 0.0
    %1202 = vmatprep.subr.mxu0 0.0
    %1203 = vmatpush1.msra.mxu0 0.0
    %1204 = vmatprep.subr.mxu0 0.0
    %1205 = vmatpush1.msra.mxu0 0.0
    %1206 = vmatprep.subr.mxu0 0.0
    %1207 = vmatpush1.msra.mxu0 0.0
    %1208 = vmatprep.subr.mxu0 0.0
    %1209 = vmatpush1.msra.mxu0 0.0
    %1210 = vmatprep.subr.mxu0 0.0
    %1211 = vmatpush1.msra.mxu0 0.0
    %1212 = vmatprep.subr.mxu0 0.0
    %1213 = vmatpush1.msra.mxu0 0.0
    %1214 = vmatprep.subr.mxu0 0.0
    %1215 = vmatpush1.msra.mxu0 0.0
    %1216 = vmatprep.subr.mxu0 0.0
    %1217 = vmatpush1.msra.mxu0 0.0
    %1218 = vmatprep.subr.mxu0 0.0
    %1219 = vmatpush1.msra.mxu0 0.0
    %1220 = vmatprep.subr.mxu0 0.0
    %1221 = vmatpush1.msra.mxu0 0.0
    %1222 = vmatprep.subr.mxu0 0.0
    %1223 = vmatpush1.msra.mxu0 0.0
    %1224 = vmatprep.subr.mxu0 0.0
    %1225 = vmatpush1.msra.mxu0 0.0
    %1226 = vmatprep.subr.mxu0 0.0
    %1227 = vmatpush1.msra.mxu0 0.0
    %1228 = vmatprep.subr.mxu0 0.0
    %1229 = vmatpush1.msra.mxu0 0.0
    %1230 = vmatprep.subr.mxu0 0.0
    %1231 = vmatpush1.msra.mxu0 %v1192
    %1232 = vmatprep.subr.mxu0 0.0
    %1233 = vmatpush2.msra.mxu0 0.0
    %1234 = vmatprep.subr.mxu0 0.0
    %1235 = vmatpush2.msra.mxu0 0.0
    %1236 = vmatprep.subr.mxu0 0.0
    %1237 = vmatpush2.msra.mxu0 0.0
    %1238 = vmatprep.subr.mxu0 0.0
    %1239 = vmatpush2.msra.mxu0 0.0
    %1240 = vmatprep.subr.mxu0 0.0
    %1241 = vmatpush2.msra.mxu0 0.0
    %1242 = vmatprep.subr.mxu0 0.0
    %1243 = vmatpush2.msra.mxu0 0.0
    %1244 = vmatprep.subr.mxu0 0.0
    %1245 = vmatpush2.msra.mxu0 0.0
    %1246 = vmatprep.subr.mxu0 0.0
    %1247 = vmatpush2.msra.mxu0 0.0
    %1248 = vmatprep.subr.mxu0 0.0
    %1249 = vmatpush2.msra.mxu0 0.0
    %1250 = vmatprep.subr.mxu0 0.0
    %1251 = vmatpush2.msra.mxu0 0.0
    %1252 = vmatprep.subr.mxu0 0.0
    %1253 = vmatpush2.msra.mxu0 0.0
    %1254 = vmatprep.subr.mxu0 0.0
    %1255 = vmatpush2.msra.mxu0 0.0
    %1256 = vmatprep.subr.mxu0 0.0
    %1257 = vmatpush2.msra.mxu0 0.0
    %1258 = vmatprep.subr.mxu0 0.0
    %1259 = vmatpush2.msra.mxu0 0.0
    %1260 = vmatprep.subr.mxu0 0.0
    %1261 = vmatpush2.msra.mxu0 0.0
    %1262 = vmatprep.subr.mxu0 0.0
    %1263 = vmatpush2.msra.mxu0 0.0
    %1264 = vmatprep.mubr.f32.mxu0 0.0
    %1265 = vmatmul.mubr.f32.gmra.mxu0 %v1198
    %v1266 = vpop.f32.mrf.mxu0
    %v1267 = vadd.f32 0.0, %v1266
    %v1268 = vpop.f32.mrf.mxu0
    %1269 = vdwg.mxu0
    %v1270 = vadd.f32 %v1085, %v1267
    %v1271 = vadd.s32 %v138, 4294967295
    %vm1272 = vcmp.eq.s32.totalorder %v135, %v1271
    %vm1273 = vcmp.eq.s32.totalorder %v136, %v1271
    %vm1274 = vcmp.eq.s32.totalorder %v719, %v1271
    %vm1275 = vcmp.eq.s32.totalorder %v720, %v1271
    %v1276 = vsel %vm1272, 1, 0
    %v1277 = vsel %vm1273, 1, 0
    %v1278 = vsel %vm1274, 1, 0
    %v1279 = vsel %vm1275, 1, 0
    %v1280 = vcvt.s32.f32 %v1276
    %v1281 = vcvt.s32.f32 %v1277
    %v1282 = vcvt.s32.f32 %v1278
    %v1283 = vcvt.s32.f32 %v1279
    %v1284 = vsel %vm147, %v1280, 0.0
    %v1285 = vsel %vm147, %v1281, 0.0
    %v1286 = vsel %vm147, %v1282, 0.0
    %v1287 = vsel %vm147, %v1283, 0.0
    %1292 = vrot.lane.b32.xlu0 %v1280, 32
    %v1293 = vpop.permute.xlu0 %1292
    %1294 = vrot.lane.b32.xlu0 %v1281, 32
    %v1295 = vpop.permute.xlu0 %1294
    %1296 = vrot.lane.b32.xlu0 %v1282, 32
    %v1297 = vpop.permute.xlu0 %1296
    %1298 = vrot.lane.b32.xlu0 %v1283, 32
    %v1299 = vpop.permute.xlu0 %1298
    %v1304 = vsel %vm147, 0.0, %v1293
    %v1305 = vsel %vm147, 0.0, %v1295
    %v1306 = vsel %vm147, 0.0, %v1297
    %v1307 = vsel %vm147, 0.0, %v1299
    %1308 = vmatprep.subr.mxu0 0.0
    %1309 = vmatpush1.msra.mxu0 0.0
    %1310 = vmatprep.subr.mxu0 0.0
    %1311 = vmatpush1.msra.mxu0 0.0
    %1312 = vmatprep.subr.mxu0 0.0
    %1313 = vmatpush1.msra.mxu0 0.0
    %1314 = vmatprep.subr.mxu0 0.0
    %1315 = vmatpush1.msra.mxu0 0.0
    %1316 = vmatprep.subr.mxu0 0.0
    %1317 = vmatpush1.msra.mxu0 0.0
    %1318 = vmatprep.subr.mxu0 0.0
    %1319 = vmatpush1.msra.mxu0 0.0
    %1320 = vmatprep.subr.mxu0 0.0
    %1321 = vmatpush1.msra.mxu0 0.0
    %1322 = vmatprep.subr.mxu0 0.0
    %1323 = vmatpush1.msra.mxu0 0.0
    %1324 = vmatprep.subr.mxu0 0.0
    %1325 = vmatpush1.msra.mxu0 %v1307
    %1326 = vmatprep.subr.mxu0 0.0
    %1327 = vmatpush1.msra.mxu0 %v1306
    %1328 = vmatprep.subr.mxu0 0.0
    %1329 = vmatpush1.msra.mxu0 %v1305
    %1330 = vmatprep.subr.mxu0 0.0
    %1331 = vmatpush1.msra.mxu0 %v1304
    %1332 = vmatprep.subr.mxu0 0.0
    %1333 = vmatpush1.msra.mxu0 %v1287
    %1334 = vmatprep.subr.mxu0 0.0
    %1335 = vmatpush1.msra.mxu0 %v1286
    %1336 = vmatprep.subr.mxu0 0.0
    %1337 = vmatpush1.msra.mxu0 %v1285
    %1338 = vmatprep.subr.mxu0 0.0
    %1339 = vmatpush1.msra.mxu0 %v1284
    %1340 = vmatprep.subr.mxu0 0.0
    %1341 = vmatpush2.msra.mxu0 0.0
    %1342 = vmatprep.subr.mxu0 0.0
    %1343 = vmatpush2.msra.mxu0 0.0
    %1344 = vmatprep.subr.mxu0 0.0
    %1345 = vmatpush2.msra.mxu0 0.0
    %1346 = vmatprep.subr.mxu0 0.0
    %1347 = vmatpush2.msra.mxu0 0.0
    %1348 = vmatprep.subr.mxu0 0.0
    %1349 = vmatpush2.msra.mxu0 0.0
    %1350 = vmatprep.subr.mxu0 0.0
    %1351 = vmatpush2.msra.mxu0 0.0
    %1352 = vmatprep.subr.mxu0 0.0
    %1353 = vmatpush2.msra.mxu0 0.0
    %1354 = vmatprep.subr.mxu0 0.0
    %1355 = vmatpush2.msra.mxu0 0.0
    %1356 = vmatprep.subr.mxu0 0.0
    %1357 = vmatpush2.msra.mxu0 0.0
    %1358 = vmatprep.subr.mxu0 0.0
    %1359 = vmatpush2.msra.mxu0 0.0
    %1360 = vmatprep.subr.mxu0 0.0
    %1361 = vmatpush2.msra.mxu0 0.0
    %1362 = vmatprep.subr.mxu0 0.0
    %1363 = vmatpush2.msra.mxu0 0.0
    %1364 = vmatprep.subr.mxu0 0.0
    %1365 = vmatpush2.msra.mxu0 0.0
    %1366 = vmatprep.subr.mxu0 0.0
    %1367 = vmatpush2.msra.mxu0 0.0
    %1368 = vmatprep.subr.mxu0 0.0
    %1369 = vmatpush2.msra.mxu0 0.0
    %1370 = vmatprep.subr.mxu0 0.0
    %1371 = vmatpush2.msra.mxu0 0.0
    %1372 = vmatprep.mubr.f32.mxu0 0.0
    %1373 = vmatmul.mubr.f32.gmra.mxu0 %v760
    %v1374 = vpop.f32.mrf.mxu0
    %v1375 = vadd.f32 0.0, %v1374
    %v1376 = vpop.f32.mrf.mxu0
    %1377 = vdwg.mxu0
    %s1378 = scalar_lea.vmem %s6, 12
    %v1379 = vld [vmem:[%s1378] sm:$0xf]
    %v1381 = vsel %vm60, %v1379, 0
    %1383 = vmatprep.subr.mxu0 0.0
    %1384 = vmatpush1.msra.mxu0 0.0
    %1385 = vmatprep.subr.mxu0 0.0
    %1386 = vmatpush1.msra.mxu0 0.0
    %1387 = vmatprep.subr.mxu0 0.0
    %1388 = vmatpush1.msra.mxu0 0.0
    %1389 = vmatprep.subr.mxu0 0.0
    %1390 = vmatpush1.msra.mxu0 0.0
    %1391 = vmatprep.subr.mxu0 0.0
    %1392 = vmatpush1.msra.mxu0 0.0
    %1393 = vmatprep.subr.mxu0 0.0
    %1394 = vmatpush1.msra.mxu0 0.0
    %1395 = vmatprep.subr.mxu0 0.0
    %1396 = vmatpush1.msra.mxu0 0.0
    %1397 = vmatprep.subr.mxu0 0.0
    %1398 = vmatpush1.msra.mxu0 0.0
    %1399 = vmatprep.subr.mxu0 0.0
    %1400 = vmatpush1.msra.mxu0 0.0
    %1401 = vmatprep.subr.mxu0 0.0
    %1402 = vmatpush1.msra.mxu0 0.0
    %1403 = vmatprep.subr.mxu0 0.0
    %1404 = vmatpush1.msra.mxu0 0.0
    %1405 = vmatprep.subr.mxu0 0.0
    %1406 = vmatpush1.msra.mxu0 0.0
    %1407 = vmatprep.subr.mxu0 0.0
    %1408 = vmatpush1.msra.mxu0 0.0
    %1409 = vmatprep.subr.mxu0 0.0
    %1410 = vmatpush1.msra.mxu0 0.0
    %1411 = vmatprep.subr.mxu0 0.0
    %1412 = vmatpush1.msra.mxu0 0.0
    %1413 = vmatprep.subr.mxu0 0.0
    %1414 = vmatpush1.msra.mxu0 %v1375
    %1415 = vmatprep.subr.mxu0 0.0
    %1416 = vmatpush2.msra.mxu0 0.0
    %1417 = vmatprep.subr.mxu0 0.0
    %1418 = vmatpush2.msra.mxu0 0.0
    %1419 = vmatprep.subr.mxu0 0.0
    %1420 = vmatpush2.msra.mxu0 0.0
    %1421 = vmatprep.subr.mxu0 0.0
    %1422 = vmatpush2.msra.mxu0 0.0
    %1423 = vmatprep.subr.mxu0 0.0
    %1424 = vmatpush2.msra.mxu0 0.0
    %1425 = vmatprep.subr.mxu0 0.0
    %1426 = vmatpush2.msra.mxu0 0.0
    %1427 = vmatprep.subr.mxu0 0.0
    %1428 = vmatpush2.msra.mxu0 0.0
    %1429 = vmatprep.subr.mxu0 0.0
    %1430 = vmatpush2.msra.mxu0 0.0
    %1431 = vmatprep.subr.mxu0 0.0
    %1432 = vmatpush2.msra.mxu0 0.0
    %1433 = vmatprep.subr.mxu0 0.0
    %1434 = vmatpush2.msra.mxu0 0.0
    %1435 = vmatprep.subr.mxu0 0.0
    %1436 = vmatpush2.msra.mxu0 0.0
    %1437 = vmatprep.subr.mxu0 0.0
    %1438 = vmatpush2.msra.mxu0 0.0
    %1439 = vmatprep.subr.mxu0 0.0
    %1440 = vmatpush2.msra.mxu0 0.0
    %1441 = vmatprep.subr.mxu0 0.0
    %1442 = vmatpush2.msra.mxu0 0.0
    %1443 = vmatprep.subr.mxu0 0.0
    %1444 = vmatpush2.msra.mxu0 0.0
    %1445 = vmatprep.subr.mxu0 0.0
    %1446 = vmatpush2.msra.mxu0 0.0
    %1447 = vmatprep.mubr.f32.mxu0 0.0
    %1448 = vmatmul.mubr.f32.gmra.mxu0 %v1381
    %v1449 = vpop.f32.mrf.mxu0
    %v1450 = vadd.f32 0.0, %v1449
    %v1451 = vpop.f32.mrf.mxu0
    %1452 = vdwg.mxu0
    %v1453 = vadd.f32 %v1270, %v1450
    %vm1454 = vcmp.eq.s32.totalorder %v135, %v138
    %vm1455 = vcmp.eq.s32.totalorder %v136, %v138
    %vm1456 = vcmp.eq.s32.totalorder %v719, %v138
    %vm1457 = vcmp.eq.s32.totalorder %v720, %v138
    %v1458 = vsel %vm1454, 1, 0
    %v1459 = vsel %vm1455, 1, 0
    %v1460 = vsel %vm1456, 1, 0
    %v1461 = vsel %vm1457, 1, 0
    %v1462 = vcvt.s32.f32 %v1458
    %v1463 = vcvt.s32.f32 %v1459
    %v1464 = vcvt.s32.f32 %v1460
    %v1465 = vcvt.s32.f32 %v1461
    %v1466 = vsel %vm147, %v1462, 0.0
    %v1467 = vsel %vm147, %v1463, 0.0
    %v1468 = vsel %vm147, %v1464, 0.0
    %v1469 = vsel %vm147, %v1465, 0.0
    %1474 = vrot.lane.b32.xlu0 %v1462, 32
    %v1475 = vpop.permute.xlu0 %1474
    %1476 = vrot.lane.b32.xlu0 %v1463, 32
    %v1477 = vpop.permute.xlu0 %1476
    %1478 = vrot.lane.b32.xlu0 %v1464, 32
    %v1479 = vpop.permute.xlu0 %1478
    %1480 = vrot.lane.b32.xlu0 %v1465, 32
    %v1481 = vpop.permute.xlu0 %1480
    %v1486 = vsel %vm147, 0.0, %v1475
    %v1487 = vsel %vm147, 0.0, %v1477
    %v1488 = vsel %vm147, 0.0, %v1479
    %v1489 = vsel %vm147, 0.0, %v1481
    %1490 = vmatprep.subr.mxu0 0.0
    %1491 = vmatpush1.msra.mxu0 0.0
    %1492 = vmatprep.subr.mxu0 0.0
    %1493 = vmatpush1.msra.mxu0 0.0
    %1494 = vmatprep.subr.mxu0 0.0
    %1495 = vmatpush1.msra.mxu0 0.0
    %1496 = vmatprep.subr.mxu0 0.0
    %1497 = vmatpush1.msra.mxu0 0.0
    %1498 = vmatprep.subr.mxu0 0.0
    %1499 = vmatpush1.msra.mxu0 0.0
    %1500 = vmatprep.subr.mxu0 0.0
    %1501 = vmatpush1.msra.mxu0 0.0
    %1502 = vmatprep.subr.mxu0 0.0
    %1503 = vmatpush1.msra.mxu0 0.0
    %1504 = vmatprep.subr.mxu0 0.0
    %1505 = vmatpush1.msra.mxu0 0.0
    %1506 = vmatprep.subr.mxu0 0.0
    %1507 = vmatpush1.msra.mxu0 %v1489
    %1508 = vmatprep.subr.mxu0 0.0
    %1509 = vmatpush1.msra.mxu0 %v1488
    %1510 = vmatprep.subr.mxu0 0.0
    %1511 = vmatpush1.msra.mxu0 %v1487
    %1512 = vmatprep.subr.mxu0 0.0
    %1513 = vmatpush1.msra.mxu0 %v1486
    %1514 = vmatprep.subr.mxu0 0.0
    %1515 = vmatpush1.msra.mxu0 %v1469
    %1516 = vmatprep.subr.mxu0 0.0
    %1517 = vmatpush1.msra.mxu0 %v1468
    %1518 = vmatprep.subr.mxu0 0.0
    %1519 = vmatpush1.msra.mxu0 %v1467
    %1520 = vmatprep.subr.mxu0 0.0
    %1521 = vmatpush1.msra.mxu0 %v1466
    %1522 = vmatprep.subr.mxu0 0.0
    %1523 = vmatpush2.msra.mxu0 0.0
    %1524 = vmatprep.subr.mxu0 0.0
    %1525 = vmatpush2.msra.mxu0 0.0
    %1526 = vmatprep.subr.mxu0 0.0
    %1527 = vmatpush2.msra.mxu0 0.0
    %1528 = vmatprep.subr.mxu0 0.0
    %1529 = vmatpush2.msra.mxu0 0.0
    %1530 = vmatprep.subr.mxu0 0.0
    %1531 = vmatpush2.msra.mxu0 0.0
    %1532 = vmatprep.subr.mxu0 0.0
    %1533 = vmatpush2.msra.mxu0 0.0
    %1534 = vmatprep.subr.mxu0 0.0
    %1535 = vmatpush2.msra.mxu0 0.0
    %1536 = vmatprep.subr.mxu0 0.0
    %1537 = vmatpush2.msra.mxu0 0.0
    %1538 = vmatprep.subr.mxu0 0.0
    %1539 = vmatpush2.msra.mxu0 0.0
    %1540 = vmatprep.subr.mxu0 0.0
    %1541 = vmatpush2.msra.mxu0 0.0
    %1542 = vmatprep.subr.mxu0 0.0
    %1543 = vmatpush2.msra.mxu0 0.0
    %1544 = vmatprep.subr.mxu0 0.0
    %1545 = vmatpush2.msra.mxu0 0.0
    %1546 = vmatprep.subr.mxu0 0.0
    %1547 = vmatpush2.msra.mxu0 0.0
    %1548 = vmatprep.subr.mxu0 0.0
    %1549 = vmatpush2.msra.mxu0 0.0
    %1550 = vmatprep.subr.mxu0 0.0
    %1551 = vmatpush2.msra.mxu0 0.0
    %1552 = vmatprep.subr.mxu0 0.0
    %1553 = vmatpush2.msra.mxu0 0.0
    %1554 = vmatprep.mubr.f32.mxu0 0.0
    %1555 = vmatmul.mubr.f32.gmra.mxu0 %v760
    %v1556 = vpop.f32.mrf.mxu0
    %v1557 = vadd.f32 0.0, %v1556
    %v1558 = vpop.f32.mrf.mxu0
    %1559 = vdwg.mxu0
    %s1560 = scalar_lea.vmem %s6, 16
    %v1561 = vld [vmem:[%s1560] sm:$0xf]
    %v1563 = vsel %vm60, %v1561, 0
    %1565 = vmatprep.subr.mxu0 0.0
    %1566 = vmatpush1.msra.mxu0 0.0
    %1567 = vmatprep.subr.mxu0 0.0
    %1568 = vmatpush1.msra.mxu0 0.0
    %1569 = vmatprep.subr.mxu0 0.0
    %1570 = vmatpush1.msra.mxu0 0.0
    %1571 = vmatprep.subr.mxu0 0.0
    %1572 = vmatpush1.msra.mxu0 0.0
    %1573 = vmatprep.subr.mxu0 0.0
    %1574 = vmatpush1.msra.mxu0 0.0
    %1575 = vmatprep.subr.mxu0 0.0
    %1576 = vmatpush1.msra.mxu0 0.0
    %1577 = vmatprep.subr.mxu0 0.0
    %1578 = vmatpush1.msra.mxu0 0.0
    %1579 = vmatprep.subr.mxu0 0.0
    %1580 = vmatpush1.msra.mxu0 0.0
    %1581 = vmatprep.subr.mxu0 0.0
    %1582 = vmatpush1.msra.mxu0 0.0
    %1583 = vmatprep.subr.mxu0 0.0
    %1584 = vmatpush1.msra.mxu0 0.0
    %1585 = vmatprep.subr.mxu0 0.0
    %1586 = vmatpush1.msra.mxu0 0.0
    %1587 = vmatprep.subr.mxu0 0.0
    %1588 = vmatpush1.msra.mxu0 0.0
    %1589 = vmatprep.subr.mxu0 0.0
    %1590 = vmatpush1.msra.mxu0 0.0
    %1591 = vmatprep.subr.mxu0 0.0
    %1592 = vmatpush1.msra.mxu0 0.0
    %1593 = vmatprep.subr.mxu0 0.0
    %1594 = vmatpush1.msra.mxu0 0.0
    %1595 = vmatprep.subr.mxu0 0.0
    %1596 = vmatpush1.msra.mxu0 %v1557
    %1597 = vmatprep.subr.mxu0 0.0
    %1598 = vmatpush2.msra.mxu0 0.0
    %1599 = vmatprep.subr.mxu0 0.0
    %1600 = vmatpush2.msra.mxu0 0.0
    %1601 = vmatprep.subr.mxu0 0.0
    %1602 = vmatpush2.msra.mxu0 0.0
    %1603 = vmatprep.subr.mxu0 0.0
    %1604 = vmatpush2.msra.mxu0 0.0
    %1605 = vmatprep.subr.mxu0 0.0
    %1606 = vmatpush2.msra.mxu0 0.0
    %1607 = vmatprep.subr.mxu0 0.0
    %1608 = vmatpush2.msra.mxu0 0.0
    %1609 = vmatprep.subr.mxu0 0.0
    %1610 = vmatpush2.msra.mxu0 0.0
    %1611 = vmatprep.subr.mxu0 0.0
    %1612 = vmatpush2.msra.mxu0 0.0
    %1613 = vmatprep.subr.mxu0 0.0
    %1614 = vmatpush2.msra.mxu0 0.0
    %1615 = vmatprep.subr.mxu0 0.0
    %1616 = vmatpush2.msra.mxu0 0.0
    %1617 = vmatprep.subr.mxu0 0.0
    %1618 = vmatpush2.msra.mxu0 0.0
    %1619 = vmatprep.subr.mxu0 0.0
    %1620 = vmatpush2.msra.mxu0 0.0
    %1621 = vmatprep.subr.mxu0 0.0
    %1622 = vmatpush2.msra.mxu0 0.0
    %1623 = vmatprep.subr.mxu0 0.0
    %1624 = vmatpush2.msra.mxu0 0.0
    %1625 = vmatprep.subr.mxu0 0.0
    %1626 = vmatpush2.msra.mxu0 0.0
    %1627 = vmatprep.subr.mxu0 0.0
    %1628 = vmatpush2.msra.mxu0 0.0
    %1629 = vmatprep.mubr.f32.mxu0 0.0
    %1630 = vmatmul.mubr.f32.gmra.mxu0 %v1563
    %v1631 = vpop.f32.mrf.mxu0
    %v1632 = vadd.f32 0.0, %v1631
    %v1633 = vpop.f32.mrf.mxu0
    %1634 = vdwg.mxu0
    %v1635 = vadd.f32 %v1453, %v1632
    %v1636 = vadd.s32 %v138, 1
    %vm1637 = vcmp.eq.s32.totalorder %v135, %v1636
    %vm1638 = vcmp.eq.s32.totalorder %v136, %v1636
    %vm1639 = vcmp.eq.s32.totalorder %v719, %v1636
    %vm1640 = vcmp.eq.s32.totalorder %v720, %v1636
    %v1641 = vsel %vm1637, 1, 0
    %v1642 = vsel %vm1638, 1, 0
    %v1643 = vsel %vm1639, 1, 0
    %v1644 = vsel %vm1640, 1, 0
    %v1645 = vcvt.s32.f32 %v1641
    %v1646 = vcvt.s32.f32 %v1642
    %v1647 = vcvt.s32.f32 %v1643
    %v1648 = vcvt.s32.f32 %v1644
    %v1649 = vsel %vm147, %v1645, 0.0
    %v1650 = vsel %vm147, %v1646, 0.0
    %v1651 = vsel %vm147, %v1647, 0.0
    %v1652 = vsel %vm147, %v1648, 0.0
    %1657 = vrot.lane.b32.xlu0 %v1645, 32
    %v1658 = vpop.permute.xlu0 %1657
    %1659 = vrot.lane.b32.xlu0 %v1646, 32
    %v1660 = vpop.permute.xlu0 %1659
    %1661 = vrot.lane.b32.xlu0 %v1647, 32
    %v1662 = vpop.permute.xlu0 %1661
    %1663 = vrot.lane.b32.xlu0 %v1648, 32
    %v1664 = vpop.permute.xlu0 %1663
    %v1669 = vsel %vm147, 0.0, %v1658
    %v1670 = vsel %vm147, 0.0, %v1660
    %v1671 = vsel %vm147, 0.0, %v1662
    %v1672 = vsel %vm147, 0.0, %v1664
    %1673 = vmatprep.subr.mxu0 0.0
    %1674 = vmatpush1.msra.mxu0 0.0
    %1675 = vmatprep.subr.mxu0 0.0
    %1676 = vmatpush1.msra.mxu0 0.0
    %1677 = vmatprep.subr.mxu0 0.0
    %1678 = vmatpush1.msra.mxu0 0.0
    %1679 = vmatprep.subr.mxu0 0.0
    %1680 = vmatpush1.msra.mxu0 0.0
    %1681 = vmatprep.subr.mxu0 0.0
    %1682 = vmatpush1.msra.mxu0 0.0
    %1683 = vmatprep.subr.mxu0 0.0
    %1684 = vmatpush1.msra.mxu0 0.0
    %1685 = vmatprep.subr.mxu0 0.0
    %1686 = vmatpush1.msra.mxu0 0.0
    %1687 = vmatprep.subr.mxu0 0.0
    %1688 = vmatpush1.msra.mxu0 0.0
    %1689 = vmatprep.subr.mxu0 0.0
    %1690 = vmatpush1.msra.mxu0 %v1672
    %1691 = vmatprep.subr.mxu0 0.0
    %1692 = vmatpush1.msra.mxu0 %v1671
    %1693 = vmatprep.subr.mxu0 0.0
    %1694 = vmatpush1.msra.mxu0 %v1670
    %1695 = vmatprep.subr.mxu0 0.0
    %1696 = vmatpush1.msra.mxu0 %v1669
    %1697 = vmatprep.subr.mxu0 0.0
    %1698 = vmatpush1.msra.mxu0 %v1652
    %1699 = vmatprep.subr.mxu0 0.0
    %1700 = vmatpush1.msra.mxu0 %v1651
    %1701 = vmatprep.subr.mxu0 0.0
    %1702 = vmatpush1.msra.mxu0 %v1650
    %1703 = vmatprep.subr.mxu0 0.0
    %1704 = vmatpush1.msra.mxu0 %v1649
    %1705 = vmatprep.subr.mxu0 0.0
    %1706 = vmatpush2.msra.mxu0 0.0
    %1707 = vmatprep.subr.mxu0 0.0
    %1708 = vmatpush2.msra.mxu0 0.0
    %1709 = vmatprep.subr.mxu0 0.0
    %1710 = vmatpush2.msra.mxu0 0.0
    %1711 = vmatprep.subr.mxu0 0.0
    %1712 = vmatpush2.msra.mxu0 0.0
    %1713 = vmatprep.subr.mxu0 0.0
    %1714 = vmatpush2.msra.mxu0 0.0
    %1715 = vmatprep.subr.mxu0 0.0
    %1716 = vmatpush2.msra.mxu0 0.0
    %1717 = vmatprep.subr.mxu0 0.0
    %1718 = vmatpush2.msra.mxu0 0.0
    %1719 = vmatprep.subr.mxu0 0.0
    %1720 = vmatpush2.msra.mxu0 0.0
    %1721 = vmatprep.subr.mxu0 0.0
    %1722 = vmatpush2.msra.mxu0 0.0
    %1723 = vmatprep.subr.mxu0 0.0
    %1724 = vmatpush2.msra.mxu0 0.0
    %1725 = vmatprep.subr.mxu0 0.0
    %1726 = vmatpush2.msra.mxu0 0.0
    %1727 = vmatprep.subr.mxu0 0.0
    %1728 = vmatpush2.msra.mxu0 0.0
    %1729 = vmatprep.subr.mxu0 0.0
    %1730 = vmatpush2.msra.mxu0 0.0
    %1731 = vmatprep.subr.mxu0 0.0
    %1732 = vmatpush2.msra.mxu0 0.0
    %1733 = vmatprep.subr.mxu0 0.0
    %1734 = vmatpush2.msra.mxu0 0.0
    %1735 = vmatprep.subr.mxu0 0.0
    %1736 = vmatpush2.msra.mxu0 0.0
    %1737 = vmatprep.mubr.f32.mxu0 0.0
    %1738 = vmatmul.mubr.f32.gmra.mxu0 %v760
    %v1739 = vpop.f32.mrf.mxu0
    %v1740 = vadd.f32 0.0, %v1739
    %v1741 = vpop.f32.mrf.mxu0
    %1742 = vdwg.mxu0
    %s1743 = scalar_lea.vmem %s6, 20
    %v1744 = vld [vmem:[%s1743] sm:$0xf]
    %v1746 = vsel %vm60, %v1744, 0
    %1748 = vmatprep.subr.mxu0 0.0
    %1749 = vmatpush1.msra.mxu0 0.0
    %1750 = vmatprep.subr.mxu0 0.0
    %1751 = vmatpush1.msra.mxu0 0.0
    %1752 = vmatprep.subr.mxu0 0.0
    %1753 = vmatpush1.msra.mxu0 0.0
    %1754 = vmatprep.subr.mxu0 0.0
    %1755 = vmatpush1.msra.mxu0 0.0
    %1756 = vmatprep.subr.mxu0 0.0
    %1757 = vmatpush1.msra.mxu0 0.0
    %1758 = vmatprep.subr.mxu0 0.0
    %1759 = vmatpush1.msra.mxu0 0.0
    %1760 = vmatprep.subr.mxu0 0.0
    %1761 = vmatpush1.msra.mxu0 0.0
    %1762 = vmatprep.subr.mxu0 0.0
    %1763 = vmatpush1.msra.mxu0 0.0
    %1764 = vmatprep.subr.mxu0 0.0
    %1765 = vmatpush1.msra.mxu0 0.0
    %1766 = vmatprep.subr.mxu0 0.0
    %1767 = vmatpush1.msra.mxu0 0.0
    %1768 = vmatprep.subr.mxu0 0.0
    %1769 = vmatpush1.msra.mxu0 0.0
    %1770 = vmatprep.subr.mxu0 0.0
    %1771 = vmatpush1.msra.mxu0 0.0
    %1772 = vmatprep.subr.mxu0 0.0
    %1773 = vmatpush1.msra.mxu0 0.0
    %1774 = vmatprep.subr.mxu0 0.0
    %1775 = vmatpush1.msra.mxu0 0.0
    %1776 = vmatprep.subr.mxu0 0.0
    %1777 = vmatpush1.msra.mxu0 0.0
    %1778 = vmatprep.subr.mxu0 0.0
    %1779 = vmatpush1.msra.mxu0 %v1740
    %1780 = vmatprep.subr.mxu0 0.0
    %1781 = vmatpush2.msra.mxu0 0.0
    %1782 = vmatprep.subr.mxu0 0.0
    %1783 = vmatpush2.msra.mxu0 0.0
    %1784 = vmatprep.subr.mxu0 0.0
    %1785 = vmatpush2.msra.mxu0 0.0
    %1786 = vmatprep.subr.mxu0 0.0
    %1787 = vmatpush2.msra.mxu0 0.0
    %1788 = vmatprep.subr.mxu0 0.0
    %1789 = vmatpush2.msra.mxu0 0.0
    %1790 = vmatprep.subr.mxu0 0.0
    %1791 = vmatpush2.msra.mxu0 0.0
    %1792 = vmatprep.subr.mxu0 0.0
    %1793 = vmatpush2.msra.mxu0 0.0
    %1794 = vmatprep.subr.mxu0 0.0
    %1795 = vmatpush2.msra.mxu0 0.0
    %1796 = vmatprep.subr.mxu0 0.0
    %1797 = vmatpush2.msra.mxu0 0.0
    %1798 = vmatprep.subr.mxu0 0.0
    %1799 = vmatpush2.msra.mxu0 0.0
    %1800 = vmatprep.subr.mxu0 0.0
    %1801 = vmatpush2.msra.mxu0 0.0
    %1802 = vmatprep.subr.mxu0 0.0
    %1803 = vmatpush2.msra.mxu0 0.0
    %1804 = vmatprep.subr.mxu0 0.0
    %1805 = vmatpush2.msra.mxu0 0.0
    %1806 = vmatprep.subr.mxu0 0.0
    %1807 = vmatpush2.msra.mxu0 0.0
    %1808 = vmatprep.subr.mxu0 0.0
    %1809 = vmatpush2.msra.mxu0 0.0
    %1810 = vmatprep.subr.mxu0 0.0
    %1811 = vmatpush2.msra.mxu0 0.0
    %1812 = vmatprep.mubr.f32.mxu0 0.0
    %1813 = vmatmul.mubr.f32.gmra.mxu0 %v1746
    %v1814 = vpop.f32.mrf.mxu0
    %v1815 = vadd.f32 0.0, %v1814
    %v1816 = vpop.f32.mrf.mxu0
    %1817 = vdwg.mxu0
    %v1818 = vadd.f32 %v1635, %v1815
    %v1819 = vadd.s32 %v138, 2
    %vm1820 = vcmp.eq.s32.totalorder %v135, %v1819
    %vm1821 = vcmp.eq.s32.totalorder %v136, %v1819
    %vm1822 = vcmp.eq.s32.totalorder %v719, %v1819
    %vm1823 = vcmp.eq.s32.totalorder %v720, %v1819
    %v1824 = vsel %vm1820, 1, 0
    %v1825 = vsel %vm1821, 1, 0
    %v1826 = vsel %vm1822, 1, 0
    %v1827 = vsel %vm1823, 1, 0
    %v1828 = vcvt.s32.f32 %v1824
    %v1829 = vcvt.s32.f32 %v1825
    %v1830 = vcvt.s32.f32 %v1826
    %v1831 = vcvt.s32.f32 %v1827
    %v1832 = vsel %vm147, %v1828, 0.0
    %v1833 = vsel %vm147, %v1829, 0.0
    %v1834 = vsel %vm147, %v1830, 0.0
    %v1835 = vsel %vm147, %v1831, 0.0
    %1840 = vrot.lane.b32.xlu0 %v1828, 32
    %v1841 = vpop.permute.xlu0 %1840
    %1842 = vrot.lane.b32.xlu0 %v1829, 32
    %v1843 = vpop.permute.xlu0 %1842
    %1844 = vrot.lane.b32.xlu0 %v1830, 32
    %v1845 = vpop.permute.xlu0 %1844
    %1846 = vrot.lane.b32.xlu0 %v1831, 32
    %v1847 = vpop.permute.xlu0 %1846
    %v1852 = vsel %vm147, 0.0, %v1841
    %v1853 = vsel %vm147, 0.0, %v1843
    %v1854 = vsel %vm147, 0.0, %v1845
    %v1855 = vsel %vm147, 0.0, %v1847
    %1856 = vmatprep.subr.mxu0 0.0
    %1857 = vmatpush1.msra.mxu0 0.0
    %1858 = vmatprep.subr.mxu0 0.0
    %1859 = vmatpush1.msra.mxu0 0.0
    %1860 = vmatprep.subr.mxu0 0.0
    %1861 = vmatpush1.msra.mxu0 0.0
    %1862 = vmatprep.subr.mxu0 0.0
    %1863 = vmatpush1.msra.mxu0 0.0
    %1864 = vmatprep.subr.mxu0 0.0
    %1865 = vmatpush1.msra.mxu0 0.0
    %1866 = vmatprep.subr.mxu0 0.0
    %1867 = vmatpush1.msra.mxu0 0.0
    %1868 = vmatprep.subr.mxu0 0.0
    %1869 = vmatpush1.msra.mxu0 0.0
    %1870 = vmatprep.subr.mxu0 0.0
    %1871 = vmatpush1.msra.mxu0 0.0
    %1872 = vmatprep.subr.mxu0 0.0
    %1873 = vmatpush1.msra.mxu0 %v1855
    %1874 = vmatprep.subr.mxu0 0.0
    %1875 = vmatpush1.msra.mxu0 %v1854
    %1876 = vmatprep.subr.mxu0 0.0
    %1877 = vmatpush1.msra.mxu0 %v1853
    %1878 = vmatprep.subr.mxu0 0.0
    %1879 = vmatpush1.msra.mxu0 %v1852
    %1880 = vmatprep.subr.mxu0 0.0
    %1881 = vmatpush1.msra.mxu0 %v1835
    %1882 = vmatprep.subr.mxu0 0.0
    %1883 = vmatpush1.msra.mxu0 %v1834
    %1884 = vmatprep.subr.mxu0 0.0
    %1885 = vmatpush1.msra.mxu0 %v1833
    %1886 = vmatprep.subr.mxu0 0.0
    %1887 = vmatpush1.msra.mxu0 %v1832
    %1888 = vmatprep.subr.mxu0 0.0
    %1889 = vmatpush2.msra.mxu0 0.0
    %1890 = vmatprep.subr.mxu0 0.0
    %1891 = vmatpush2.msra.mxu0 0.0
    %1892 = vmatprep.subr.mxu0 0.0
    %1893 = vmatpush2.msra.mxu0 0.0
    %1894 = vmatprep.subr.mxu0 0.0
    %1895 = vmatpush2.msra.mxu0 0.0
    %1896 = vmatprep.subr.mxu0 0.0
    %1897 = vmatpush2.msra.mxu0 0.0
    %1898 = vmatprep.subr.mxu0 0.0
    %1899 = vmatpush2.msra.mxu0 0.0
    %1900 = vmatprep.subr.mxu0 0.0
    %1901 = vmatpush2.msra.mxu0 0.0
    %1902 = vmatprep.subr.mxu0 0.0
    %1903 = vmatpush2.msra.mxu0 0.0
    %1904 = vmatprep.subr.mxu0 0.0
    %1905 = vmatpush2.msra.mxu0 0.0
    %1906 = vmatprep.subr.mxu0 0.0
    %1907 = vmatpush2.msra.mxu0 0.0
    %1908 = vmatprep.subr.mxu0 0.0
    %1909 = vmatpush2.msra.mxu0 0.0
    %1910 = vmatprep.subr.mxu0 0.0
    %1911 = vmatpush2.msra.mxu0 0.0
    %1912 = vmatprep.subr.mxu0 0.0
    %1913 = vmatpush2.msra.mxu0 0.0
    %1914 = vmatprep.subr.mxu0 0.0
    %1915 = vmatpush2.msra.mxu0 0.0
    %1916 = vmatprep.subr.mxu0 0.0
    %1917 = vmatpush2.msra.mxu0 0.0
    %1918 = vmatprep.subr.mxu0 0.0
    %1919 = vmatpush2.msra.mxu0 0.0
    %1920 = vmatprep.mubr.f32.mxu0 0.0
    %1921 = vmatmul.mubr.f32.gmra.mxu0 %v760
    %v1922 = vpop.f32.mrf.mxu0
    %v1923 = vadd.f32 0.0, %v1922
    %v1924 = vpop.f32.mrf.mxu0
    %1925 = vdwg.mxu0
    %s1926 = scalar_lea.vmem %s6, 24
    %v1927 = vld [vmem:[%s1926] sm:$0xf]
    %v1929 = vsel %vm60, %v1927, 0
    %1931 = vmatprep.subr.mxu0 0.0
    %1932 = vmatpush1.msra.mxu0 0.0
    %1933 = vmatprep.subr.mxu0 0.0
    %1934 = vmatpush1.msra.mxu0 0.0
    %1935 = vmatprep.subr.mxu0 0.0
    %1936 = vmatpush1.msra.mxu0 0.0
    %1937 = vmatprep.subr.mxu0 0.0
    %1938 = vmatpush1.msra.mxu0 0.0
    %1939 = vmatprep.subr.mxu0 0.0
    %1940 = vmatpush1.msra.mxu0 0.0
    %1941 = vmatprep.subr.mxu0 0.0
    %1942 = vmatpush1.msra.mxu0 0.0
    %1943 = vmatprep.subr.mxu0 0.0
    %1944 = vmatpush1.msra.mxu0 0.0
    %1945 = vmatprep.subr.mxu0 0.0
    %1946 = vmatpush1.msra.mxu0 0.0
    %1947 = vmatprep.subr.mxu0 0.0
    %1948 = vmatpush1.msra.mxu0 0.0
    %1949 = vmatprep.subr.mxu0 0.0
    %1950 = vmatpush1.msra.mxu0 0.0
    %1951 = vmatprep.subr.mxu0 0.0
    %1952 = vmatpush1.msra.mxu0 0.0
    %1953 = vmatprep.subr.mxu0 0.0
    %1954 = vmatpush1.msra.mxu0 0.0
    %1955 = vmatprep.subr.mxu0 0.0
    %1956 = vmatpush1.msra.mxu0 0.0
    %1957 = vmatprep.subr.mxu0 0.0
    %1958 = vmatpush1.msra.mxu0 0.0
    %1959 = vmatprep.subr.mxu0 0.0
    %1960 = vmatpush1.msra.mxu0 0.0
    %1961 = vmatprep.subr.mxu0 0.0
    %1962 = vmatpush1.msra.mxu0 %v1923
    %1963 = vmatprep.subr.mxu0 0.0
    %1964 = vmatpush2.msra.mxu0 0.0
    %1965 = vmatprep.subr.mxu0 0.0
    %1966 = vmatpush2.msra.mxu0 0.0
    %1967 = vmatprep.subr.mxu0 0.0
    %1968 = vmatpush2.msra.mxu0 0.0
    %1969 = vmatprep.subr.mxu0 0.0
    %1970 = vmatpush2.msra.mxu0 0.0
    %1971 = vmatprep.subr.mxu0 0.0
    %1972 = vmatpush2.msra.mxu0 0.0
    %1973 = vmatprep.subr.mxu0 0.0
    %1974 = vmatpush2.msra.mxu0 0.0
    %1975 = vmatprep.subr.mxu0 0.0
    %1976 = vmatpush2.msra.mxu0 0.0
    %1977 = vmatprep.subr.mxu0 0.0
    %1978 = vmatpush2.msra.mxu0 0.0
    %1979 = vmatprep.subr.mxu0 0.0
    %1980 = vmatpush2.msra.mxu0 0.0
    %1981 = vmatprep.subr.mxu0 0.0
    %1982 = vmatpush2.msra.mxu0 0.0
    %1983 = vmatprep.subr.mxu0 0.0
    %1984 = vmatpush2.msra.mxu0 0.0
    %1985 = vmatprep.subr.mxu0 0.0
    %1986 = vmatpush2.msra.mxu0 0.0
    %1987 = vmatprep.subr.mxu0 0.0
    %1988 = vmatpush2.msra.mxu0 0.0
    %1989 = vmatprep.subr.mxu0 0.0
    %1990 = vmatpush2.msra.mxu0 0.0
    %1991 = vmatprep.subr.mxu0 0.0
    %1992 = vmatpush2.msra.mxu0 0.0
    %1993 = vmatprep.subr.mxu0 0.0
    %1994 = vmatpush2.msra.mxu0 0.0
    %1995 = vmatprep.mubr.f32.mxu0 0.0
    %1996 = vmatmul.mubr.f32.gmra.mxu0 %v1929
    %v1997 = vpop.f32.mrf.mxu0
    %v1998 = vadd.f32 0.0, %v1997
    %v1999 = vpop.f32.mrf.mxu0
    %2000 = vdwg.mxu0
    %v2001 = vadd.f32 %v1818, %v1998
    %v2002 = vadd.s32 %v138, 3
    %vm2003 = vcmp.eq.s32.totalorder %v135, %v2002
    %vm2004 = vcmp.eq.s32.totalorder %v136, %v2002
    %vm2005 = vcmp.eq.s32.totalorder %v719, %v2002
    %vm2006 = vcmp.eq.s32.totalorder %v720, %v2002
    %v2007 = vsel %vm2003, 1, 0
    %v2008 = vsel %vm2004, 1, 0
    %v2009 = vsel %vm2005, 1, 0
    %v2010 = vsel %vm2006, 1, 0
    %v2011 = vcvt.s32.f32 %v2007
    %v2012 = vcvt.s32.f32 %v2008
    %v2013 = vcvt.s32.f32 %v2009
    %v2014 = vcvt.s32.f32 %v2010
    %v2015 = vsel %vm147, %v2011, 0.0
    %v2016 = vsel %vm147, %v2012, 0.0
    %v2017 = vsel %vm147, %v2013, 0.0
    %v2018 = vsel %vm147, %v2014, 0.0
    %2023 = vrot.lane.b32.xlu0 %v2011, 32
    %v2024 = vpop.permute.xlu0 %2023
    %2025 = vrot.lane.b32.xlu0 %v2012, 32
    %v2026 = vpop.permute.xlu0 %2025
    %2027 = vrot.lane.b32.xlu0 %v2013, 32
    %v2028 = vpop.permute.xlu0 %2027
    %2029 = vrot.lane.b32.xlu0 %v2014, 32
    %v2030 = vpop.permute.xlu0 %2029
    %v2035 = vsel %vm147, 0.0, %v2024
    %v2036 = vsel %vm147, 0.0, %v2026
    %v2037 = vsel %vm147, 0.0, %v2028
    %v2038 = vsel %vm147, 0.0, %v2030
    %2039 = vmatprep.subr.mxu0 0.0
    %2040 = vmatpush1.msra.mxu0 0.0
    %2041 = vmatprep.subr.mxu0 0.0
    %2042 = vmatpush1.msra.mxu0 0.0
    %2043 = vmatprep.subr.mxu0 0.0
    %2044 = vmatpush1.msra.mxu0 0.0
    %2045 = vmatprep.subr.mxu0 0.0
    %2046 = vmatpush1.msra.mxu0 0.0
    %2047 = vmatprep.subr.mxu0 0.0
    %2048 = vmatpush1.msra.mxu0 0.0
    %2049 = vmatprep.subr.mxu0 0.0
    %2050 = vmatpush1.msra.mxu0 0.0
    %2051 = vmatprep.subr.mxu0 0.0
    %2052 = vmatpush1.msra.mxu0 0.0
    %2053 = vmatprep.subr.mxu0 0.0
    %2054 = vmatpush1.msra.mxu0 0.0
    %2055 = vmatprep.subr.mxu0 0.0
    %2056 = vmatpush1.msra.mxu0 %v2038
    %2057 = vmatprep.subr.mxu0 0.0
    %2058 = vmatpush1.msra.mxu0 %v2037
    %2059 = vmatprep.subr.mxu0 0.0
    %2060 = vmatpush1.msra.mxu0 %v2036
    %2061 = vmatprep.subr.mxu0 0.0
    %2062 = vmatpush1.msra.mxu0 %v2035
    %2063 = vmatprep.subr.mxu0 0.0
    %2064 = vmatpush1.msra.mxu0 %v2018
    %2065 = vmatprep.subr.mxu0 0.0
    %2066 = vmatpush1.msra.mxu0 %v2017
    %2067 = vmatprep.subr.mxu0 0.0
    %2068 = vmatpush1.msra.mxu0 %v2016
    %2069 = vmatprep.subr.mxu0 0.0
    %2070 = vmatpush1.msra.mxu0 %v2015
    %2071 = vmatprep.subr.mxu0 0.0
    %2072 = vmatpush2.msra.mxu0 0.0
    %2073 = vmatprep.subr.mxu0 0.0
    %2074 = vmatpush2.msra.mxu0 0.0
    %2075 = vmatprep.subr.mxu0 0.0
    %2076 = vmatpush2.msra.mxu0 0.0
    %2077 = vmatprep.subr.mxu0 0.0
    %2078 = vmatpush2.msra.mxu0 0.0
    %2079 = vmatprep.subr.mxu0 0.0
    %2080 = vmatpush2.msra.mxu0 0.0
    %2081 = vmatprep.subr.mxu0 0.0
    %2082 = vmatpush2.msra.mxu0 0.0
    %2083 = vmatprep.subr.mxu0 0.0
    %2084 = vmatpush2.msra.mxu0 0.0
    %2085 = vmatprep.subr.mxu0 0.0
    %2086 = vmatpush2.msra.mxu0 0.0
    %2087 = vmatprep.subr.mxu0 0.0
    %2088 = vmatpush2.msra.mxu0 0.0
    %2089 = vmatprep.subr.mxu0 0.0
    %2090 = vmatpush2.msra.mxu0 0.0
    %2091 = vmatprep.subr.mxu0 0.0
    %2092 = vmatpush2.msra.mxu0 0.0
    %2093 = vmatprep.subr.mxu0 0.0
    %2094 = vmatpush2.msra.mxu0 0.0
    %2095 = vmatprep.subr.mxu0 0.0
    %2096 = vmatpush2.msra.mxu0 0.0
    %2097 = vmatprep.subr.mxu0 0.0
    %2098 = vmatpush2.msra.mxu0 0.0
    %2099 = vmatprep.subr.mxu0 0.0
    %2100 = vmatpush2.msra.mxu0 0.0
    %2101 = vmatprep.subr.mxu0 0.0
    %2102 = vmatpush2.msra.mxu0 0.0
    %2103 = vmatprep.mubr.f32.mxu0 0.0
    %2104 = vmatmul.mubr.f32.gmra.mxu0 %v760
    %v2105 = vpop.f32.mrf.mxu0
    %v2106 = vadd.f32 0.0, %v2105
    %v2107 = vpop.f32.mrf.mxu0
    %2108 = vdwg.mxu0
    %s2109 = scalar_lea.vmem %s6, 28
    %v2110 = vld [vmem:[%s2109] sm:$0xf]
    %v2112 = vsel %vm60, %v2110, 0
    %2114 = vmatprep.subr.mxu0 0.0
    %2115 = vmatpush1.msra.mxu0 0.0
    %2116 = vmatprep.subr.mxu0 0.0
    %2117 = vmatpush1.msra.mxu0 0.0
    %2118 = vmatprep.subr.mxu0 0.0
    %2119 = vmatpush1.msra.mxu0 0.0
    %2120 = vmatprep.subr.mxu0 0.0
    %2121 = vmatpush1.msra.mxu0 0.0
    %2122 = vmatprep.subr.mxu0 0.0
    %2123 = vmatpush1.msra.mxu0 0.0
    %2124 = vmatprep.subr.mxu0 0.0
    %2125 = vmatpush1.msra.mxu0 0.0
    %2126 = vmatprep.subr.mxu0 0.0
    %2127 = vmatpush1.msra.mxu0 0.0
    %2128 = vmatprep.subr.mxu0 0.0
    %2129 = vmatpush1.msra.mxu0 0.0
    %2130 = vmatprep.subr.mxu0 0.0
    %2131 = vmatpush1.msra.mxu0 0.0
    %2132 = vmatprep.subr.mxu0 0.0
    %2133 = vmatpush1.msra.mxu0 0.0
    %2134 = vmatprep.subr.mxu0 0.0
    %2135 = vmatpush1.msra.mxu0 0.0
    %2136 = vmatprep.subr.mxu0 0.0
    %2137 = vmatpush1.msra.mxu0 0.0
    %2138 = vmatprep.subr.mxu0 0.0
    %2139 = vmatpush1.msra.mxu0 0.0
    %2140 = vmatprep.subr.mxu0 0.0
    %2141 = vmatpush1.msra.mxu0 0.0
    %2142 = vmatprep.subr.mxu0 0.0
    %2143 = vmatpush1.msra.mxu0 0.0
    %2144 = vmatprep.subr.mxu0 0.0
    %2145 = vmatpush1.msra.mxu0 %v2106
    %2146 = vmatprep.subr.mxu0 0.0
    %2147 = vmatpush2.msra.mxu0 0.0
    %2148 = vmatprep.subr.mxu0 0.0
    %2149 = vmatpush2.msra.mxu0 0.0
    %2150 = vmatprep.subr.mxu0 0.0
    %2151 = vmatpush2.msra.mxu0 0.0
    %2152 = vmatprep.subr.mxu0 0.0
    %2153 = vmatpush2.msra.mxu0 0.0
    %2154 = vmatprep.subr.mxu0 0.0
    %2155 = vmatpush2.msra.mxu0 0.0
    %2156 = vmatprep.subr.mxu0 0.0
    %2157 = vmatpush2.msra.mxu0 0.0
    %2158 = vmatprep.subr.mxu0 0.0
    %2159 = vmatpush2.msra.mxu0 0.0
    %2160 = vmatprep.subr.mxu0 0.0
    %2161 = vmatpush2.msra.mxu0 0.0
    %2162 = vmatprep.subr.mxu0 0.0
    %2163 = vmatpush2.msra.mxu0 0.0
    %2164 = vmatprep.subr.mxu0 0.0
    %2165 = vmatpush2.msra.mxu0 0.0
    %2166 = vmatprep.subr.mxu0 0.0
    %2167 = vmatpush2.msra.mxu0 0.0
    %2168 = vmatprep.subr.mxu0 0.0
    %2169 = vmatpush2.msra.mxu0 0.0
    %2170 = vmatprep.subr.mxu0 0.0
    %2171 = vmatpush2.msra.mxu0 0.0
    %2172 = vmatprep.subr.mxu0 0.0
    %2173 = vmatpush2.msra.mxu0 0.0
    %2174 = vmatprep.subr.mxu0 0.0
    %2175 = vmatpush2.msra.mxu0 0.0
    %2176 = vmatprep.subr.mxu0 0.0
    %2177 = vmatpush2.msra.mxu0 0.0
    %2178 = vmatprep.mubr.f32.mxu0 0.0
    %2179 = vmatmul.mubr.f32.gmra.mxu0 %v2112
    %v2180 = vpop.f32.mrf.mxu0
    %v2181 = vadd.f32 0.0, %v2180
    %v2182 = vpop.f32.mrf.mxu0
    %2183 = vdwg.mxu0
    %v2184 = vadd.f32 %v2001, %v2181
    %v2185 = vadd.s32 %v138, 4
    %vm2186 = vcmp.eq.s32.totalorder %v135, %v2185
    %vm2187 = vcmp.eq.s32.totalorder %v136, %v2185
    %vm2188 = vcmp.eq.s32.totalorder %v719, %v2185
    %vm2189 = vcmp.eq.s32.totalorder %v720, %v2185
    %v2190 = vsel %vm2186, 1, 0
    %v2191 = vsel %vm2187, 1, 0
    %v2192 = vsel %vm2188, 1, 0
    %v2193 = vsel %vm2189, 1, 0
    %v2194 = vcvt.s32.f32 %v2190
    %v2195 = vcvt.s32.f32 %v2191
    %v2196 = vcvt.s32.f32 %v2192
    %v2197 = vcvt.s32.f32 %v2193
    %v2198 = vsel %vm147, %v2194, 0.0
    %v2199 = vsel %vm147, %v2195, 0.0
    %v2200 = vsel %vm147, %v2196, 0.0
    %v2201 = vsel %vm147, %v2197, 0.0
    %2206 = vrot.lane.b32.xlu0 %v2194, 32
    %v2207 = vpop.permute.xlu0 %2206
    %2208 = vrot.lane.b32.xlu0 %v2195, 32
    %v2209 = vpop.permute.xlu0 %2208
    %2210 = vrot.lane.b32.xlu0 %v2196, 32
    %v2211 = vpop.permute.xlu0 %2210
    %2212 = vrot.lane.b32.xlu0 %v2197, 32
    %v2213 = vpop.permute.xlu0 %2212
    %v2218 = vsel %vm147, 0.0, %v2207
    %v2219 = vsel %vm147, 0.0, %v2209
    %v2220 = vsel %vm147, 0.0, %v2211
    %v2221 = vsel %vm147, 0.0, %v2213
    %2222 = vmatprep.subr.mxu0 0.0
    %2223 = vmatpush1.msra.mxu0 0.0
    %2224 = vmatprep.subr.mxu0 0.0
    %2225 = vmatpush1.msra.mxu0 0.0
    %2226 = vmatprep.subr.mxu0 0.0
    %2227 = vmatpush1.msra.mxu0 0.0
    %2228 = vmatprep.subr.mxu0 0.0
    %2229 = vmatpush1.msra.mxu0 0.0
    %2230 = vmatprep.subr.mxu0 0.0
    %2231 = vmatpush1.msra.mxu0 0.0
    %2232 = vmatprep.subr.mxu0 0.0
    %2233 = vmatpush1.msra.mxu0 0.0
    %2234 = vmatprep.subr.mxu0 0.0
    %2235 = vmatpush1.msra.mxu0 0.0
    %2236 = vmatprep.subr.mxu0 0.0
    %2237 = vmatpush1.msra.mxu0 0.0
    %2238 = vmatprep.subr.mxu0 0.0
    %2239 = vmatpush1.msra.mxu0 %v2221
    %2240 = vmatprep.subr.mxu0 0.0
    %2241 = vmatpush1.msra.mxu0 %v2220
    %2242 = vmatprep.subr.mxu0 0.0
    %2243 = vmatpush1.msra.mxu0 %v2219
    %2244 = vmatprep.subr.mxu0 0.0
    %2245 = vmatpush1.msra.mxu0 %v2218
    %2246 = vmatprep.subr.mxu0 0.0
    %2247 = vmatpush1.msra.mxu0 %v2201
    %2248 = vmatprep.subr.mxu0 0.0
    %2249 = vmatpush1.msra.mxu0 %v2200
    %2250 = vmatprep.subr.mxu0 0.0
    %2251 = vmatpush1.msra.mxu0 %v2199
    %2252 = vmatprep.subr.mxu0 0.0
    %2253 = vmatpush1.msra.mxu0 %v2198
    %2254 = vmatprep.subr.mxu0 0.0
    %2255 = vmatpush2.msra.mxu0 0.0
    %2256 = vmatprep.subr.mxu0 0.0
    %2257 = vmatpush2.msra.mxu0 0.0
    %2258 = vmatprep.subr.mxu0 0.0
    %2259 = vmatpush2.msra.mxu0 0.0
    %2260 = vmatprep.subr.mxu0 0.0
    %2261 = vmatpush2.msra.mxu0 0.0
    %2262 = vmatprep.subr.mxu0 0.0
    %2263 = vmatpush2.msra.mxu0 0.0
    %2264 = vmatprep.subr.mxu0 0.0
    %2265 = vmatpush2.msra.mxu0 0.0
    %2266 = vmatprep.subr.mxu0 0.0
    %2267 = vmatpush2.msra.mxu0 0.0
    %2268 = vmatprep.subr.mxu0 0.0
    %2269 = vmatpush2.msra.mxu0 0.0
    %2270 = vmatprep.subr.mxu0 0.0
    %2271 = vmatpush2.msra.mxu0 0.0
    %2272 = vmatprep.subr.mxu0 0.0
    %2273 = vmatpush2.msra.mxu0 0.0
    %2274 = vmatprep.subr.mxu0 0.0
    %2275 = vmatpush2.msra.mxu0 0.0
    %2276 = vmatprep.subr.mxu0 0.0
    %2277 = vmatpush2.msra.mxu0 0.0
    %2278 = vmatprep.subr.mxu0 0.0
    %2279 = vmatpush2.msra.mxu0 0.0
    %2280 = vmatprep.subr.mxu0 0.0
    %2281 = vmatpush2.msra.mxu0 0.0
    %2282 = vmatprep.subr.mxu0 0.0
    %2283 = vmatpush2.msra.mxu0 0.0
    %2284 = vmatprep.subr.mxu0 0.0
    %2285 = vmatpush2.msra.mxu0 0.0
    %2286 = vmatprep.mubr.f32.mxu0 0.0
    %2287 = vmatmul.mubr.f32.gmra.mxu0 %v760
    %v2288 = vpop.f32.mrf.mxu0
    %v2289 = vadd.f32 0.0, %v2288
    %v2290 = vpop.f32.mrf.mxu0
    %2291 = vdwg.mxu0
    %s2292 = scalar_lea.vmem %s6, 32
    %v2293 = vld [vmem:[%s2292] sm:$0xf]
    %v2295 = vsel %vm60, %v2293, 0
    %2297 = vmatprep.subr.mxu0 0.0
    %2298 = vmatpush1.msra.mxu0 0.0
    %2299 = vmatprep.subr.mxu0 0.0
    %2300 = vmatpush1.msra.mxu0 0.0
    %2301 = vmatprep.subr.mxu0 0.0
    %2302 = vmatpush1.msra.mxu0 0.0
    %2303 = vmatprep.subr.mxu0 0.0
    %2304 = vmatpush1.msra.mxu0 0.0
    %2305 = vmatprep.subr.mxu0 0.0
    %2306 = vmatpush1.msra.mxu0 0.0
    %2307 = vmatprep.subr.mxu0 0.0
    %2308 = vmatpush1.msra.mxu0 0.0
    %2309 = vmatprep.subr.mxu0 0.0
    %2310 = vmatpush1.msra.mxu0 0.0
    %2311 = vmatprep.subr.mxu0 0.0
    %2312 = vmatpush1.msra.mxu0 0.0
    %2313 = vmatprep.subr.mxu0 0.0
    %2314 = vmatpush1.msra.mxu0 0.0
    %2315 = vmatprep.subr.mxu0 0.0
    %2316 = vmatpush1.msra.mxu0 0.0
    %2317 = vmatprep.subr.mxu0 0.0
    %2318 = vmatpush1.msra.mxu0 0.0
    %2319 = vmatprep.subr.mxu0 0.0
    %2320 = vmatpush1.msra.mxu0 0.0
    %2321 = vmatprep.subr.mxu0 0.0
    %2322 = vmatpush1.msra.mxu0 0.0
    %2323 = vmatprep.subr.mxu0 0.0
    %2324 = vmatpush1.msra.mxu0 0.0
    %2325 = vmatprep.subr.mxu0 0.0
    %2326 = vmatpush1.msra.mxu0 0.0
    %2327 = vmatprep.subr.mxu0 0.0
    %2328 = vmatpush1.msra.mxu0 %v2289
    %2329 = vmatprep.subr.mxu0 0.0
    %2330 = vmatpush2.msra.mxu0 0.0
    %2331 = vmatprep.subr.mxu0 0.0
    %2332 = vmatpush2.msra.mxu0 0.0
    %2333 = vmatprep.subr.mxu0 0.0
    %2334 = vmatpush2.msra.mxu0 0.0
    %2335 = vmatprep.subr.mxu0 0.0
    %2336 = vmatpush2.msra.mxu0 0.0
    %2337 = vmatprep.subr.mxu0 0.0
    %2338 = vmatpush2.msra.mxu0 0.0
    %2339 = vmatprep.subr.mxu0 0.0
    %2340 = vmatpush2.msra.mxu0 0.0
    %2341 = vmatprep.subr.mxu0 0.0
    %2342 = vmatpush2.msra.mxu0 0.0
    %2343 = vmatprep.subr.mxu0 0.0
    %2344 = vmatpush2.msra.mxu0 0.0
    %2345 = vmatprep.subr.mxu0 0.0
    %2346 = vmatpush2.msra.mxu0 0.0
    %2347 = vmatprep.subr.mxu0 0.0
    %2348 = vmatpush2.msra.mxu0 0.0
    %2349 = vmatprep.subr.mxu0 0.0
    %2350 = vmatpush2.msra.mxu0 0.0
    %2351 = vmatprep.subr.mxu0 0.0
    %2352 = vmatpush2.msra.mxu0 0.0
    %2353 = vmatprep.subr.mxu0 0.0
    %2354 = vmatpush2.msra.mxu0 0.0
    %2355 = vmatprep.subr.mxu0 0.0
    %2356 = vmatpush2.msra.mxu0 0.0
    %2357 = vmatprep.subr.mxu0 0.0
    %2358 = vmatpush2.msra.mxu0 0.0
    %2359 = vmatprep.subr.mxu0 0.0
    %2360 = vmatpush2.msra.mxu0 0.0
    %2361 = vmatprep.mubr.f32.mxu0 0.0
    %2362 = vmatmul.mubr.f32.gmra.mxu0 %v2295
    %v2363 = vpop.f32.mrf.mxu0
    %v2364 = vadd.f32 0.0, %v2363
    %v2365 = vpop.f32.mrf.mxu0
    %2366 = vdwg.mxu0
    %v2367 = vadd.f32 %v2184, %v2364
    %vm2368 = vcmask 519168
    %v2369 = vsel %vm2368, %v2367, 0.0
    %2370 = vadd.xlane.f32.xlu0 %v2369
    %v2371 = vpop.xlane.xlu0 %2370
    %v2372 = vrcp.pop 64.0
    %v2373 = vmul.f32 %v2371, %v2372
    %v2374 = vsub.f32 %v2367, %v2373
    %v2375 = vmul.f32 %v2374, %v2374
    %v2376 = vsel %vm2368, %v2375, 0.0
    %2377 = vadd.xlane.f32.xlu0 %v2376
    %v2378 = vpop.xlane.xlu0 %2377
    %v2379 = vmul.f32 %v2378, %v2372
    %v2380 = vadd.f32 %v2379, 1e-05
    %v2381 = vrsqrt.pop %v2380
    %v2382 = vmul.f32 %v2374, %v2381
    %v2383 = vld [vmem:[%s7] sm:$0xf]
    %2385 = vset.pattern.permute.xlu0 0
    %2386 = vperm.xlu0 %2385, %v2383
    %v2387 = vpop.permute.xlu0 %2386
    %v2389 = vmul.f32 %v2382, %v2387
    %v2390 = vld [vmem:[%s8] sm:$0xf]
    %2392 = vset.pattern.permute.xlu0 0
    %2393 = vperm.xlu0 %2392, %v2390
    %v2394 = vpop.permute.xlu0 %2393
    %v2396 = vadd.f32 %v2389, %v2394
    %vm2397 = vcmp.ge.f32.partialorder %v2396, 0.0
    %v2398 = vmul.f32 %v2396, 0.2
    %v2399 = vsel %vm2397, %v2396, %v2398
    %v2401 = vsel %vm758, %v2399, 0
    %2403 = vmatprep.subr.mxu0 0.0
    %2404 = vmatpush1.msra.mxu0 0.0
    %2405 = vmatprep.subr.mxu0 0.0
    %2406 = vmatpush1.msra.mxu0 0.0
    %2407 = vmatprep.subr.mxu0 0.0
    %2408 = vmatpush1.msra.mxu0 0.0
    %2409 = vmatprep.subr.mxu0 0.0
    %2410 = vmatpush1.msra.mxu0 0.0
    %2411 = vmatprep.subr.mxu0 0.0
    %2412 = vmatpush1.msra.mxu0 0.0
    %2413 = vmatprep.subr.mxu0 0.0
    %2414 = vmatpush1.msra.mxu0 0.0
    %2415 = vmatprep.subr.mxu0 0.0
    %2416 = vmatpush1.msra.mxu0 0.0
    %2417 = vmatprep.subr.mxu0 0.0
    %2418 = vmatpush1.msra.mxu0 0.0
    %2419 = vmatprep.subr.mxu0 0.0
    %2420 = vmatpush1.msra.mxu0 %v757
    %2421 = vmatprep.subr.mxu0 0.0
    %2422 = vmatpush1.msra.mxu0 %v756
    %2423 = vmatprep.subr.mxu0 0.0
    %2424 = vmatpush1.msra.mxu0 %v755
    %2425 = vmatprep.subr.mxu0 0.0
    %2426 = vmatpush1.msra.mxu0 %v754
    %2427 = vmatprep.subr.mxu0 0.0
    %2428 = vmatpush1.msra.mxu0 %v737
    %2429 = vmatprep.subr.mxu0 0.0
    %2430 = vmatpush1.msra.mxu0 %v736
    %2431 = vmatprep.subr.mxu0 0.0
    %2432 = vmatpush1.msra.mxu0 %v735
    %2433 = vmatprep.subr.mxu0 0.0
    %2434 = vmatpush1.msra.mxu0 %v734
    %2435 = vmatprep.subr.mxu0 0.0
    %2436 = vmatpush2.msra.mxu0 0.0
    %2437 = vmatprep.subr.mxu0 0.0
    %2438 = vmatpush2.msra.mxu0 0.0
    %2439 = vmatprep.subr.mxu0 0.0
    %2440 = vmatpush2.msra.mxu0 0.0
    %2441 = vmatprep.subr.mxu0 0.0
    %2442 = vmatpush2.msra.mxu0 0.0
    %2443 = vmatprep.subr.mxu0 0.0
    %2444 = vmatpush2.msra.mxu0 0.0
    %2445 = vmatprep.subr.mxu0 0.0
    %2446 = vmatpush2.msra.mxu0 0.0
    %2447 = vmatprep.subr.mxu0 0.0
    %2448 = vmatpush2.msra.mxu0 0.0
    %2449 = vmatprep.subr.mxu0 0.0
    %2450 = vmatpush2.msra.mxu0 0.0
    %2451 = vmatprep.subr.mxu0 0.0
    %2452 = vmatpush2.msra.mxu0 0.0
    %2453 = vmatprep.subr.mxu0 0.0
    %2454 = vmatpush2.msra.mxu0 0.0
    %2455 = vmatprep.subr.mxu0 0.0
    %2456 = vmatpush2.msra.mxu0 0.0
    %2457 = vmatprep.subr.mxu0 0.0
    %2458 = vmatpush2.msra.mxu0 0.0
    %2459 = vmatprep.subr.mxu0 0.0
    %2460 = vmatpush2.msra.mxu0 0.0
    %2461 = vmatprep.subr.mxu0 0.0
    %2462 = vmatpush2.msra.mxu0 0.0
    %2463 = vmatprep.subr.mxu0 0.0
    %2464 = vmatpush2.msra.mxu0 0.0
    %2465 = vmatprep.subr.mxu0 0.0
    %2466 = vmatpush2.msra.mxu0 0.0
    %2467 = vmatprep.mubr.f32.mxu0 0.0
    %2468 = vmatmul.mubr.f32.gmra.mxu0 %v2401
    %v2469 = vpop.f32.mrf.mxu0
    %v2470 = vadd.f32 0.0, %v2469
    %v2471 = vpop.f32.mrf.mxu0
    %2472 = vdwg.mxu0
    %v2473 = vld [vmem:[%s9] sm:$0xf]
    %2474 = vmatprep.subr.mxu0 0.0
    %2475 = vmatpush1.msra.mxu0 0.0
    %2476 = vmatprep.subr.mxu0 0.0
    %2477 = vmatpush1.msra.mxu0 0.0
    %2478 = vmatprep.subr.mxu0 0.0
    %2479 = vmatpush1.msra.mxu0 0.0
    %2480 = vmatprep.subr.mxu0 0.0
    %2481 = vmatpush1.msra.mxu0 0.0
    %2482 = vmatprep.subr.mxu0 0.0
    %2483 = vmatpush1.msra.mxu0 0.0
    %2484 = vmatprep.subr.mxu0 0.0
    %2485 = vmatpush1.msra.mxu0 0.0
    %2486 = vmatprep.subr.mxu0 0.0
    %2487 = vmatpush1.msra.mxu0 0.0
    %2488 = vmatprep.subr.mxu0 0.0
    %2489 = vmatpush1.msra.mxu0 0.0
    %2490 = vmatprep.subr.mxu0 0.0
    %2491 = vmatpush1.msra.mxu0 %v869
    %2492 = vmatprep.subr.mxu0 0.0
    %2493 = vmatpush1.msra.mxu0 %v868
    %2494 = vmatprep.subr.mxu0 0.0
    %2495 = vmatpush1.msra.mxu0 %v867
    %2496 = vmatprep.subr.mxu0 0.0
    %2497 = vmatpush1.msra.mxu0 %v866
    %2498 = vmatprep.subr.mxu0 0.0
    %2499 = vmatpush1.msra.mxu0 %v849
    %2500 = vmatprep.subr.mxu0 0.0
    %2501 = vmatpush1.msra.mxu0 %v848
    %2502 = vmatprep.subr.mxu0 0.0
    %2503 = vmatpush1.msra.mxu0 %v847
    %2504 = vmatprep.subr.mxu0 0.0
    %2505 = vmatpush1.msra.mxu0 %v846
    %2506 = vmatprep.subr.mxu0 0.0
    %2507 = vmatpush2.msra.mxu0 0.0
    %2508 = vmatprep.subr.mxu0 0.0
    %2509 = vmatpush2.msra.mxu0 0.0
    %2510 = vmatprep.subr.mxu0 0.0
    %2511 = vmatpush2.msra.mxu0 0.0
    %2512 = vmatprep.subr.mxu0 0.0
    %2513 = vmatpush2.msra.mxu0 0.0
    %2514 = vmatprep.subr.mxu0 0.0
    %2515 = vmatpush2.msra.mxu0 0.0
    %2516 = vmatprep.subr.mxu0 0.0
    %2517 = vmatpush2.msra.mxu0 0.0
    %2518 = vmatprep.subr.mxu0 0.0
    %2519 = vmatpush2.msra.mxu0 0.0
    %2520 = vmatprep.subr.mxu0 0.0
    %2521 = vmatpush2.msra.mxu0 0.0
    %2522 = vmatprep.subr.mxu0 0.0
    %2523 = vmatpush2.msra.mxu0 0.0
    %2524 = vmatprep.subr.mxu0 0.0
    %2525 = vmatpush2.msra.mxu0 0.0
    %2526 = vmatprep.subr.mxu0 0.0
    %2527 = vmatpush2.msra.mxu0 0.0
    %2528 = vmatprep.subr.mxu0 0.0
    %2529 = vmatpush2.msra.mxu0 0.0
    %2530 = vmatprep.subr.mxu0 0.0
    %2531 = vmatpush2.msra.mxu0 0.0
    %2532 = vmatprep.subr.mxu0 0.0
    %2533 = vmatpush2.msra.mxu0 0.0
    %2534 = vmatprep.subr.mxu0 0.0
    %2535 = vmatpush2.msra.mxu0 0.0
    %2536 = vmatprep.subr.mxu0 0.0
    %2537 = vmatpush2.msra.mxu0 0.0
    %2538 = vmatprep.mubr.f32.mxu0 0.0
    %2539 = vmatmul.mubr.f32.gmra.mxu0 %v2401
    %v2540 = vpop.f32.mrf.mxu0
    %v2541 = vadd.f32 0.0, %v2540
    %v2542 = vpop.f32.mrf.mxu0
    %2543 = vdwg.mxu0
    %s2544 = scalar_lea.vmem %s9, 4
    %v2545 = vld [vmem:[%s2544] sm:$0xf]
    %v2547 = vsel %vm409, %v2545, 0
    %v2550 = vsel %vm413, %v2541, 0
    %2552 = vmatprep.subr.mxu0 0.0
    %2553 = vmatpush1.msra.mxu0 0.0
    %2554 = vmatprep.subr.mxu0 0.0
    %2555 = vmatpush1.msra.mxu0 0.0
    %2556 = vmatprep.subr.mxu0 0.0
    %2557 = vmatpush1.msra.mxu0 0.0
    %2558 = vmatprep.subr.mxu0 0.0
    %2559 = vmatpush1.msra.mxu0 0.0
    %2560 = vmatprep.subr.mxu0 0.0
    %2561 = vmatpush1.msra.mxu0 0.0
    %2562 = vmatprep.subr.mxu0 0.0
    %2563 = vmatpush1.msra.mxu0 0.0
    %2564 = vmatprep.subr.mxu0 0.0
    %2565 = vmatpush1.msra.mxu0 0.0
    %2566 = vmatprep.subr.mxu0 0.0
    %2567 = vmatpush1.msra.mxu0 0.0
    %2568 = vmatprep.subr.mxu0 0.0
    %2569 = vmatpush1.msra.mxu0 0.0
    %2570 = vmatprep.subr.mxu0 0.0
    %2571 = vmatpush1.msra.mxu0 0.0
    %2572 = vmatprep.subr.mxu0 0.0
    %2573 = vmatpush1.msra.mxu0 0.0
    %2574 = vmatprep.subr.mxu0 0.0
    %2575 = vmatpush1.msra.mxu0 0.0
    %2576 = vmatprep.subr.mxu0 0.0
    %2577 = vmatpush1.msra.mxu0 0.0
    %2578 = vmatprep.subr.mxu0 0.0
    %2579 = vmatpush1.msra.mxu0 0.0
    %2580 = vmatprep.subr.mxu0 0.0
    %2581 = vmatpush1.msra.mxu0 0.0
    %2582 = vmatprep.subr.mxu0 0.0
    %2583 = vmatpush1.msra.mxu0 %v2550
    %2584 = vmatprep.subr.mxu0 0.0
    %2585 = vmatpush2.msra.mxu0 0.0
    %2586 = vmatprep.subr.mxu0 0.0
    %2587 = vmatpush2.msra.mxu0 0.0
    %2588 = vmatprep.subr.mxu0 0.0
    %2589 = vmatpush2.msra.mxu0 0.0
    %2590 = vmatprep.subr.mxu0 0.0
    %2591 = vmatpush2.msra.mxu0 0.0
    %2592 = vmatprep.subr.mxu0 0.0
    %2593 = vmatpush2.msra.mxu0 0.0
    %2594 = vmatprep.subr.mxu0 0.0
    %2595 = vmatpush2.msra.mxu0 0.0
    %2596 = vmatprep.subr.mxu0 0.0
    %2597 = vmatpush2.msra.mxu0 0.0
    %2598 = vmatprep.subr.mxu0 0.0
    %2599 = vmatpush2.msra.mxu0 0.0
    %2600 = vmatprep.subr.mxu0 0.0
    %2601 = vmatpush2.msra.mxu0 0.0
    %2602 = vmatprep.subr.mxu0 0.0
    %2603 = vmatpush2.msra.mxu0 0.0
    %2604 = vmatprep.subr.mxu0 0.0
    %2605 = vmatpush2.msra.mxu0 0.0
    %2606 = vmatprep.subr.mxu0 0.0
    %2607 = vmatpush2.msra.mxu0 0.0
    %2608 = vmatprep.subr.mxu0 0.0
    %2609 = vmatpush2.msra.mxu0 0.0
    %2610 = vmatprep.subr.mxu0 0.0
    %2611 = vmatpush2.msra.mxu0 0.0
    %2612 = vmatprep.subr.mxu0 0.0
    %2613 = vmatpush2.msra.mxu0 0.0
    %2614 = vmatprep.subr.mxu0 0.0
    %2615 = vmatpush2.msra.mxu0 0.0
    %2616 = vmatprep.mubr.f32.mxu0 0.0
    %2617 = vmatmul.mubr.f32.gmra.mxu0 %v2547
    %v2618 = vpop.f32.mrf.mxu0
    %v2619 = vadd.f32 0.0, %v2618
    %v2620 = vpop.f32.mrf.mxu0
    %2621 = vdwg.mxu0
    %v2623 = vsel %vm409, %v2473, 0
    %v2626 = vsel %vm413, %v2470, 0
    %2628 = vmatprep.subr.mxu0 0.0
    %2629 = vmatpush1.msra.mxu0 0.0
    %2630 = vmatprep.subr.mxu0 0.0
    %2631 = vmatpush1.msra.mxu0 0.0
    %2632 = vmatprep.subr.mxu0 0.0
    %2633 = vmatpush1.msra.mxu0 0.0
    %2634 = vmatprep.subr.mxu0 0.0
    %2635 = vmatpush1.msra.mxu0 0.0
    %2636 = vmatprep.subr.mxu0 0.0
    %2637 = vmatpush1.msra.mxu0 0.0
    %2638 = vmatprep.subr.mxu0 0.0
    %2639 = vmatpush1.msra.mxu0 0.0
    %2640 = vmatprep.subr.mxu0 0.0
    %2641 = vmatpush1.msra.mxu0 0.0
    %2642 = vmatprep.subr.mxu0 0.0
    %2643 = vmatpush1.msra.mxu0 0.0
    %2644 = vmatprep.subr.mxu0 0.0
    %2645 = vmatpush1.msra.mxu0 0.0
    %2646 = vmatprep.subr.mxu0 0.0
    %2647 = vmatpush1.msra.mxu0 0.0
    %2648 = vmatprep.subr.mxu0 0.0
    %2649 = vmatpush1.msra.mxu0 0.0
    %2650 = vmatprep.subr.mxu0 0.0
    %2651 = vmatpush1.msra.mxu0 0.0
    %2652 = vmatprep.subr.mxu0 0.0
    %2653 = vmatpush1.msra.mxu0 0.0
    %2654 = vmatprep.subr.mxu0 0.0
    %2655 = vmatpush1.msra.mxu0 0.0
    %2656 = vmatprep.subr.mxu0 0.0
    %2657 = vmatpush1.msra.mxu0 0.0
    %2658 = vmatprep.subr.mxu0 0.0
    %2659 = vmatpush1.msra.mxu0 %v2626
    %2660 = vmatprep.subr.mxu0 0.0
    %2661 = vmatpush2.msra.mxu0 0.0
    %2662 = vmatprep.subr.mxu0 0.0
    %2663 = vmatpush2.msra.mxu0 0.0
    %2664 = vmatprep.subr.mxu0 0.0
    %2665 = vmatpush2.msra.mxu0 0.0
    %2666 = vmatprep.subr.mxu0 0.0
    %2667 = vmatpush2.msra.mxu0 0.0
    %2668 = vmatprep.subr.mxu0 0.0
    %2669 = vmatpush2.msra.mxu0 0.0
    %2670 = vmatprep.subr.mxu0 0.0
    %2671 = vmatpush2.msra.mxu0 0.0
    %2672 = vmatprep.subr.mxu0 0.0
    %2673 = vmatpush2.msra.mxu0 0.0
    %2674 = vmatprep.subr.mxu0 0.0
    %2675 = vmatpush2.msra.mxu0 0.0
    %2676 = vmatprep.subr.mxu0 0.0
    %2677 = vmatpush2.msra.mxu0 0.0
    %2678 = vmatprep.subr.mxu0 0.0
    %2679 = vmatpush2.msra.mxu0 0.0
    %2680 = vmatprep.subr.mxu0 0.0
    %2681 = vmatpush2.msra.mxu0 0.0
    %2682 = vmatprep.subr.mxu0 0.0
    %2683 = vmatpush2.msra.mxu0 0.0
    %2684 = vmatprep.subr.mxu0 0.0
    %2685 = vmatpush2.msra.mxu0 0.0
    %2686 = vmatprep.subr.mxu0 0.0
    %2687 = vmatpush2.msra.mxu0 0.0
    %2688 = vmatprep.subr.mxu0 0.0
    %2689 = vmatpush2.msra.mxu0 0.0
    %2690 = vmatprep.subr.mxu0 0.0
    %2691 = vmatpush2.msra.mxu0 0.0
    %2692 = vmatprep.mubr.f32.mxu0 0.0
    %2693 = vmatmul.mubr.f32.gmra.mxu0 %v2623
    %v2694 = vpop.f32.mrf.mxu0
    %v2695 = vadd.f32 %v2619, %v2694
    %v2696 = vpop.f32.mrf.mxu0
    %2697 = vdwg.mxu0
    %2698 = vmatprep.subr.mxu0 0.0
    %2699 = vmatpush1.msra.mxu0 0.0
    %2700 = vmatprep.subr.mxu0 0.0
    %2701 = vmatpush1.msra.mxu0 0.0
    %2702 = vmatprep.subr.mxu0 0.0
    %2703 = vmatpush1.msra.mxu0 0.0
    %2704 = vmatprep.subr.mxu0 0.0
    %2705 = vmatpush1.msra.mxu0 0.0
    %2706 = vmatprep.subr.mxu0 0.0
    %2707 = vmatpush1.msra.mxu0 0.0
    %2708 = vmatprep.subr.mxu0 0.0
    %2709 = vmatpush1.msra.mxu0 0.0
    %2710 = vmatprep.subr.mxu0 0.0
    %2711 = vmatpush1.msra.mxu0 0.0
    %2712 = vmatprep.subr.mxu0 0.0
    %2713 = vmatpush1.msra.mxu0 0.0
    %2714 = vmatprep.subr.mxu0 0.0
    %2715 = vmatpush1.msra.mxu0 %v1124
    %2716 = vmatprep.subr.mxu0 0.0
    %2717 = vmatpush1.msra.mxu0 %v1123
    %2718 = vmatprep.subr.mxu0 0.0
    %2719 = vmatpush1.msra.mxu0 %v1122
    %2720 = vmatprep.subr.mxu0 0.0
    %2721 = vmatpush1.msra.mxu0 %v1121
    %2722 = vmatprep.subr.mxu0 0.0
    %2723 = vmatpush1.msra.mxu0 %v1104
    %2724 = vmatprep.subr.mxu0 0.0
    %2725 = vmatpush1.msra.mxu0 %v1103
    %2726 = vmatprep.subr.mxu0 0.0
    %2727 = vmatpush1.msra.mxu0 %v1102
    %2728 = vmatprep.subr.mxu0 0.0
    %2729 = vmatpush1.msra.mxu0 %v1101
    %2730 = vmatprep.subr.mxu0 0.0
    %2731 = vmatpush2.msra.mxu0 0.0
    %2732 = vmatprep.subr.mxu0 0.0
    %2733 = vmatpush2.msra.mxu0 0.0
    %2734 = vmatprep.subr.mxu0 0.0
    %2735 = vmatpush2.msra.mxu0 0.0
    %2736 = vmatprep.subr.mxu0 0.0
    %2737 = vmatpush2.msra.mxu0 0.0
    %2738 = vmatprep.subr.mxu0 0.0
    %2739 = vmatpush2.msra.mxu0 0.0
    %2740 = vmatprep.subr.mxu0 0.0
    %2741 = vmatpush2.msra.mxu0 0.0
    %2742 = vmatprep.subr.mxu0 0.0
    %2743 = vmatpush2.msra.mxu0 0.0
    %2744 = vmatprep.subr.mxu0 0.0
    %2745 = vmatpush2.msra.mxu0 0.0
    %2746 = vmatprep.subr.mxu0 0.0
    %2747 = vmatpush2.msra.mxu0 0.0
    %2748 = vmatprep.subr.mxu0 0.0
    %2749 = vmatpush2.msra.mxu0 0.0
    %2750 = vmatprep.subr.mxu0 0.0
    %2751 = vmatpush2.msra.mxu0 0.0
    %2752 = vmatprep.subr.mxu0 0.0
    %2753 = vmatpush2.msra.mxu0 0.0
    %2754 = vmatprep.subr.mxu0 0.0
    %2755 = vmatpush2.msra.mxu0 0.0
    %2756 = vmatprep.subr.mxu0 0.0
    %2757 = vmatpush2.msra.mxu0 0.0
    %2758 = vmatprep.subr.mxu0 0.0
    %2759 = vmatpush2.msra.mxu0 0.0
    %2760 = vmatprep.subr.mxu0 0.0
    %2761 = vmatpush2.msra.mxu0 0.0
    %2762 = vmatprep.mubr.f32.mxu0 0.0
    %2763 = vmatmul.mubr.f32.gmra.mxu0 %v2401
    %v2764 = vpop.f32.mrf.mxu0
    %v2765 = vadd.f32 0.0, %v2764
    %v2766 = vpop.f32.mrf.mxu0
    %2767 = vdwg.mxu0
    %s2768 = scalar_lea.vmem %s9, 8
    %v2769 = vld [vmem:[%s2768] sm:$0xf]
    %v2771 = vsel %vm409, %v2769, 0
    %v2774 = vsel %vm413, %v2765, 0
    %2776 = vmatprep.subr.mxu0 0.0
    %2777 = vmatpush1.msra.mxu0 0.0
    %2778 = vmatprep.subr.mxu0 0.0
    %2779 = vmatpush1.msra.mxu0 0.0
    %2780 = vmatprep.subr.mxu0 0.0
    %2781 = vmatpush1.msra.mxu0 0.0
    %2782 = vmatprep.subr.mxu0 0.0
    %2783 = vmatpush1.msra.mxu0 0.0
    %2784 = vmatprep.subr.mxu0 0.0
    %2785 = vmatpush1.msra.mxu0 0.0
    %2786 = vmatprep.subr.mxu0 0.0
    %2787 = vmatpush1.msra.mxu0 0.0
    %2788 = vmatprep.subr.mxu0 0.0
    %2789 = vmatpush1.msra.mxu0 0.0
    %2790 = vmatprep.subr.mxu0 0.0
    %2791 = vmatpush1.msra.mxu0 0.0
    %2792 = vmatprep.subr.mxu0 0.0
    %2793 = vmatpush1.msra.mxu0 0.0
    %2794 = vmatprep.subr.mxu0 0.0
    %2795 = vmatpush1.msra.mxu0 0.0
    %2796 = vmatprep.subr.mxu0 0.0
    %2797 = vmatpush1.msra.mxu0 0.0
    %2798 = vmatprep.subr.mxu0 0.0
    %2799 = vmatpush1.msra.mxu0 0.0
    %2800 = vmatprep.subr.mxu0 0.0
    %2801 = vmatpush1.msra.mxu0 0.0
    %2802 = vmatprep.subr.mxu0 0.0
    %2803 = vmatpush1.msra.mxu0 0.0
    %2804 = vmatprep.subr.mxu0 0.0
    %2805 = vmatpush1.msra.mxu0 0.0
    %2806 = vmatprep.subr.mxu0 0.0
    %2807 = vmatpush1.msra.mxu0 %v2774
    %2808 = vmatprep.subr.mxu0 0.0
    %2809 = vmatpush2.msra.mxu0 0.0
    %2810 = vmatprep.subr.mxu0 0.0
    %2811 = vmatpush2.msra.mxu0 0.0
    %2812 = vmatprep.subr.mxu0 0.0
    %2813 = vmatpush2.msra.mxu0 0.0
    %2814 = vmatprep.subr.mxu0 0.0
    %2815 = vmatpush2.msra.mxu0 0.0
    %2816 = vmatprep.subr.mxu0 0.0
    %2817 = vmatpush2.msra.mxu0 0.0
    %2818 = vmatprep.subr.mxu0 0.0
    %2819 = vmatpush2.msra.mxu0 0.0
    %2820 = vmatprep.subr.mxu0 0.0
    %2821 = vmatpush2.msra.mxu0 0.0
    %2822 = vmatprep.subr.mxu0 0.0
    %2823 = vmatpush2.msra.mxu0 0.0
    %2824 = vmatprep.subr.mxu0 0.0
    %2825 = vmatpush2.msra.mxu0 0.0
    %2826 = vmatprep.subr.mxu0 0.0
    %2827 = vmatpush2.msra.mxu0 0.0
    %2828 = vmatprep.subr.mxu0 0.0
    %2829 = vmatpush2.msra.mxu0 0.0
    %2830 = vmatprep.subr.mxu0 0.0
    %2831 = vmatpush2.msra.mxu0 0.0
    %2832 = vmatprep.subr.mxu0 0.0
    %2833 = vmatpush2.msra.mxu0 0.0
    %2834 = vmatprep.subr.mxu0 0.0
    %2835 = vmatpush2.msra.mxu0 0.0
    %2836 = vmatprep.subr.mxu0 0.0
    %2837 = vmatpush2.msra.mxu0 0.0
    %2838 = vmatprep.subr.mxu0 0.0
    %2839 = vmatpush2.msra.mxu0 0.0
    %2840 = vmatprep.mubr.f32.mxu0 0.0
    %2841 = vmatmul.mubr.f32.gmra.mxu0 %v2771
    %v2842 = vpop.f32.mrf.mxu0
    %v2843 = vadd.f32 0.0, %v2842
    %v2844 = vpop.f32.mrf.mxu0
    %2845 = vdwg.mxu0
    %v2846 = vadd.f32 %v2695, %v2843
    %2847 = vmatprep.subr.mxu0 0.0
    %2848 = vmatpush1.msra.mxu0 0.0
    %2849 = vmatprep.subr.mxu0 0.0
    %2850 = vmatpush1.msra.mxu0 0.0
    %2851 = vmatprep.subr.mxu0 0.0
    %2852 = vmatpush1.msra.mxu0 0.0
    %2853 = vmatprep.subr.mxu0 0.0
    %2854 = vmatpush1.msra.mxu0 0.0
    %2855 = vmatprep.subr.mxu0 0.0
    %2856 = vmatpush1.msra.mxu0 0.0
    %2857 = vmatprep.subr.mxu0 0.0
    %2858 = vmatpush1.msra.mxu0 0.0
    %2859 = vmatprep.subr.mxu0 0.0
    %2860 = vmatpush1.msra.mxu0 0.0
    %2861 = vmatprep.subr.mxu0 0.0
    %2862 = vmatpush1.msra.mxu0 0.0
    %2863 = vmatprep.subr.mxu0 0.0
    %2864 = vmatpush1.msra.mxu0 %v1307
    %2865 = vmatprep.subr.mxu0 0.0
    %2866 = vmatpush1.msra.mxu0 %v1306
    %2867 = vmatprep.subr.mxu0 0.0
    %2868 = vmatpush1.msra.mxu0 %v1305
    %2869 = vmatprep.subr.mxu0 0.0
    %2870 = vmatpush1.msra.mxu0 %v1304
    %2871 = vmatprep.subr.mxu0 0.0
    %2872 = vmatpush1.msra.mxu0 %v1287
    %2873 = vmatprep.subr.mxu0 0.0
    %2874 = vmatpush1.msra.mxu0 %v1286
    %2875 = vmatprep.subr.mxu0 0.0
    %2876 = vmatpush1.msra.mxu0 %v1285
    %2877 = vmatprep.subr.mxu0 0.0
    %2878 = vmatpush1.msra.mxu0 %v1284
    %2879 = vmatprep.subr.mxu0 0.0
    %2880 = vmatpush2.msra.mxu0 0.0
    %2881 = vmatprep.subr.mxu0 0.0
    %2882 = vmatpush2.msra.mxu0 0.0
    %2883 = vmatprep.subr.mxu0 0.0
    %2884 = vmatpush2.msra.mxu0 0.0
    %2885 = vmatprep.subr.mxu0 0.0
    %2886 = vmatpush2.msra.mxu0 0.0
    %2887 = vmatprep.subr.mxu0 0.0
    %2888 = vmatpush2.msra.mxu0 0.0
    %2889 = vmatprep.subr.mxu0 0.0
    %2890 = vmatpush2.msra.mxu0 0.0
    %2891 = vmatprep.subr.mxu0 0.0
    %2892 = vmatpush2.msra.mxu0 0.0
    %2893 = vmatprep.subr.mxu0 0.0
    %2894 = vmatpush2.msra.mxu0 0.0
    %2895 = vmatprep.subr.mxu0 0.0
    %2896 = vmatpush2.msra.mxu0 0.0
    %2897 = vmatprep.subr.mxu0 0.0
    %2898 = vmatpush2.msra.mxu0 0.0
    %2899 = vmatprep.subr.mxu0 0.0
    %2900 = vmatpush2.msra.mxu0 0.0
    %2901 = vmatprep.subr.mxu0 0.0
    %2902 = vmatpush2.msra.mxu0 0.0
    %2903 = vmatprep.subr.mxu0 0.0
    %2904 = vmatpush2.msra.mxu0 0.0
    %2905 = vmatprep.subr.mxu0 0.0
    %2906 = vmatpush2.msra.mxu0 0.0
    %2907 = vmatprep.subr.mxu0 0.0
    %2908 = vmatpush2.msra.mxu0 0.0
    %2909 = vmatprep.subr.mxu0 0.0
    %2910 = vmatpush2.msra.mxu0 0.0
    %2911 = vmatprep.mubr.f32.mxu0 0.0
    %2912 = vmatmul.mubr.f32.gmra.mxu0 %v2401
    %v2913 = vpop.f32.mrf.mxu0
    %v2914 = vadd.f32 0.0, %v2913
    %v2915 = vpop.f32.mrf.mxu0
    %2916 = vdwg.mxu0
    %s2917 = scalar_lea.vmem %s9, 12
    %v2918 = vld [vmem:[%s2917] sm:$0xf]
    %v2920 = vsel %vm409, %v2918, 0
    %v2923 = vsel %vm413, %v2914, 0
    %2925 = vmatprep.subr.mxu0 0.0
    %2926 = vmatpush1.msra.mxu0 0.0
    %2927 = vmatprep.subr.mxu0 0.0
    %2928 = vmatpush1.msra.mxu0 0.0
    %2929 = vmatprep.subr.mxu0 0.0
    %2930 = vmatpush1.msra.mxu0 0.0
    %2931 = vmatprep.subr.mxu0 0.0
    %2932 = vmatpush1.msra.mxu0 0.0
    %2933 = vmatprep.subr.mxu0 0.0
    %2934 = vmatpush1.msra.mxu0 0.0
    %2935 = vmatprep.subr.mxu0 0.0
    %2936 = vmatpush1.msra.mxu0 0.0
    %2937 = vmatprep.subr.mxu0 0.0
    %2938 = vmatpush1.msra.mxu0 0.0
    %2939 = vmatprep.subr.mxu0 0.0
    %2940 = vmatpush1.msra.mxu0 0.0
    %2941 = vmatprep.subr.mxu0 0.0
    %2942 = vmatpush1.msra.mxu0 0.0
    %2943 = vmatprep.subr.mxu0 0.0
    %2944 = vmatpush1.msra.mxu0 0.0
    %2945 = vmatprep.subr.mxu0 0.0
    %2946 = vmatpush1.msra.mxu0 0.0
    %2947 = vmatprep.subr.mxu0 0.0
    %2948 = vmatpush1.msra.mxu0 0.0
    %2949 = vmatprep.subr.mxu0 0.0
    %2950 = vmatpush1.msra.mxu0 0.0
    %2951 = vmatprep.subr.mxu0 0.0
    %2952 = vmatpush1.msra.mxu0 0.0
    %2953 = vmatprep.subr.mxu0 0.0
    %2954 = vmatpush1.msra.mxu0 0.0
    %2955 = vmatprep.subr.mxu0 0.0
    %2956 = vmatpush1.msra.mxu0 %v2923
    %2957 = vmatprep.subr.mxu0 0.0
    %2958 = vmatpush2.msra.mxu0 0.0
    %2959 = vmatprep.subr.mxu0 0.0
    %2960 = vmatpush2.msra.mxu0 0.0
    %2961 = vmatprep.subr.mxu0 0.0
    %2962 = vmatpush2.msra.mxu0 0.0
    %2963 = vmatprep.subr.mxu0 0.0
    %2964 = vmatpush2.msra.mxu0 0.0
    %2965 = vmatprep.subr.mxu0 0.0
    %2966 = vmatpush2.msra.mxu0 0.0
    %2967 = vmatprep.subr.mxu0 0.0
    %2968 = vmatpush2.msra.mxu0 0.0
    %2969 = vmatprep.subr.mxu0 0.0
    %2970 = vmatpush2.msra.mxu0 0.0
    %2971 = vmatprep.subr.mxu0 0.0
    %2972 = vmatpush2.msra.mxu0 0.0
    %2973 = vmatprep.subr.mxu0 0.0
    %2974 = vmatpush2.msra.mxu0 0.0
    %2975 = vmatprep.subr.mxu0 0.0
    %2976 = vmatpush2.msra.mxu0 0.0
    %2977 = vmatprep.subr.mxu0 0.0
    %2978 = vmatpush2.msra.mxu0 0.0
    %2979 = vmatprep.subr.mxu0 0.0
    %2980 = vmatpush2.msra.mxu0 0.0
    %2981 = vmatprep.subr.mxu0 0.0
    %2982 = vmatpush2.msra.mxu0 0.0
    %2983 = vmatprep.subr.mxu0 0.0
    %2984 = vmatpush2.msra.mxu0 0.0
    %2985 = vmatprep.subr.mxu0 0.0
    %2986 = vmatpush2.msra.mxu0 0.0
    %2987 = vmatprep.subr.mxu0 0.0
    %2988 = vmatpush2.msra.mxu0 0.0
    %2989 = vmatprep.mubr.f32.mxu0 0.0
    %2990 = vmatmul.mubr.f32.gmra.mxu0 %v2920
    %v2991 = vpop.f32.mrf.mxu0
    %v2992 = vadd.f32 0.0, %v2991
    %v2993 = vpop.f32.mrf.mxu0
    %2994 = vdwg.mxu0
    %v2995 = vadd.f32 %v2846, %v2992
    %2996 = vmatprep.subr.mxu0 0.0
    %2997 = vmatpush1.msra.mxu0 0.0
    %2998 = vmatprep.subr.mxu0 0.0
    %2999 = vmatpush1.msra.mxu0 0.0
    %3000 = vmatprep.subr.mxu0 0.0
    %3001 = vmatpush1.msra.mxu0 0.0
    %3002 = vmatprep.subr.mxu0 0.0
    %3003 = vmatpush1.msra.mxu0 0.0
    %3004 = vmatprep.subr.mxu0 0.0
    %3005 = vmatpush1.msra.mxu0 0.0
    %3006 = vmatprep.subr.mxu0 0.0
    %3007 = vmatpush1.msra.mxu0 0.0
    %3008 = vmatprep.subr.mxu0 0.0
    %3009 = vmatpush1.msra.mxu0 0.0
    %3010 = vmatprep.subr.mxu0 0.0
    %3011 = vmatpush1.msra.mxu0 0.0
    %3012 = vmatprep.subr.mxu0 0.0
    %3013 = vmatpush1.msra.mxu0 %v1489
    %3014 = vmatprep.subr.mxu0 0.0
    %3015 = vmatpush1.msra.mxu0 %v1488
    %3016 = vmatprep.subr.mxu0 0.0
    %3017 = vmatpush1.msra.mxu0 %v1487
    %3018 = vmatprep.subr.mxu0 0.0
    %3019 = vmatpush1.msra.mxu0 %v1486
    %3020 = vmatprep.subr.mxu0 0.0
    %3021 = vmatpush1.msra.mxu0 %v1469
    %3022 = vmatprep.subr.mxu0 0.0
    %3023 = vmatpush1.msra.mxu0 %v1468
    %3024 = vmatprep.subr.mxu0 0.0
    %3025 = vmatpush1.msra.mxu0 %v1467
    %3026 = vmatprep.subr.mxu0 0.0
    %3027 = vmatpush1.msra.mxu0 %v1466
    %3028 = vmatprep.subr.mxu0 0.0
    %3029 = vmatpush2.msra.mxu0 0.0
    %3030 = vmatprep.subr.mxu0 0.0
    %3031 = vmatpush2.msra.mxu0 0.0
    %3032 = vmatprep.subr.mxu0 0.0
    %3033 = vmatpush2.msra.mxu0 0.0
    %3034 = vmatprep.subr.mxu0 0.0
    %3035 = vmatpush2.msra.mxu0 0.0
    %3036 = vmatprep.subr.mxu0 0.0
    %3037 = vmatpush2.msra.mxu0 0.0
    %3038 = vmatprep.subr.mxu0 0.0
    %3039 = vmatpush2.msra.mxu0 0.0
    %3040 = vmatprep.subr.mxu0 0.0
    %3041 = vmatpush2.msra.mxu0 0.0
    %3042 = vmatprep.subr.mxu0 0.0
    %3043 = vmatpush2.msra.mxu0 0.0
    %3044 = vmatprep.subr.mxu0 0.0
    %3045 = vmatpush2.msra.mxu0 0.0
    %3046 = vmatprep.subr.mxu0 0.0
    %3047 = vmatpush2.msra.mxu0 0.0
    %3048 = vmatprep.subr.mxu0 0.0
    %3049 = vmatpush2.msra.mxu0 0.0
    %3050 = vmatprep.subr.mxu0 0.0
    %3051 = vmatpush2.msra.mxu0 0.0
    %3052 = vmatprep.subr.mxu0 0.0
    %3053 = vmatpush2.msra.mxu0 0.0
    %3054 = vmatprep.subr.mxu0 0.0
    %3055 = vmatpush2.msra.mxu0 0.0
    %3056 = vmatprep.subr.mxu0 0.0
    %3057 = vmatpush2.msra.mxu0 0.0
    %3058 = vmatprep.subr.mxu0 0.0
    %3059 = vmatpush2.msra.mxu0 0.0
    %3060 = vmatprep.mubr.f32.mxu0 0.0
    %3061 = vmatmul.mubr.f32.gmra.mxu0 %v2401
    %v3062 = vpop.f32.mrf.mxu0
    %v3063 = vadd.f32 0.0, %v3062
    %v3064 = vpop.f32.mrf.mxu0
    %3065 = vdwg.mxu0
    %s3066 = scalar_lea.vmem %s9, 16
    %v3067 = vld [vmem:[%s3066] sm:$0xf]
    %v3069 = vsel %vm409, %v3067, 0
    %v3072 = vsel %vm413, %v3063, 0
    %3074 = vmatprep.subr.mxu0 0.0
    %3075 = vmatpush1.msra.mxu0 0.0
    %3076 = vmatprep.subr.mxu0 0.0
    %3077 = vmatpush1.msra.mxu0 0.0
    %3078 = vmatprep.subr.mxu0 0.0
    %3079 = vmatpush1.msra.mxu0 0.0
    %3080 = vmatprep.subr.mxu0 0.0
    %3081 = vmatpush1.msra.mxu0 0.0
    %3082 = vmatprep.subr.mxu0 0.0
    %3083 = vmatpush1.msra.mxu0 0.0
    %3084 = vmatprep.subr.mxu0 0.0
    %3085 = vmatpush1.msra.mxu0 0.0
    %3086 = vmatprep.subr.mxu0 0.0
    %3087 = vmatpush1.msra.mxu0 0.0
    %3088 = vmatprep.subr.mxu0 0.0
    %3089 = vmatpush1.msra.mxu0 0.0
    %3090 = vmatprep.subr.mxu0 0.0
    %3091 = vmatpush1.msra.mxu0 0.0
    %3092 = vmatprep.subr.mxu0 0.0
    %3093 = vmatpush1.msra.mxu0 0.0
    %3094 = vmatprep.subr.mxu0 0.0
    %3095 = vmatpush1.msra.mxu0 0.0
    %3096 = vmatprep.subr.mxu0 0.0
    %3097 = vmatpush1.msra.mxu0 0.0
    %3098 = vmatprep.subr.mxu0 0.0
    %3099 = vmatpush1.msra.mxu0 0.0
    %3100 = vmatprep.subr.mxu0 0.0
    %3101 = vmatpush1.msra.mxu0 0.0
    %3102 = vmatprep.subr.mxu0 0.0
    %3103 = vmatpush1.msra.mxu0 0.0
    %3104 = vmatprep.subr.mxu0 0.0
    %3105 = vmatpush1.msra.mxu0 %v3072
    %3106 = vmatprep.subr.mxu0 0.0
    %3107 = vmatpush2.msra.mxu0 0.0
    %3108 = vmatprep.subr.mxu0 0.0
    %3109 = vmatpush2.msra.mxu0 0.0
    %3110 = vmatprep.subr.mxu0 0.0
    %3111 = vmatpush2.msra.mxu0 0.0
    %3112 = vmatprep.subr.mxu0 0.0
    %3113 = vmatpush2.msra.mxu0 0.0
    %3114 = vmatprep.subr.mxu0 0.0
    %3115 = vmatpush2.msra.mxu0 0.0
    %3116 = vmatprep.subr.mxu0 0.0
    %3117 = vmatpush2.msra.mxu0 0.0
    %3118 = vmatprep.subr.mxu0 0.0
    %3119 = vmatpush2.msra.mxu0 0.0
    %3120 = vmatprep.subr.mxu0 0.0
    %3121 = vmatpush2.msra.mxu0 0.0
    %3122 = vmatprep.subr.mxu0 0.0
    %3123 = vmatpush2.msra.mxu0 0.0
    %3124 = vmatprep.subr.mxu0 0.0
    %3125 = vmatpush2.msra.mxu0 0.0
    %3126 = vmatprep.subr.mxu0 0.0
    %3127 = vmatpush2.msra.mxu0 0.0
    %3128 = vmatprep.subr.mxu0 0.0
    %3129 = vmatpush2.msra.mxu0 0.0
    %3130 = vmatprep.subr.mxu0 0.0
    %3131 = vmatpush2.msra.mxu0 0.0
    %3132 = vmatprep.subr.mxu0 0.0
    %3133 = vmatpush2.msra.mxu0 0.0
    %3134 = vmatprep.subr.mxu0 0.0
    %3135 = vmatpush2.msra.mxu0 0.0
    %3136 = vmatprep.subr.mxu0 0.0
    %3137 = vmatpush2.msra.mxu0 0.0
    %3138 = vmatprep.mubr.f32.mxu0 0.0
    %3139 = vmatmul.mubr.f32.gmra.mxu0 %v3069
    %v3140 = vpop.f32.mrf.mxu0
    %v3141 = vadd.f32 0.0, %v3140
    %v3142 = vpop.f32.mrf.mxu0
    %3143 = vdwg.mxu0
    %v3144 = vadd.f32 %v2995, %v3141
    %3145 = vmatprep.subr.mxu0 0.0
    %3146 = vmatpush1.msra.mxu0 0.0
    %3147 = vmatprep.subr.mxu0 0.0
    %3148 = vmatpush1.msra.mxu0 0.0
    %3149 = vmatprep.subr.mxu0 0.0
    %3150 = vmatpush1.msra.mxu0 0.0
    %3151 = vmatprep.subr.mxu0 0.0
    %3152 = vmatpush1.msra.mxu0 0.0
    %3153 = vmatprep.subr.mxu0 0.0
    %3154 = vmatpush1.msra.mxu0 0.0
    %3155 = vmatprep.subr.mxu0 0.0
    %3156 = vmatpush1.msra.mxu0 0.0
    %3157 = vmatprep.subr.mxu0 0.0
    %3158 = vmatpush1.msra.mxu0 0.0
    %3159 = vmatprep.subr.mxu0 0.0
    %3160 = vmatpush1.msra.mxu0 0.0
    %3161 = vmatprep.subr.mxu0 0.0
    %3162 = vmatpush1.msra.mxu0 %v1672
    %3163 = vmatprep.subr.mxu0 0.0
    %3164 = vmatpush1.msra.mxu0 %v1671
    %3165 = vmatprep.subr.mxu0 0.0
    %3166 = vmatpush1.msra.mxu0 %v1670
    %3167 = vmatprep.subr.mxu0 0.0
    %3168 = vmatpush1.msra.mxu0 %v1669
    %3169 = vmatprep.subr.mxu0 0.0
    %3170 = vmatpush1.msra.mxu0 %v1652
    %3171 = vmatprep.subr.mxu0 0.0
    %3172 = vmatpush1.msra.mxu0 %v1651
    %3173 = vmatprep.subr.mxu0 0.0
    %3174 = vmatpush1.msra.mxu0 %v1650
    %3175 = vmatprep.subr.mxu0 0.0
    %3176 = vmatpush1.msra.mxu0 %v1649
    %3177 = vmatprep.subr.mxu0 0.0
    %3178 = vmatpush2.msra.mxu0 0.0
    %3179 = vmatprep.subr.mxu0 0.0
    %3180 = vmatpush2.msra.mxu0 0.0
    %3181 = vmatprep.subr.mxu0 0.0
    %3182 = vmatpush2.msra.mxu0 0.0
    %3183 = vmatprep.subr.mxu0 0.0
    %3184 = vmatpush2.msra.mxu0 0.0
    %3185 = vmatprep.subr.mxu0 0.0
    %3186 = vmatpush2.msra.mxu0 0.0
    %3187 = vmatprep.subr.mxu0 0.0
    %3188 = vmatpush2.msra.mxu0 0.0
    %3189 = vmatprep.subr.mxu0 0.0
    %3190 = vmatpush2.msra.mxu0 0.0
    %3191 = vmatprep.subr.mxu0 0.0
    %3192 = vmatpush2.msra.mxu0 0.0
    %3193 = vmatprep.subr.mxu0 0.0
    %3194 = vmatpush2.msra.mxu0 0.0
    %3195 = vmatprep.subr.mxu0 0.0
    %3196 = vmatpush2.msra.mxu0 0.0
    %3197 = vmatprep.subr.mxu0 0.0
    %3198 = vmatpush2.msra.mxu0 0.0
    %3199 = vmatprep.subr.mxu0 0.0
    %3200 = vmatpush2.msra.mxu0 0.0
    %3201 = vmatprep.subr.mxu0 0.0
    %3202 = vmatpush2.msra.mxu0 0.0
    %3203 = vmatprep.subr.mxu0 0.0
    %3204 = vmatpush2.msra.mxu0 0.0
    %3205 = vmatprep.subr.mxu0 0.0
    %3206 = vmatpush2.msra.mxu0 0.0
    %3207 = vmatprep.subr.mxu0 0.0
    %3208 = vmatpush2.msra.mxu0 0.0
    %3209 = vmatprep.mubr.f32.mxu0 0.0
    %3210 = vmatmul.mubr.f32.gmra.mxu0 %v2401
    %v3211 = vpop.f32.mrf.mxu0
    %v3212 = vadd.f32 0.0, %v3211
    %v3213 = vpop.f32.mrf.mxu0
    %3214 = vdwg.mxu0
    %s3215 = scalar_lea.vmem %s9, 20
    %v3216 = vld [vmem:[%s3215] sm:$0xf]
    %v3218 = vsel %vm409, %v3216, 0
    %v3221 = vsel %vm413, %v3212, 0
    %3223 = vmatprep.subr.mxu0 0.0
    %3224 = vmatpush1.msra.mxu0 0.0
    %3225 = vmatprep.subr.mxu0 0.0
    %3226 = vmatpush1.msra.mxu0 0.0
    %3227 = vmatprep.subr.mxu0 0.0
    %3228 = vmatpush1.msra.mxu0 0.0
    %3229 = vmatprep.subr.mxu0 0.0
    %3230 = vmatpush1.msra.mxu0 0.0
    %3231 = vmatprep.subr.mxu0 0.0
    %3232 = vmatpush1.msra.mxu0 0.0
    %3233 = vmatprep.subr.mxu0 0.0
    %3234 = vmatpush1.msra.mxu0 0.0
    %3235 = vmatprep.subr.mxu0 0.0
    %3236 = vmatpush1.msra.mxu0 0.0
    %3237 = vmatprep.subr.mxu0 0.0
    %3238 = vmatpush1.msra.mxu0 0.0
    %3239 = vmatprep.subr.mxu0 0.0
    %3240 = vmatpush1.msra.mxu0 0.0
    %3241 = vmatprep.subr.mxu0 0.0
    %3242 = vmatpush1.msra.mxu0 0.0
    %3243 = vmatprep.subr.mxu0 0.0
    %3244 = vmatpush1.msra.mxu0 0.0
    %3245 = vmatprep.subr.mxu0 0.0
    %3246 = vmatpush1.msra.mxu0 0.0
    %3247 = vmatprep.subr.mxu0 0.0
    %3248 = vmatpush1.msra.mxu0 0.0
    %3249 = vmatprep.subr.mxu0 0.0
    %3250 = vmatpush1.msra.mxu0 0.0
    %3251 = vmatprep.subr.mxu0 0.0
    %3252 = vmatpush1.msra.mxu0 0.0
    %3253 = vmatprep.subr.mxu0 0.0
    %3254 = vmatpush1.msra.mxu0 %v3221
    %3255 = vmatprep.subr.mxu0 0.0
    %3256 = vmatpush2.msra.mxu0 0.0
    %3257 = vmatprep.subr.mxu0 0.0
    %3258 = vmatpush2.msra.mxu0 0.0
    %3259 = vmatprep.subr.mxu0 0.0
    %3260 = vmatpush2.msra.mxu0 0.0
    %3261 = vmatprep.subr.mxu0 0.0
    %3262 = vmatpush2.msra.mxu0 0.0
    %3263 = vmatprep.subr.mxu0 0.0
    %3264 = vmatpush2.msra.mxu0 0.0
    %3265 = vmatprep.subr.mxu0 0.0
    %3266 = vmatpush2.msra.mxu0 0.0
    %3267 = vmatprep.subr.mxu0 0.0
    %3268 = vmatpush2.msra.mxu0 0.0
    %3269 = vmatprep.subr.mxu0 0.0
    %3270 = vmatpush2.msra.mxu0 0.0
    %3271 = vmatprep.subr.mxu0 0.0
    %3272 = vmatpush2.msra.mxu0 0.0
    %3273 = vmatprep.subr.mxu0 0.0
    %3274 = vmatpush2.msra.mxu0 0.0
    %3275 = vmatprep.subr.mxu0 0.0
    %3276 = vmatpush2.msra.mxu0 0.0
    %3277 = vmatprep.subr.mxu0 0.0
    %3278 = vmatpush2.msra.mxu0 0.0
    %3279 = vmatprep.subr.mxu0 0.0
    %3280 = vmatpush2.msra.mxu0 0.0
    %3281 = vmatprep.subr.mxu0 0.0
    %3282 = vmatpush2.msra.mxu0 0.0
    %3283 = vmatprep.subr.mxu0 0.0
    %3284 = vmatpush2.msra.mxu0 0.0
    %3285 = vmatprep.subr.mxu0 0.0
    %3286 = vmatpush2.msra.mxu0 0.0
    %3287 = vmatprep.mubr.f32.mxu0 0.0
    %3288 = vmatmul.mubr.f32.gmra.mxu0 %v3218
    %v3289 = vpop.f32.mrf.mxu0
    %v3290 = vadd.f32 0.0, %v3289
    %v3291 = vpop.f32.mrf.mxu0
    %3292 = vdwg.mxu0
    %v3293 = vadd.f32 %v3144, %v3290
    %3294 = vmatprep.subr.mxu0 0.0
    %3295 = vmatpush1.msra.mxu0 0.0
    %3296 = vmatprep.subr.mxu0 0.0
    %3297 = vmatpush1.msra.mxu0 0.0
    %3298 = vmatprep.subr.mxu0 0.0
    %3299 = vmatpush1.msra.mxu0 0.0
    %3300 = vmatprep.subr.mxu0 0.0
    %3301 = vmatpush1.msra.mxu0 0.0
    %3302 = vmatprep.subr.mxu0 0.0
    %3303 = vmatpush1.msra.mxu0 0.0
    %3304 = vmatprep.subr.mxu0 0.0
    %3305 = vmatpush1.msra.mxu0 0.0
    %3306 = vmatprep.subr.mxu0 0.0
    %3307 = vmatpush1.msra.mxu0 0.0
    %3308 = vmatprep.subr.mxu0 0.0
    %3309 = vmatpush1.msra.mxu0 0.0
    %3310 = vmatprep.subr.mxu0 0.0
    %3311 = vmatpush1.msra.mxu0 %v1855
    %3312 = vmatprep.subr.mxu0 0.0
    %3313 = vmatpush1.msra.mxu0 %v1854
    %3314 = vmatprep.subr.mxu0 0.0
    %3315 = vmatpush1.msra.mxu0 %v1853
    %3316 = vmatprep.subr.mxu0 0.0
    %3317 = vmatpush1.msra.mxu0 %v1852
    %3318 = vmatprep.subr.mxu0 0.0
    %3319 = vmatpush1.msra.mxu0 %v1835
    %3320 = vmatprep.subr.mxu0 0.0
    %3321 = vmatpush1.msra.mxu0 %v1834
    %3322 = vmatprep.subr.mxu0 0.0
    %3323 = vmatpush1.msra.mxu0 %v1833
    %3324 = vmatprep.subr.mxu0 0.0
    %3325 = vmatpush1.msra.mxu0 %v1832
    %3326 = vmatprep.subr.mxu0 0.0
    %3327 = vmatpush2.msra.mxu0 0.0
    %3328 = vmatprep.subr.mxu0 0.0
    %3329 = vmatpush2.msra.mxu0 0.0
    %3330 = vmatprep.subr.mxu0 0.0
    %3331 = vmatpush2.msra.mxu0 0.0
    %3332 = vmatprep.subr.mxu0 0.0
    %3333 = vmatpush2.msra.mxu0 0.0
    %3334 = vmatprep.subr.mxu0 0.0
    %3335 = vmatpush2.msra.mxu0 0.0
    %3336 = vmatprep.subr.mxu0 0.0
    %3337 = vmatpush2.msra.mxu0 0.0
    %3338 = vmatprep.subr.mxu0 0.0
    %3339 = vmatpush2.msra.mxu0 0.0
    %3340 = vmatprep.subr.mxu0 0.0
    %3341 = vmatpush2.msra.mxu0 0.0
    %3342 = vmatprep.subr.mxu0 0.0
    %3343 = vmatpush2.msra.mxu0 0.0
    %3344 = vmatprep.subr.mxu0 0.0
    %3345 = vmatpush2.msra.mxu0 0.0
    %3346 = vmatprep.subr.mxu0 0.0
    %3347 = vmatpush2.msra.mxu0 0.0
    %3348 = vmatprep.subr.mxu0 0.0
    %3349 = vmatpush2.msra.mxu0 0.0
    %3350 = vmatprep.subr.mxu0 0.0
    %3351 = vmatpush2.msra.mxu0 0.0
    %3352 = vmatprep.subr.mxu0 0.0
    %3353 = vmatpush2.msra.mxu0 0.0
    %3354 = vmatprep.subr.mxu0 0.0
    %3355 = vmatpush2.msra.mxu0 0.0
    %3356 = vmatprep.subr.mxu0 0.0
    %3357 = vmatpush2.msra.mxu0 0.0
    %3358 = vmatprep.mubr.f32.mxu0 0.0
    %3359 = vmatmul.mubr.f32.gmra.mxu0 %v2401
    %v3360 = vpop.f32.mrf.mxu0
    %v3361 = vadd.f32 0.0, %v3360
    %v3362 = vpop.f32.mrf.mxu0
    %3363 = vdwg.mxu0
    %s3364 = scalar_lea.vmem %s9, 24
    %v3365 = vld [vmem:[%s3364] sm:$0xf]
    %v3367 = vsel %vm409, %v3365, 0
    %v3370 = vsel %vm413, %v3361, 0
    %3372 = vmatprep.subr.mxu0 0.0
    %3373 = vmatpush1.msra.mxu0 0.0
    %3374 = vmatprep.subr.mxu0 0.0
    %3375 = vmatpush1.msra.mxu0 0.0
    %3376 = vmatprep.subr.mxu0 0.0
    %3377 = vmatpush1.msra.mxu0 0.0
    %3378 = vmatprep.subr.mxu0 0.0
    %3379 = vmatpush1.msra.mxu0 0.0
    %3380 = vmatprep.subr.mxu0 0.0
    %3381 = vmatpush1.msra.mxu0 0.0
    %3382 = vmatprep.subr.mxu0 0.0
    %3383 = vmatpush1.msra.mxu0 0.0
    %3384 = vmatprep.subr.mxu0 0.0
    %3385 = vmatpush1.msra.mxu0 0.0
    %3386 = vmatprep.subr.mxu0 0.0
    %3387 = vmatpush1.msra.mxu0 0.0
    %3388 = vmatprep.subr.mxu0 0.0
    %3389 = vmatpush1.msra.mxu0 0.0
    %3390 = vmatprep.subr.mxu0 0.0
    %3391 = vmatpush1.msra.mxu0 0.0
    %3392 = vmatprep.subr.mxu0 0.0
    %3393 = vmatpush1.msra.mxu0 0.0
    %3394 = vmatprep.subr.mxu0 0.0
    %3395 = vmatpush1.msra.mxu0 0.0
    %3396 = vmatprep.subr.mxu0 0.0
    %3397 = vmatpush1.msra.mxu0 0.0
    %3398 = vmatprep.subr.mxu0 0.0
    %3399 = vmatpush1.msra.mxu0 0.0
    %3400 = vmatprep.subr.mxu0 0.0
    %3401 = vmatpush1.msra.mxu0 0.0
    %3402 = vmatprep.subr.mxu0 0.0
    %3403 = vmatpush1.msra.mxu0 %v3370
    %3404 = vmatprep.subr.mxu0 0.0
    %3405 = vmatpush2.msra.mxu0 0.0
    %3406 = vmatprep.subr.mxu0 0.0
    %3407 = vmatpush2.msra.mxu0 0.0
    %3408 = vmatprep.subr.mxu0 0.0
    %3409 = vmatpush2.msra.mxu0 0.0
    %3410 = vmatprep.subr.mxu0 0.0
    %3411 = vmatpush2.msra.mxu0 0.0
    %3412 = vmatprep.subr.mxu0 0.0
    %3413 = vmatpush2.msra.mxu0 0.0
    %3414 = vmatprep.subr.mxu0 0.0
    %3415 = vmatpush2.msra.mxu0 0.0
    %3416 = vmatprep.subr.mxu0 0.0
    %3417 = vmatpush2.msra.mxu0 0.0
    %3418 = vmatprep.subr.mxu0 0.0
    %3419 = vmatpush2.msra.mxu0 0.0
    %3420 = vmatprep.subr.mxu0 0.0
    %3421 = vmatpush2.msra.mxu0 0.0
    %3422 = vmatprep.subr.mxu0 0.0
    %3423 = vmatpush2.msra.mxu0 0.0
    %3424 = vmatprep.subr.mxu0 0.0
    %3425 = vmatpush2.msra.mxu0 0.0
    %3426 = vmatprep.subr.mxu0 0.0
    %3427 = vmatpush2.msra.mxu0 0.0
    %3428 = vmatprep.subr.mxu0 0.0
    %3429 = vmatpush2.msra.mxu0 0.0
    %3430 = vmatprep.subr.mxu0 0.0
    %3431 = vmatpush2.msra.mxu0 0.0
    %3432 = vmatprep.subr.mxu0 0.0
    %3433 = vmatpush2.msra.mxu0 0.0
    %3434 = vmatprep.subr.mxu0 0.0
    %3435 = vmatpush2.msra.mxu0 0.0
    %3436 = vmatprep.mubr.f32.mxu0 0.0
    %3437 = vmatmul.mubr.f32.gmra.mxu0 %v3367
    %v3438 = vpop.f32.mrf.mxu0
    %v3439 = vadd.f32 0.0, %v3438
    %v3440 = vpop.f32.mrf.mxu0
    %3441 = vdwg.mxu0
    %v3442 = vadd.f32 %v3293, %v3439
    %3443 = vmatprep.subr.mxu0 0.0
    %3444 = vmatpush1.msra.mxu0 0.0
    %3445 = vmatprep.subr.mxu0 0.0
    %3446 = vmatpush1.msra.mxu0 0.0
    %3447 = vmatprep.subr.mxu0 0.0
    %3448 = vmatpush1.msra.mxu0 0.0
    %3449 = vmatprep.subr.mxu0 0.0
    %3450 = vmatpush1.msra.mxu0 0.0
    %3451 = vmatprep.subr.mxu0 0.0
    %3452 = vmatpush1.msra.mxu0 0.0
    %3453 = vmatprep.subr.mxu0 0.0
    %3454 = vmatpush1.msra.mxu0 0.0
    %3455 = vmatprep.subr.mxu0 0.0
    %3456 = vmatpush1.msra.mxu0 0.0
    %3457 = vmatprep.subr.mxu0 0.0
    %3458 = vmatpush1.msra.mxu0 0.0
    %3459 = vmatprep.subr.mxu0 0.0
    %3460 = vmatpush1.msra.mxu0 %v2038
    %3461 = vmatprep.subr.mxu0 0.0
    %3462 = vmatpush1.msra.mxu0 %v2037
    %3463 = vmatprep.subr.mxu0 0.0
    %3464 = vmatpush1.msra.mxu0 %v2036
    %3465 = vmatprep.subr.mxu0 0.0
    %3466 = vmatpush1.msra.mxu0 %v2035
    %3467 = vmatprep.subr.mxu0 0.0
    %3468 = vmatpush1.msra.mxu0 %v2018
    %3469 = vmatprep.subr.mxu0 0.0
    %3470 = vmatpush1.msra.mxu0 %v2017
    %3471 = vmatprep.subr.mxu0 0.0
    %3472 = vmatpush1.msra.mxu0 %v2016
    %3473 = vmatprep.subr.mxu0 0.0
    %3474 = vmatpush1.msra.mxu0 %v2015
    %3475 = vmatprep.subr.mxu0 0.0
    %3476 = vmatpush2.msra.mxu0 0.0
    %3477 = vmatprep.subr.mxu0 0.0
    %3478 = vmatpush2.msra.mxu0 0.0
    %3479 = vmatprep.subr.mxu0 0.0
    %3480 = vmatpush2.msra.mxu0 0.0
    %3481 = vmatprep.subr.mxu0 0.0
    %3482 = vmatpush2.msra.mxu0 0.0
    %3483 = vmatprep.subr.mxu0 0.0
    %3484 = vmatpush2.msra.mxu0 0.0
    %3485 = vmatprep.subr.mxu0 0.0
    %3486 = vmatpush2.msra.mxu0 0.0
    %3487 = vmatprep.subr.mxu0 0.0
    %3488 = vmatpush2.msra.mxu0 0.0
    %3489 = vmatprep.subr.mxu0 0.0
    %3490 = vmatpush2.msra.mxu0 0.0
    %3491 = vmatprep.subr.mxu0 0.0
    %3492 = vmatpush2.msra.mxu0 0.0
    %3493 = vmatprep.subr.mxu0 0.0
    %3494 = vmatpush2.msra.mxu0 0.0
    %3495 = vmatprep.subr.mxu0 0.0
    %3496 = vmatpush2.msra.mxu0 0.0
    %3497 = vmatprep.subr.mxu0 0.0
    %3498 = vmatpush2.msra.mxu0 0.0
    %3499 = vmatprep.subr.mxu0 0.0
    %3500 = vmatpush2.msra.mxu0 0.0
    %3501 = vmatprep.subr.mxu0 0.0
    %3502 = vmatpush2.msra.mxu0 0.0
    %3503 = vmatprep.subr.mxu0 0.0
    %3504 = vmatpush2.msra.mxu0 0.0
    %3505 = vmatprep.subr.mxu0 0.0
    %3506 = vmatpush2.msra.mxu0 0.0
    %3507 = vmatprep.mubr.f32.mxu0 0.0
    %3508 = vmatmul.mubr.f32.gmra.mxu0 %v2401
    %v3509 = vpop.f32.mrf.mxu0
    %v3510 = vadd.f32 0.0, %v3509
    %v3511 = vpop.f32.mrf.mxu0
    %3512 = vdwg.mxu0
    %s3513 = scalar_lea.vmem %s9, 28
    %v3514 = vld [vmem:[%s3513] sm:$0xf]
    %v3516 = vsel %vm409, %v3514, 0
    %v3519 = vsel %vm413, %v3510, 0
    %3521 = vmatprep.subr.mxu0 0.0
    %3522 = vmatpush1.msra.mxu0 0.0
    %3523 = vmatprep.subr.mxu0 0.0
    %3524 = vmatpush1.msra.mxu0 0.0
    %3525 = vmatprep.subr.mxu0 0.0
    %3526 = vmatpush1.msra.mxu0 0.0
    %3527 = vmatprep.subr.mxu0 0.0
    %3528 = vmatpush1.msra.mxu0 0.0
    %3529 = vmatprep.subr.mxu0 0.0
    %3530 = vmatpush1.msra.mxu0 0.0
    %3531 = vmatprep.subr.mxu0 0.0
    %3532 = vmatpush1.msra.mxu0 0.0
    %3533 = vmatprep.subr.mxu0 0.0
    %3534 = vmatpush1.msra.mxu0 0.0
    %3535 = vmatprep.subr.mxu0 0.0
    %3536 = vmatpush1.msra.mxu0 0.0
    %3537 = vmatprep.subr.mxu0 0.0
    %3538 = vmatpush1.msra.mxu0 0.0
    %3539 = vmatprep.subr.mxu0 0.0
    %3540 = vmatpush1.msra.mxu0 0.0
    %3541 = vmatprep.subr.mxu0 0.0
    %3542 = vmatpush1.msra.mxu0 0.0
    %3543 = vmatprep.subr.mxu0 0.0
    %3544 = vmatpush1.msra.mxu0 0.0
    %3545 = vmatprep.subr.mxu0 0.0
    %3546 = vmatpush1.msra.mxu0 0.0
    %3547 = vmatprep.subr.mxu0 0.0
    %3548 = vmatpush1.msra.mxu0 0.0
    %3549 = vmatprep.subr.mxu0 0.0
    %3550 = vmatpush1.msra.mxu0 0.0
    %3551 = vmatprep.subr.mxu0 0.0
    %3552 = vmatpush1.msra.mxu0 %v3519
    %3553 = vmatprep.subr.mxu0 0.0
    %3554 = vmatpush2.msra.mxu0 0.0
    %3555 = vmatprep.subr.mxu0 0.0
    %3556 = vmatpush2.msra.mxu0 0.0
    %3557 = vmatprep.subr.mxu0 0.0
    %3558 = vmatpush2.msra.mxu0 0.0
    %3559 = vmatprep.subr.mxu0 0.0
    %3560 = vmatpush2.msra.mxu0 0.0
    %3561 = vmatprep.subr.mxu0 0.0
    %3562 = vmatpush2.msra.mxu0 0.0
    %3563 = vmatprep.subr.mxu0 0.0
    %3564 = vmatpush2.msra.mxu0 0.0
    %3565 = vmatprep.subr.mxu0 0.0
    %3566 = vmatpush2.msra.mxu0 0.0
    %3567 = vmatprep.subr.mxu0 0.0
    %3568 = vmatpush2.msra.mxu0 0.0
    %3569 = vmatprep.subr.mxu0 0.0
    %3570 = vmatpush2.msra.mxu0 0.0
    %3571 = vmatprep.subr.mxu0 0.0
    %3572 = vmatpush2.msra.mxu0 0.0
    %3573 = vmatprep.subr.mxu0 0.0
    %3574 = vmatpush2.msra.mxu0 0.0
    %3575 = vmatprep.subr.mxu0 0.0
    %3576 = vmatpush2.msra.mxu0 0.0
    %3577 = vmatprep.subr.mxu0 0.0
    %3578 = vmatpush2.msra.mxu0 0.0
    %3579 = vmatprep.subr.mxu0 0.0
    %3580 = vmatpush2.msra.mxu0 0.0
    %3581 = vmatprep.subr.mxu0 0.0
    %3582 = vmatpush2.msra.mxu0 0.0
    %3583 = vmatprep.subr.mxu0 0.0
    %3584 = vmatpush2.msra.mxu0 0.0
    %3585 = vmatprep.mubr.f32.mxu0 0.0
    %3586 = vmatmul.mubr.f32.gmra.mxu0 %v3516
    %v3587 = vpop.f32.mrf.mxu0
    %v3588 = vadd.f32 0.0, %v3587
    %v3589 = vpop.f32.mrf.mxu0
    %3590 = vdwg.mxu0
    %v3591 = vadd.f32 %v3442, %v3588
    %3592 = vmatprep.subr.mxu0 0.0
    %3593 = vmatpush1.msra.mxu0 0.0
    %3594 = vmatprep.subr.mxu0 0.0
    %3595 = vmatpush1.msra.mxu0 0.0
    %3596 = vmatprep.subr.mxu0 0.0
    %3597 = vmatpush1.msra.mxu0 0.0
    %3598 = vmatprep.subr.mxu0 0.0
    %3599 = vmatpush1.msra.mxu0 0.0
    %3600 = vmatprep.subr.mxu0 0.0
    %3601 = vmatpush1.msra.mxu0 0.0
    %3602 = vmatprep.subr.mxu0 0.0
    %3603 = vmatpush1.msra.mxu0 0.0
    %3604 = vmatprep.subr.mxu0 0.0
    %3605 = vmatpush1.msra.mxu0 0.0
    %3606 = vmatprep.subr.mxu0 0.0
    %3607 = vmatpush1.msra.mxu0 0.0
    %3608 = vmatprep.subr.mxu0 0.0
    %3609 = vmatpush1.msra.mxu0 %v2221
    %3610 = vmatprep.subr.mxu0 0.0
    %3611 = vmatpush1.msra.mxu0 %v2220
    %3612 = vmatprep.subr.mxu0 0.0
    %3613 = vmatpush1.msra.mxu0 %v2219
    %3614 = vmatprep.subr.mxu0 0.0
    %3615 = vmatpush1.msra.mxu0 %v2218
    %3616 = vmatprep.subr.mxu0 0.0
    %3617 = vmatpush1.msra.mxu0 %v2201
    %3618 = vmatprep.subr.mxu0 0.0
    %3619 = vmatpush1.msra.mxu0 %v2200
    %3620 = vmatprep.subr.mxu0 0.0
    %3621 = vmatpush1.msra.mxu0 %v2199
    %3622 = vmatprep.subr.mxu0 0.0
    %3623 = vmatpush1.msra.mxu0 %v2198
    %3624 = vmatprep.subr.mxu0 0.0
    %3625 = vmatpush2.msra.mxu0 0.0
    %3626 = vmatprep.subr.mxu0 0.0
    %3627 = vmatpush2.msra.mxu0 0.0
    %3628 = vmatprep.subr.mxu0 0.0
    %3629 = vmatpush2.msra.mxu0 0.0
    %3630 = vmatprep.subr.mxu0 0.0
    %3631 = vmatpush2.msra.mxu0 0.0
    %3632 = vmatprep.subr.mxu0 0.0
    %3633 = vmatpush2.msra.mxu0 0.0
    %3634 = vmatprep.subr.mxu0 0.0
    %3635 = vmatpush2.msra.mxu0 0.0
    %3636 = vmatprep.subr.mxu0 0.0
    %3637 = vmatpush2.msra.mxu0 0.0
    %3638 = vmatprep.subr.mxu0 0.0
    %3639 = vmatpush2.msra.mxu0 0.0
    %3640 = vmatprep.subr.mxu0 0.0
    %3641 = vmatpush2.msra.mxu0 0.0
    %3642 = vmatprep.subr.mxu0 0.0
    %3643 = vmatpush2.msra.mxu0 0.0
    %3644 = vmatprep.subr.mxu0 0.0
    %3645 = vmatpush2.msra.mxu0 0.0
    %3646 = vmatprep.subr.mxu0 0.0
    %3647 = vmatpush2.msra.mxu0 0.0
    %3648 = vmatprep.subr.mxu0 0.0
    %3649 = vmatpush2.msra.mxu0 0.0
    %3650 = vmatprep.subr.mxu0 0.0
    %3651 = vmatpush2.msra.mxu0 0.0
    %3652 = vmatprep.subr.mxu0 0.0
    %3653 = vmatpush2.msra.mxu0 0.0
    %3654 = vmatprep.subr.mxu0 0.0
    %3655 = vmatpush2.msra.mxu0 0.0
    %3656 = vmatprep.mubr.f32.mxu0 0.0
    %3657 = vmatmul.mubr.f32.gmra.mxu0 %v2401
    %v3658 = vpop.f32.mrf.mxu0
    %v3659 = vadd.f32 0.0, %v3658
    %v3660 = vpop.f32.mrf.mxu0
    %3661 = vdwg.mxu0
    %s3662 = scalar_lea.vmem %s9, 32
    %v3663 = vld [vmem:[%s3662] sm:$0xf]
    %v3665 = vsel %vm409, %v3663, 0
    %v3668 = vsel %vm413, %v3659, 0
    %3670 = vmatprep.subr.mxu0 0.0
    %3671 = vmatpush1.msra.mxu0 0.0
    %3672 = vmatprep.subr.mxu0 0.0
    %3673 = vmatpush1.msra.mxu0 0.0
    %3674 = vmatprep.subr.mxu0 0.0
    %3675 = vmatpush1.msra.mxu0 0.0
    %3676 = vmatprep.subr.mxu0 0.0
    %3677 = vmatpush1.msra.mxu0 0.0
    %3678 = vmatprep.subr.mxu0 0.0
    %3679 = vmatpush1.msra.mxu0 0.0
    %3680 = vmatprep.subr.mxu0 0.0
    %3681 = vmatpush1.msra.mxu0 0.0
    %3682 = vmatprep.subr.mxu0 0.0
    %3683 = vmatpush1.msra.mxu0 0.0
    %3684 = vmatprep.subr.mxu0 0.0
    %3685 = vmatpush1.msra.mxu0 0.0
    %3686 = vmatprep.subr.mxu0 0.0
    %3687 = vmatpush1.msra.mxu0 0.0
    %3688 = vmatprep.subr.mxu0 0.0
    %3689 = vmatpush1.msra.mxu0 0.0
    %3690 = vmatprep.subr.mxu0 0.0
    %3691 = vmatpush1.msra.mxu0 0.0
    %3692 = vmatprep.subr.mxu0 0.0
    %3693 = vmatpush1.msra.mxu0 0.0
    %3694 = vmatprep.subr.mxu0 0.0
    %3695 = vmatpush1.msra.mxu0 0.0
    %3696 = vmatprep.subr.mxu0 0.0
    %3697 = vmatpush1.msra.mxu0 0.0
    %3698 = vmatprep.subr.mxu0 0.0
    %3699 = vmatpush1.msra.mxu0 0.0
    %3700 = vmatprep.subr.mxu0 0.0
    %3701 = vmatpush1.msra.mxu0 %v3668
    %3702 = vmatprep.subr.mxu0 0.0
    %3703 = vmatpush2.msra.mxu0 0.0
    %3704 = vmatprep.subr.mxu0 0.0
    %3705 = vmatpush2.msra.mxu0 0.0
    %3706 = vmatprep.subr.mxu0 0.0
    %3707 = vmatpush2.msra.mxu0 0.0
    %3708 = vmatprep.subr.mxu0 0.0
    %3709 = vmatpush2.msra.mxu0 0.0
    %3710 = vmatprep.subr.mxu0 0.0
    %3711 = vmatpush2.msra.mxu0 0.0
    %3712 = vmatprep.subr.mxu0 0.0
    %3713 = vmatpush2.msra.mxu0 0.0
    %3714 = vmatprep.subr.mxu0 0.0
    %3715 = vmatpush2.msra.mxu0 0.0
    %3716 = vmatprep.subr.mxu0 0.0
    %3717 = vmatpush2.msra.mxu0 0.0
    %3718 = vmatprep.subr.mxu0 0.0
    %3719 = vmatpush2.msra.mxu0 0.0
    %3720 = vmatprep.subr.mxu0 0.0
    %3721 = vmatpush2.msra.mxu0 0.0
    %3722 = vmatprep.subr.mxu0 0.0
    %3723 = vmatpush2.msra.mxu0 0.0
    %3724 = vmatprep.subr.mxu0 0.0
    %3725 = vmatpush2.msra.mxu0 0.0
    %3726 = vmatprep.subr.mxu0 0.0
    %3727 = vmatpush2.msra.mxu0 0.0
    %3728 = vmatprep.subr.mxu0 0.0
    %3729 = vmatpush2.msra.mxu0 0.0
    %3730 = vmatprep.subr.mxu0 0.0
    %3731 = vmatpush2.msra.mxu0 0.0
    %3732 = vmatprep.subr.mxu0 0.0
    %3733 = vmatpush2.msra.mxu0 0.0
    %3734 = vmatprep.mubr.f32.mxu0 0.0
    %3735 = vmatmul.mubr.f32.gmra.mxu0 %v3665
    %v3736 = vpop.f32.mrf.mxu0
    %v3737 = vadd.f32 0.0, %v3736
    %v3738 = vpop.f32.mrf.mxu0
    %3739 = vdwg.mxu0
    %v3740 = vadd.f32 %v3591, %v3737
    %v3741 = vsel %vm2368, %v3740, 0.0
    %3742 = vadd.xlane.f32.xlu0 %v3741
    %v3743 = vpop.xlane.xlu0 %3742
    %v3744 = vmul.f32 %v3743, %v2372
    %v3745 = vsub.f32 %v3740, %v3744
    %v3746 = vmul.f32 %v3745, %v3745
    %v3747 = vsel %vm2368, %v3746, 0.0
    %3748 = vadd.xlane.f32.xlu0 %v3747
    %v3749 = vpop.xlane.xlu0 %3748
    %v3750 = vmul.f32 %v3749, %v2372
    %v3751 = vadd.f32 %v3750, 1e-05
    %v3752 = vrsqrt.pop %v3751
    %v3753 = vmul.f32 %v3745, %v3752
    %v3754 = vld [vmem:[%s10] sm:$0xf]
    %3756 = vset.pattern.permute.xlu0 0
    %3757 = vperm.xlu0 %3756, %v3754
    %v3758 = vpop.permute.xlu0 %3757
    %v3760 = vmul.f32 %v3753, %v3758
    %v3761 = vld [vmem:[%s11] sm:$0xf]
    %3763 = vset.pattern.permute.xlu0 0
    %3764 = vperm.xlu0 %3763, %v3761
    %v3765 = vpop.permute.xlu0 %3764
    %v3767 = vadd.f32 %v3760, %v3765
    %vm3768 = vcmp.ge.f32.partialorder %v3767, 0.0
    %v3769 = vmul.f32 %v3767, 0.2
    %v3770 = vsel %vm3768, %v3767, %v3769
    %vm3771 = vcmask 257024
    %3772 = vst.msk [vmem:[#allocation2] sm:$0xf] %vm3771, %v3770
    %3774 = vrot.lane.b32.xlu0 %v3770, 96
    %v3775 = vpop.permute.xlu0 %3774
    %s3777 = scalar_lea.vmem [#allocation2], 4
    %3778 = vst.msk [vmem:[%s3777] sm:$0xf] %vm3771, %v3775
    // Predicated region
    $region50: #{tpu_custom_call.1} parent=1 // pred_check
      _
    $region51: #{tpu_custom_call.1} parent=1 // pred_check_branch
      %3780 = sbr.rel (0) target = $region53
    $region52: #{tpu_custom_call.1} parent=1 // pred_region
      %s3782 = ssub.s32 128, 128
      %3783 = vsyncadd [#allocation3], %s3782
      %s3784 = sshll.u32 [#allocation2], 4
      %s3785 = int_to_ptr.vmem [resolvable:$true] %s3784
      %3790 = dma.vmem_to_hbm [thread:$0]  %s3785, 128, %s12, [#allocation3], 64, 64, 4
    $region53: #{tpu_custom_call.1} parent=1 // pred_fallthru
      _
    // Predicated region
    $region54: #{tpu_custom_call.1} parent=1 // pred_check
      _
    $region55: #{tpu_custom_call.1} parent=1 // pred_check_branch
      %3792 = sbr.rel (0) target = $region57
    $region56: #{tpu_custom_call.1} parent=1 // pred_region
      %3793 = dma.done [#allocation3], 128
    $region57: #{tpu_custom_call.1} parent=1 // pred_fallthru
      _
    %3794 = vsyncpa [#allocation3], 1

</llo_original>
